<compile_context>
chip_gen: v6e
topology: v6e:2x2x1
jax: 0.10.0
libtpu: 0.0.40
codegen_flags: <defaults>
</compile_context>

<pallas_src>
import functools

import jax
import jax.numpy as jnp
from jax.experimental import pallas as pl
from jax.experimental.pallas import tpu as pltpu

_LN_EPS = 1e-5


def _dot(a, b):
    # HIGHEST = exact fp32 parity with the PyTorch fp32 reference.  Drop to
    # Precision.HIGH (3-pass bf16 emulation) only if parity tolerance allows.
    return jnp.dot(a, b, preferred_element_type=jnp.float32,
                   precision=jax.lax.Precision.HIGHEST)


def _elu(x):
    # F.elu(alpha=1).  exp(min(x,0)) - 1 (expm1 has no guaranteed Mosaic lowering);
    # the ULP-level cancellation difference vs expm1 is far below the 1e-4 tolerance.
    return jnp.where(x > 0.0, x, jnp.exp(jnp.minimum(x, 0.0)) - 1.0)


# -----------------------------------------------------------------------------
# Fused kernel: LayerNorm -> fused hypernets -> monotonic mix
# -----------------------------------------------------------------------------
def qmixer_kernel(x_ref,                    # (TB, S + A): [states | agent_qs]
                  ln_g_ref, ln_b_ref,       # (1, S)
                  w1c_ref, b1c_ref,         # (S, 2HH+2E), (1, 2HH+2E)  fused layer-1
                  w2bd_ref, b2c_ref,        # (2HH, A*E+E), (1, A*E+E)  block-diag layer-2
                  wv_ref, vb_ref,           # (1, E), (1, 1)            V-head layer-2
                  out_ref,                  # (TB, 1)
                  *, n_agents, state_dim, embed_dim, hyper_hidden_dim):
    A, S, E, HH = n_agents, state_dim, embed_dim, hyper_hidden_dim

    x = x_ref[...]
    s = x[:, :S]                                          # (TB, S)
    qs = x[:, S:S + A]                                    # (TB, A)

    # --- LayerNorm(state) (biased variance, eps inside sqrt, affine) ---
    mean = jnp.mean(s, axis=-1, keepdims=True)
    var = jnp.mean(jnp.square(s - mean), axis=-1, keepdims=True)
    sn = (s - mean) * jax.lax.rsqrt(var + _LN_EPS) * ln_g_ref[...] + ln_b_ref[...]

    # --- fused first-layer hypernets: one dot, four lane slices ---
    z1 = _dot(sn, w1c_ref[...]) + b1c_ref[...]            # (TB, 2HH+2E)
    h12 = jnp.maximum(z1[:, :2 * HH], 0.0)                # (TB, 2HH)  -> layer-2 input
    hv = jnp.maximum(z1[:, 2 * HH:2 * HH + E], 0.0)       # (TB, E)    V-head hidden
    b1 = jnp.clip(z1[:, 2 * HH + E:2 * HH + 2 * E], -5.0, 5.0)   # (TB, E)

    # --- fused (block-diagonal) second layer: w1 and w_final in one dot ---
    z2 = _dot(h12, w2bd_ref[...]) + b2c_ref[...]          # (TB, A*E + E)
    w1 = jnp.clip(z2[:, :A * E], 0.0, 5.0)                # (TB, A*E)
    wf = jnp.clip(z2[:, A * E:A * E + E], 0.0, 5.0)       # (TB, E)

    # --- V-head second layer on the VPU (no N=1 MXU matmul) ---
    v = jnp.clip(jnp.sum(hv * wv_ref[...], axis=-1, keepdims=True) + vb_ref[...],
                 -5.0, 5.0)                               # (TB, 1)

    # --- monotonic mixing: bmm(qs[B,1,A], w1[B,A,E]) as A lane-wise MADs ---
    hidden = b1
    for a in range(A):                                    # static unroll (A is small)
        hidden = hidden + qs[:, a:a + 1] * w1[:, a * E:(a + 1) * E]
    hidden = _elu(hidden)                                 # (TB, E)

    # --- bmm(hidden[B,1,E], w_final[B,E,1]) + v ---
    out_ref[...] = jnp.sum(hidden * wf, axis=-1, keepdims=True) + v   # (TB, 1)


# -----------------------------------------------------------------------------
# Wrapper
# -----------------------------------------------------------------------------
def _choose_tile(batch):
    # Per-grid-step overhead dominates a body this small -> big tiles; keep grid >= 2
    # so the "parallel" batch axis can span both v7x TensorCores.
    for tb in (512, 256, 128):
        if batch >= 2 * tb:
            return tb
    return max(8, ((batch + 7) // 8) * 8)   # small batch: one (padded) tile


def pack_params(p):
    """Build the fused kernel-side weights from the per-layer (PyTorch-style) params.
    In training these would be packed once, not per forward call."""
    A, E, HH = p["n_agents"], p["embed_dim"], p["hyper_hidden_dim"]
    w1cat = jnp.concatenate([p["hw1_l1_w_t"], p["hwf_l1_w_t"],
                             p["v_l1_w_t"], p["hb1_w_t"]], axis=1)       # (S, 2HH+2E)
    b1cat = jnp.concatenate([p["hw1_l1_b"], p["hwf_l1_b"],
                             p["v_l1_b"], p["hb1_b"]], axis=1)           # (1, 2HH+2E)
    w2bd = jnp.zeros((2 * HH, A * E + E), jnp.float32)
    w2bd = w2bd.at[:HH, :A * E].set(p["hw1_l2_w_t"])                     # block-diag
    w2bd = w2bd.at[HH:, A * E:].set(p["hwf_l2_w_t"])
    b2cat = jnp.concatenate([p["hw1_l2_b"], p["hwf_l2_b"]], axis=1)      # (1, A*E+E)
    wv_row = p["v_l2_w_t"].reshape(1, E)                                 # (1, E)
    vb = p["v_l2_b"].reshape(1, 1)                                       # (1, 1)
    return (p["ln_g"], p["ln_b"], w1cat, b1cat, w2bd, b2cat, wv_row, vb)


def qmixer_forward(agent_qs, states, params):
    A = params["n_agents"]
    E = params["embed_dim"]
    S = params["state_dim"]
    HH = params["hyper_hidden_dim"]

    agent_qs = agent_qs.reshape(-1, A).astype(jnp.float32)
    states = states.reshape(-1, S).astype(jnp.float32)
    B = agent_qs.shape[0]

    TB = _choose_tile(B)
    B_pad = ((B + TB - 1) // TB) * TB
    grid = (B_pad // TB,)

    # One input slab: [states | agent_qs] -> a single wide-row DMA per grid step.
    x = jnp.concatenate([states, agent_qs], axis=1)                      # (B, S+A)
    if B_pad != B:
        x = jnp.pad(x, ((0, B_pad - B), (0, 0)))

    consts = pack_params(params)

    in_specs = [pl.BlockSpec((TB, S + A), lambda i: (i, 0))]
    in_specs += [pl.BlockSpec(c.shape, lambda i: (0, 0)) for c in consts]

    # Advisory cost estimate for XLA scheduling around the custom call.
    flops = int(2 * B_pad * (S * (2 * HH + 2 * E) + 2 * HH * (A * E + E)
                             + 3 * E + A * E))
    transcendentals = int(B_pad * (E + 1))
    bytes_accessed = int(x.size * 4 + sum(int(c.size) * 4 for c in consts)
                         + B_pad * 4)

    kernel = functools.partial(qmixer_kernel, n_agents=A, state_dim=S,
                               embed_dim=E, hyper_hidden_dim=HH)
    out = pl.pallas_call(
        kernel,
        out_shape=jax.ShapeDtypeStruct((B_pad, 1), jnp.float32),
        grid=grid,
        in_specs=in_specs,
        out_specs=pl.BlockSpec((TB, 1), lambda i: (i, 0)),
        compiler_params=pltpu.CompilerParams(dimension_semantics=("parallel",)),
        cost_estimate=pl.CostEstimate(flops=flops,
                                      transcendentals=transcendentals,
                                      bytes_accessed=bytes_accessed),
    )(x, *consts)

    return out[:B]   # (B, 1) == QMixer output after its view/squeeze


# -----------------------------------------------------------------------------
# Parameter init (PyTorch-style uniform fan-in bounds; LayerNorm gamma=1, beta=0)
# -----------------------------------------------------------------------------
def init_params(key, n_agents, state_dim, embed_dim, hyper_hidden_dim):
    def linear(k, fan_in, fan_out):
        k1, k2 = jax.random.split(k)
        bound = 1.0 / (fan_in ** 0.5)
        w = jax.random.uniform(k1, (fan_out, fan_in), jnp.float32, -bound, bound)
        b = jax.random.uniform(k2, (fan_out,), jnp.float32, -bound, bound)
        return w.T, b.reshape(1, -1)   # pre-transposed to (in, out); bias 2-D

    keys = jax.random.split(key, 7)
    hw1_l1_w, hw1_l1_b = linear(keys[0], state_dim, hyper_hidden_dim)
    hw1_l2_w, hw1_l2_b = linear(keys[1], hyper_hidden_dim, n_agents * embed_dim)
    hwf_l1_w, hwf_l1_b = linear(keys[2], state_dim, hyper_hidden_dim)
    hwf_l2_w, hwf_l2_b = linear(keys[3], hyper_hidden_dim, embed_dim)
    hb1_w, hb1_b = linear(keys[4], state_dim, embed_dim)
    v_l1_w, v_l1_b = linear(keys[5], state_dim, embed_dim)
    v_l2_w, v_l2_b = linear(keys[6], embed_dim, 1)

    return {
        "n_agents": n_agents, "state_dim": state_dim,
        "embed_dim": embed_dim, "hyper_hidden_dim": hyper_hidden_dim,
        "ln_g": jnp.ones((1, state_dim), jnp.float32),
        "ln_b": jnp.zeros((1, state_dim), jnp.float32),
        "hw1_l1_w_t": hw1_l1_w, "hw1_l1_b": hw1_l1_b,
        "hw1_l2_w_t": hw1_l2_w, "hw1_l2_b": hw1_l2_b,
        "hwf_l1_w_t": hwf_l1_w, "hwf_l1_b": hwf_l1_b,
        "hwf_l2_w_t": hwf_l2_w, "hwf_l2_b": hwf_l2_b,
        "hb1_w_t": hb1_w, "hb1_b": hb1_b,
        "v_l1_w_t": v_l1_w, "v_l1_b": v_l1_b,
        "v_l2_w_t": v_l2_w, "v_l2_b": v_l2_b,
    }


# -----------------------------------------------------------------------------
# Pure-JAX reference mirroring the PyTorch module exactly (per-layer weights)
# -----------------------------------------------------------------------------
def ref_qmixer(agent_qs, states, p):
    A, E, S = p["n_agents"], p["embed_dim"], p["state_dim"]
    qs = agent_qs.reshape(-1, A)
    s = states.reshape(-1, S)
    B = qs.shape[0]

    mean = s.mean(-1, keepdims=True)
    var = ((s - mean) ** 2).mean(-1, keepdims=True)
    sn = (s - mean) / jnp.sqrt(var + _LN_EPS) * p["ln_g"] + p["ln_b"]

    d = lambda a, b: jnp.dot(a, b, precision=jax.lax.Precision.HIGHEST)
    h1 = jnp.maximum(d(sn, p["hw1_l1_w_t"]) + p["hw1_l1_b"], 0.0)
    w1 = jnp.clip(d(h1, p["hw1_l2_w_t"]) + p["hw1_l2_b"], 0.0, 5.0).reshape(B, A, E)
    b1 = jnp.clip(d(sn, p["hb1_w_t"]) + p["hb1_b"], -5.0, 5.0)
    hf = jnp.maximum(d(sn, p["hwf_l1_w_t"]) + p["hwf_l1_b"], 0.0)
    wf = jnp.clip(d(hf, p["hwf_l2_w_t"]) + p["hwf_l2_b"], 0.0, 5.0)
    hv = jnp.maximum(d(sn, p["v_l1_w_t"]) + p["v_l1_b"], 0.0)
    v = jnp.clip(d(hv, p["v_l2_w_t"]) + p["v_l2_b"], -5.0, 5.0)

    hidden = _elu((qs[:, :, None] * w1).sum(axis=1) + b1)   # bmm(qs, w1) + b1
    y = (hidden * wf).sum(axis=-1, keepdims=True) + v       # bmm(hidden, w_final) + v
    return y                                                 # (B, 1)


# -----------------------------------------------------------------------------
if __name__ == "__main__":
    N_AGENTS = 4
    STATE_DIM = 48
    EMBED_DIM = 32
    HYPER_HIDDEN = 64
    BATCH = 32
    SEQ = 8
    B = BATCH * SEQ   # 256 rows -> TB=128, grid=(2,)

    root = jax.random.PRNGKey(0)
    k_params, k_q, k_s = jax.random.split(root, 3)

    params = init_params(k_params, N_AGENTS, STATE_DIM, EMBED_DIM, HYPER_HIDDEN)
    agent_qs = jax.random.normal(k_q, (B, N_AGENTS), jnp.float32)
    states = jax.random.normal(k_s, (B, STATE_DIM), jnp.float32)

    q_tot = qmixer_forward(agent_qs, states, params)
    jax.block_until_ready(q_tot)

    q_ref = ref_qmixer(agent_qs, states, params)

    assert q_tot.shape == (B, 1), q_tot.shape
    assert jnp.allclose(q_tot, q_ref, atol=1e-4, rtol=1e-4), float(
        jnp.max(jnp.abs(q_tot - q_ref)))

    print("KERNEL_OK")
</pallas_src>

<mosaic_0001>
module attributes {stable_mosaic.version = 11 : i64} {
  func.func @qmixer_kernel(%arg0: i32, %arg1: memref<128x52xf32, #tpu.memory_space<vmem>>, %arg2: memref<1x48xf32, #tpu.memory_space<vmem>>, %arg3: memref<1x48xf32, #tpu.memory_space<vmem>>, %arg4: memref<48x192xf32, #tpu.memory_space<vmem>>, %arg5: memref<1x192xf32, #tpu.memory_space<vmem>>, %arg6: memref<128x160xf32, #tpu.memory_space<vmem>>, %arg7: memref<1x160xf32, #tpu.memory_space<vmem>>, %arg8: memref<1x32xf32, #tpu.memory_space<vmem>>, %arg9: memref<1x1xf32, #tpu.memory_space<vmem>>, %arg10: memref<128x1xf32, #tpu.memory_space<vmem>>) attributes {dimension_semantics = [#tpu.dimension_semantics<parallel>], iteration_bounds = array<i64: 2>, scalar_prefetch = 0 : i64, scratch_operands = 0 : i64, tpu.core_type = #tpu.core_type<tc>, window_params = [{transform_indices = @transform_0, window_bounds = array<i64: 128, 52>}, {pipeline_mode = #tpu.pipeline_mode<synchronous>, transform_indices = @transform_1, window_bounds = array<i64: 1, 48>}, {pipeline_mode = #tpu.pipeline_mode<synchronous>, transform_indices = @transform_2, window_bounds = array<i64: 1, 48>}, {pipeline_mode = #tpu.pipeline_mode<synchronous>, transform_indices = @transform_3, window_bounds = array<i64: 48, 192>}, {pipeline_mode = #tpu.pipeline_mode<synchronous>, transform_indices = @transform_4, window_bounds = array<i64: 1, 192>}, {pipeline_mode = #tpu.pipeline_mode<synchronous>, transform_indices = @transform_5, window_bounds = array<i64: 128, 160>}, {pipeline_mode = #tpu.pipeline_mode<synchronous>, transform_indices = @transform_6, window_bounds = array<i64: 1, 160>}, {pipeline_mode = #tpu.pipeline_mode<synchronous>, transform_indices = @transform_7, window_bounds = array<i64: 1, 32>}, {pipeline_mode = #tpu.pipeline_mode<synchronous>, transform_indices = @transform_8, window_bounds = array<i64: 1, 1>}, {transform_indices = @transform_9, window_bounds = array<i64: 128, 1>}]} {
    %c0 = arith.constant 0 : index
    %c0_0 = arith.constant 0 : index
    %0 = vector.load %arg1[%c0, %c0_0] : memref<128x52xf32, #tpu.memory_space<vmem>>, vector<128x52xf32>
    %1 = vector.extract_strided_slice %0 {offsets = [0, 0], sizes = [128, 48], strides = [1, 1]} : vector<128x52xf32> to vector<128x48xf32>
    %2 = vector.extract_strided_slice %0 {offsets = [0, 48], sizes = [128, 4], strides = [1, 1]} : vector<128x52xf32> to vector<128x4xf32>
    %cst = arith.constant dense<0.000000e+00> : vector<128xf32>
    %3 = vector.multi_reduction <add>, %1, %cst [1] : vector<128x48xf32> to vector<128xf32>
    %4 = vector.shape_cast %3 : vector<128xf32> to vector<128x1xf32>
    %cst_1 = arith.constant 4.800000e+01 : f32
    %5 = vector.broadcast %cst_1 : f32 to vector<128x1xf32>
    %6 = arith.divf %4, %5 : vector<128x1xf32>
    %7 = vector.broadcast %6 : vector<128x1xf32> to vector<128x48xf32>
    %8 = arith.subf %1, %7 : vector<128x48xf32>
    %9 = arith.mulf %8, %8 : vector<128x48xf32>
    %cst_2 = arith.constant dense<0.000000e+00> : vector<128xf32>
    %10 = vector.multi_reduction <add>, %9, %cst_2 [1] : vector<128x48xf32> to vector<128xf32>
    %11 = vector.shape_cast %10 : vector<128xf32> to vector<128x1xf32>
    %cst_3 = arith.constant 4.800000e+01 : f32
    %12 = vector.broadcast %cst_3 : f32 to vector<128x1xf32>
    %13 = arith.divf %11, %12 : vector<128x1xf32>
    %14 = vector.broadcast %6 : vector<128x1xf32> to vector<128x48xf32>
    %15 = arith.subf %1, %14 : vector<128x48xf32>
    %cst_4 = arith.constant 9.99999974E-6 : f32
    %16 = vector.broadcast %cst_4 : f32 to vector<128x1xf32>
    %17 = arith.addf %13, %16 : vector<128x1xf32>
    %18 = math.rsqrt %17 : vector<128x1xf32>
    %19 = vector.broadcast %18 : vector<128x1xf32> to vector<128x48xf32>
    %20 = arith.mulf %15, %19 : vector<128x48xf32>
    %c0_5 = arith.constant 0 : index
    %c0_6 = arith.constant 0 : index
    %21 = vector.load %arg2[%c0_5, %c0_6] : memref<1x48xf32, #tpu.memory_space<vmem>>, vector<1x48xf32>
    %22 = vector.broadcast %21 : vector<1x48xf32> to vector<128x48xf32>
    %23 = arith.mulf %20, %22 : vector<128x48xf32>
    %c0_7 = arith.constant 0 : index
    %c0_8 = arith.constant 0 : index
    %24 = vector.load %arg3[%c0_7, %c0_8] : memref<1x48xf32, #tpu.memory_space<vmem>>, vector<1x48xf32>
    %25 = vector.broadcast %24 : vector<1x48xf32> to vector<128x48xf32>
    %26 = arith.addf %23, %25 : vector<128x48xf32>
    %c0_9 = arith.constant 0 : index
    %c0_10 = arith.constant 0 : index
    %27 = vector.load %arg4[%c0_9, %c0_10] : memref<48x192xf32, #tpu.memory_space<vmem>>, vector<48x192xf32>
    %cst_11 = arith.constant dense<0.000000e+00> : vector<128x192xf32>
    %28 = tpu.matmul %26, %27, %cst_11 {dimension_numbers = #tpu.dot_dimension_numbers<[1], [0], [0], [1], [0, 0, 1, 1], [], []>, precision = #tpu.contract_precision<fp32>} : vector<128x48xf32>, vector<48x192xf32>, vector<128x192xf32> -> vector<128x192xf32>
    %c0_12 = arith.constant 0 : index
    %c0_13 = arith.constant 0 : index
    %29 = vector.load %arg5[%c0_12, %c0_13] : memref<1x192xf32, #tpu.memory_space<vmem>>, vector<1x192xf32>
    %30 = vector.broadcast %29 : vector<1x192xf32> to vector<128x192xf32>
    %31 = arith.addf %28, %30 : vector<128x192xf32>
    %32 = vector.extract_strided_slice %31 {offsets = [0, 0], sizes = [128, 128], strides = [1, 1]} : vector<128x192xf32> to vector<128x128xf32>
    %cst_14 = arith.constant 0.000000e+00 : f32
    %33 = vector.broadcast %cst_14 : f32 to vector<128x128xf32>
    %34 = arith.maximumf %32, %33 : vector<128x128xf32>
    %35 = vector.extract_strided_slice %31 {offsets = [0, 128], sizes = [128, 32], strides = [1, 1]} : vector<128x192xf32> to vector<128x32xf32>
    %cst_15 = arith.constant 0.000000e+00 : f32
    %36 = vector.broadcast %cst_15 : f32 to vector<128x32xf32>
    %37 = arith.maximumf %35, %36 : vector<128x32xf32>
    %38 = vector.extract_strided_slice %31 {offsets = [0, 160], sizes = [128, 32], strides = [1, 1]} : vector<128x192xf32> to vector<128x32xf32>
    %cst_16 = arith.constant -5.000000e+00 : f32
    %cst_17 = arith.constant 5.000000e+00 : f32
    %39 = vector.broadcast %cst_16 : f32 to vector<128x32xf32>
    %40 = arith.maximumf %39, %38 : vector<128x32xf32>
    %41 = vector.broadcast %cst_17 : f32 to vector<128x32xf32>
    %42 = arith.minimumf %41, %40 : vector<128x32xf32>
    %c0_18 = arith.constant 0 : index
    %c0_19 = arith.constant 0 : index
    %43 = vector.load %arg6[%c0_18, %c0_19] : memref<128x160xf32, #tpu.memory_space<vmem>>, vector<128x160xf32>
    %cst_20 = arith.constant dense<0.000000e+00> : vector<128x160xf32>
    %44 = tpu.matmul %34, %43, %cst_20 {dimension_numbers = #tpu.dot_dimension_numbers<[1], [0], [0], [1], [0, 0, 1, 1], [], []>, precision = #tpu.contract_precision<fp32>} : vector<128x128xf32>, vector<128x160xf32>, vector<128x160xf32> -> vector<128x160xf32>
    %c0_21 = arith.constant 0 : index
    %c0_22 = arith.constant 0 : index
    %45 = vector.load %arg7[%c0_21, %c0_22] : memref<1x160xf32, #tpu.memory_space<vmem>>, vector<1x160xf32>
    %46 = vector.broadcast %45 : vector<1x160xf32> to vector<128x160xf32>
    %47 = arith.addf %44, %46 : vector<128x160xf32>
    %48 = vector.extract_strided_slice %47 {offsets = [0, 0], sizes = [128, 128], strides = [1, 1]} : vector<128x160xf32> to vector<128x128xf32>
    %cst_23 = arith.constant 0.000000e+00 : f32
    %cst_24 = arith.constant 5.000000e+00 : f32
    %49 = vector.broadcast %cst_23 : f32 to vector<128x128xf32>
    %50 = arith.maximumf %49, %48 : vector<128x128xf32>
    %51 = vector.broadcast %cst_24 : f32 to vector<128x128xf32>
    %52 = arith.minimumf %51, %50 : vector<128x128xf32>
    %53 = vector.extract_strided_slice %47 {offsets = [0, 128], sizes = [128, 32], strides = [1, 1]} : vector<128x160xf32> to vector<128x32xf32>
    %cst_25 = arith.constant 0.000000e+00 : f32
    %cst_26 = arith.constant 5.000000e+00 : f32
    %54 = vector.broadcast %cst_25 : f32 to vector<128x32xf32>
    %55 = arith.maximumf %54, %53 : vector<128x32xf32>
    %56 = vector.broadcast %cst_26 : f32 to vector<128x32xf32>
    %57 = arith.minimumf %56, %55 : vector<128x32xf32>
    %c0_27 = arith.constant 0 : index
    %c0_28 = arith.constant 0 : index
    %58 = vector.load %arg8[%c0_27, %c0_28] : memref<1x32xf32, #tpu.memory_space<vmem>>, vector<1x32xf32>
    %59 = vector.broadcast %58 : vector<1x32xf32> to vector<128x32xf32>
    %60 = arith.mulf %37, %59 : vector<128x32xf32>
    %cst_29 = arith.constant dense<0.000000e+00> : vector<128xf32>
    %61 = vector.multi_reduction <add>, %60, %cst_29 [1] : vector<128x32xf32> to vector<128xf32>
    %62 = vector.shape_cast %61 : vector<128xf32> to vector<128x1xf32>
    %c0_30 = arith.constant 0 : index
    %c0_31 = arith.constant 0 : index
    %63 = vector.load %arg9[%c0_30, %c0_31] : memref<1x1xf32, #tpu.memory_space<vmem>>, vector<1x1xf32>
    %64 = vector.broadcast %63 : vector<1x1xf32> to vector<128x1xf32>
    %65 = arith.addf %62, %64 : vector<128x1xf32>
    %cst_32 = arith.constant -5.000000e+00 : f32
    %cst_33 = arith.constant 5.000000e+00 : f32
    %66 = vector.broadcast %cst_32 : f32 to vector<128x1xf32>
    %67 = arith.maximumf %66, %65 : vector<128x1xf32>
    %68 = vector.broadcast %cst_33 : f32 to vector<128x1xf32>
    %69 = arith.minimumf %68, %67 : vector<128x1xf32>
    %70 = vector.extract_strided_slice %2 {offsets = [0, 0], sizes = [128, 1], strides = [1, 1]} : vector<128x4xf32> to vector<128x1xf32>
    %71 = vector.extract_strided_slice %52 {offsets = [0, 0], sizes = [128, 32], strides = [1, 1]} : vector<128x128xf32> to vector<128x32xf32>
    %72 = vector.broadcast %70 : vector<128x1xf32> to vector<128x32xf32>
    %73 = arith.mulf %72, %71 : vector<128x32xf32>
    %74 = arith.addf %42, %73 : vector<128x32xf32>
    %75 = vector.extract_strided_slice %2 {offsets = [0, 1], sizes = [128, 1], strides = [1, 1]} : vector<128x4xf32> to vector<128x1xf32>
    %76 = vector.extract_strided_slice %52 {offsets = [0, 32], sizes = [128, 32], strides = [1, 1]} : vector<128x128xf32> to vector<128x32xf32>
    %77 = vector.broadcast %75 : vector<128x1xf32> to vector<128x32xf32>
    %78 = arith.mulf %77, %76 : vector<128x32xf32>
    %79 = arith.addf %74, %78 : vector<128x32xf32>
    %80 = vector.extract_strided_slice %2 {offsets = [0, 2], sizes = [128, 1], strides = [1, 1]} : vector<128x4xf32> to vector<128x1xf32>
    %81 = vector.extract_strided_slice %52 {offsets = [0, 64], sizes = [128, 32], strides = [1, 1]} : vector<128x128xf32> to vector<128x32xf32>
    %82 = vector.broadcast %80 : vector<128x1xf32> to vector<128x32xf32>
    %83 = arith.mulf %82, %81 : vector<128x32xf32>
    %84 = arith.addf %79, %83 : vector<128x32xf32>
    %85 = vector.extract_strided_slice %2 {offsets = [0, 3], sizes = [128, 1], strides = [1, 1]} : vector<128x4xf32> to vector<128x1xf32>
    %86 = vector.extract_strided_slice %52 {offsets = [0, 96], sizes = [128, 32], strides = [1, 1]} : vector<128x128xf32> to vector<128x32xf32>
    %87 = vector.broadcast %85 : vector<128x1xf32> to vector<128x32xf32>
    %88 = arith.mulf %87, %86 : vector<128x32xf32>
    %89 = arith.addf %84, %88 : vector<128x32xf32>
    %cst_34 = arith.constant 0.000000e+00 : f32
    %90 = vector.broadcast %cst_34 : f32 to vector<128x32xf32>
    %91 = arith.cmpf ogt, %89, %90 : vector<128x32xf32>
    %cst_35 = arith.constant 0.000000e+00 : f32
    %92 = vector.broadcast %cst_35 : f32 to vector<128x32xf32>
    %93 = arith.minimumf %89, %92 : vector<128x32xf32>
    %94 = math.exp %93 : vector<128x32xf32>
    %cst_36 = arith.constant 1.000000e+00 : f32
    %95 = vector.broadcast %cst_36 : f32 to vector<128x32xf32>
    %96 = arith.subf %94, %95 : vector<128x32xf32>
    %97 = arith.select %91, %89, %96 : vector<128x32xi1>, vector<128x32xf32>
    %98 = arith.mulf %97, %57 : vector<128x32xf32>
    %cst_37 = arith.constant dense<0.000000e+00> : vector<128xf32>
    %99 = vector.multi_reduction <add>, %98, %cst_37 [1] : vector<128x32xf32> to vector<128xf32>
    %100 = vector.shape_cast %99 : vector<128xf32> to vector<128x1xf32>
    %101 = arith.addf %100, %69 : vector<128x1xf32>
    %c0_38 = arith.constant 0 : index
    %c0_39 = arith.constant 0 : index
    %102 = vector.load %arg10[%c0_38, %c0_39] : memref<128x1xf32, #tpu.memory_space<vmem>>, vector<128x1xf32>
    tpu.vector_store %arg10[%c0_38, %c0_39], %101 {strides = array<i32>} : memref<128x1xf32, #tpu.memory_space<vmem>>, vector<128x1xf32>,
    return
  }
  func.func @transform_0(%arg0: i32) -> (i32, i32) {
    %c0_i32 = arith.constant 0 : i32
    %c0_i32_0 = arith.constant 0 : i32
    return %arg0, %c0_i32 : i32, i32
  }
  func.func @transform_1(%arg0: i32) -> (i32, i32) {
    %c0_i32 = arith.constant 0 : i32
    %c0_i32_0 = arith.constant 0 : i32
    %c0_i32_1 = arith.constant 0 : i32
    return %c0_i32, %c0_i32_0 : i32, i32
  }
  func.func @transform_2(%arg0: i32) -> (i32, i32) {
    %c0_i32 = arith.constant 0 : i32
    %c0_i32_0 = arith.constant 0 : i32
    %c0_i32_1 = arith.constant 0 : i32
    return %c0_i32, %c0_i32_0 : i32, i32
  }
  func.func @transform_3(%arg0: i32) -> (i32, i32) {
    %c0_i32 = arith.constant 0 : i32
    %c0_i32_0 = arith.constant 0 : i32
    %c0_i32_1 = arith.constant 0 : i32
    return %c0_i32, %c0_i32_0 : i32, i32
  }
  func.func @transform_4(%arg0: i32) -> (i32, i32) {
    %c0_i32 = arith.constant 0 : i32
    %c0_i32_0 = arith.constant 0 : i32
    %c0_i32_1 = arith.constant 0 : i32
    return %c0_i32, %c0_i32_0 : i32, i32
  }
  func.func @transform_5(%arg0: i32) -> (i32, i32) {
    %c0_i32 = arith.constant 0 : i32
    %c0_i32_0 = arith.constant 0 : i32
    %c0_i32_1 = arith.constant 0 : i32
    return %c0_i32, %c0_i32_0 : i32, i32
  }
  func.func @transform_6(%arg0: i32) -> (i32, i32) {
    %c0_i32 = arith.constant 0 : i32
    %c0_i32_0 = arith.constant 0 : i32
    %c0_i32_1 = arith.constant 0 : i32
    return %c0_i32, %c0_i32_0 : i32, i32
  }
  func.func @transform_7(%arg0: i32) -> (i32, i32) {
    %c0_i32 = arith.constant 0 : i32
    %c0_i32_0 = arith.constant 0 : i32
    %c0_i32_1 = arith.constant 0 : i32
    return %c0_i32, %c0_i32_0 : i32, i32
  }
  func.func @transform_8(%arg0: i32) -> (i32, i32) {
    %c0_i32 = arith.constant 0 : i32
    %c0_i32_0 = arith.constant 0 : i32
    %c0_i32_1 = arith.constant 0 : i32
    return %c0_i32, %c0_i32_0 : i32, i32
  }
  func.func @transform_9(%arg0: i32) -> (i32, i32) {
    %c0_i32 = arith.constant 0 : i32
    %c0_i32_0 = arith.constant 0 : i32
    return %arg0, %c0_i32 : i32, i32
  }
}

</mosaic_0001>

<llo_original>
// kernel: tpu_custom_call.1
$region0: #{tpu_custom_call.1}
  #allocation0 [shape = 'u32[]', space=smem, size = 0x4, offset = 0x4, fixed_abs, tag = 'smem constant byte address 0x4 - core index']
  #allocation1 [shape = 'u32[144,128]{1,0:T(1,128)}', space=vmem, size = 0x12000, scoped, tag = 'internal scratch']
  #allocation2 [shape = 'f32[1,1]{1,0:T(1,128)S(1)}', space=vmem, size = 0x200, scoped, tag = 'scoped memory for tpu_custom_call.1']
  %s0 = inlined_call_operand.vmem [shape: f32[256,52], index: 0, kind: input, shape index: {}]
  %s1 = inlined_call_operand.vmem [shape: f32[1,48], index: 1, kind: input, shape index: {}]
  %s2 = inlined_call_operand.vmem [shape: f32[1,48], index: 2, kind: input, shape index: {}]
  %s3 = inlined_call_operand.vmem [shape: f32[48,192], index: 3, kind: input, shape index: {}]
  %s4 = inlined_call_operand.vmem [shape: f32[1,192], index: 4, kind: input, shape index: {}]
  %s5 = inlined_call_operand.vmem [shape: f32[128,160], index: 5, kind: input, shape index: {}]
  %s6 = inlined_call_operand.vmem [shape: f32[1,160], index: 6, kind: input, shape index: {}]
  %s7 = inlined_call_operand.vmem [shape: f32[1,32], index: 7, kind: input, shape index: {}]
  %s8 = inlined_call_operand.<no memory space> [shape: f32[1,1], index: 8, kind: input, shape index: {}]
  %s9 = inlined_call_operand.vmem [shape: f32[256,1], index: 9, kind: output, shape index: {}]
  %s10 = sld [smem:[#allocation0]]
  $region69: #{tpu_custom_call.1} parent=0
    _
  %s12 = ssub.s32 1, %s10
  %s13 = scalar_select 0, %s12, %s10
  %v14 = vstv %s8
  %15 = vst [vmem:[#allocation2] sm:$0x1] %v14
  loop: start=0, step=1, limit=4
  $region2: #{tpu_custom_call.1} parent=0 // loop_pre_header
    _
  $region3: #{tpu_custom_call.1} parent=0 // loop_header
    %s17 = sphi 0, %s21
    %p18 = scmp.ge.s32.totalorder %s17, 4
    %s27 = sphi 0, %s29
    %s30 = sphi 0, %s27
    %s31 = sphi 0, %s30
    %s47 = sphi 0, %s31
    %s51 = sphi 0, %s51
    %s53 = sphi 0, %s51
    %s54 = sphi 0, %s53
    %s68 = sphi 0, %s54
    %s72 = sphi 0, %s72
    %s74 = sphi 0, %s72
    %s75 = sphi 0, %s74
    %s89 = sphi 0, %s75
    %s93 = sphi 0, %s93
    %s95 = sphi 0, %s93
    %s96 = sphi 0, %s95
    %s110 = sphi 0, %s96
    %s114 = sphi 0, %s114
    %s116 = sphi 0, %s114
    %s117 = sphi 0, %s116
    %s131 = sphi 0, %s117
    %s135 = sphi 0, %s135
    %s137 = sphi 0, %s135
    %s138 = sphi 0, %s137
    %s152 = sphi 0, %s138
    %s156 = sphi 0, %s156
    %s158 = sphi 0, %s156
    %s159 = sphi 0, %s158
    %s173 = sphi 0, %s159
    %s177 = sphi 0, %s177
    %s179 = sphi 0, %s177
    %s180 = sphi 0, %s179
    %s194 = sphi 0, %s180
    %s198 = sphi 0, %s198
    %s200 = sphi 0, %s198
    %s201 = sphi 0, %s200
    %s215 = sphi 0, %s201
    %s221 = sphi 0, %s223
    %s224 = sphi 0, %s221
    %s225 = sphi 0, %s224
    %s241 = sphi 0, %s225
  $region4: #{tpu_custom_call.1} parent=0 // loop_header_branch
    %20 = sbr.rel (%p18) target = $region8
  $region5: #{tpu_custom_call.1} parent=0 // loop_body
    %s22 = ssub.s32 %s17, 1
    %s23 = ssub.s32 %s17, 2
    %s24 = sadd.s32 %s17, 1
    %s25 = ssub.s32 %s17, %s24
    %p26 = scmp.eq.s32.totalorder %s25, 0
    %s28 = sadd.s32 %s27, 1
    %s29 = scalar_select %p26, %s27, %s28
    %p32 = pneg %p26
    %p33 = scmp.eq.s32.totalorder %s17, 1
    %p34 = por %p32, %p33
    %p35 = scmp.ne.s32.totalorder %s27, %s30
    %p36 = scmp.eq.s32.totalorder %s17, 0
    %p37 = por %p35, %p36
    %p38 = scmp.ne.s32.totalorder %s27, %s30
    %p39 = scmp.eq.s32.totalorder %s22, 1
    %p40 = por %p38, %p39
    %p41 = scmp.ne.s32.totalorder %s30, %s31
    %p42 = scmp.eq.s32.totalorder %s22, 0
    %p43 = por %p41, %p42
    %p44 = scmp.ne.s32.totalorder %s30, %s31
    %p45 = scmp.eq.s32.totalorder %s23, 1
    %p46 = por %p44, %p45
    %p48 = scmp.ne.s32.totalorder %s31, %s47
    %p49 = scmp.eq.s32.totalorder %s23, 0
    %p50 = por %p48, %p49
    %s52 = sadd.s32 %s51, 1
    %p55 = scmp.eq.s32.totalorder %s17, 1
    %p56 = scmp.ne.s32.totalorder %s51, %s53
    %p57 = scmp.eq.s32.totalorder %s17, 0
    %p58 = por %p56, %p57
    %p59 = scmp.ne.s32.totalorder %s51, %s53
    %p60 = scmp.eq.s32.totalorder %s22, 1
    %p61 = por %p59, %p60
    %p62 = scmp.ne.s32.totalorder %s53, %s54
    %p63 = scmp.eq.s32.totalorder %s22, 0
    %p64 = por %p62, %p63
    %p65 = scmp.ne.s32.totalorder %s53, %s54
    %p66 = scmp.eq.s32.totalorder %s23, 1
    %p67 = por %p65, %p66
    %p69 = scmp.ne.s32.totalorder %s54, %s68
    %p70 = scmp.eq.s32.totalorder %s23, 0
    %p71 = por %p69, %p70
    %s73 = sadd.s32 %s72, 1
    %p76 = scmp.eq.s32.totalorder %s17, 1
    %p77 = scmp.ne.s32.totalorder %s72, %s74
    %p78 = scmp.eq.s32.totalorder %s17, 0
    %p79 = por %p77, %p78
    %p80 = scmp.ne.s32.totalorder %s72, %s74
    %p81 = scmp.eq.s32.totalorder %s22, 1
    %p82 = por %p80, %p81
    %p83 = scmp.ne.s32.totalorder %s74, %s75
    %p84 = scmp.eq.s32.totalorder %s22, 0
    %p85 = por %p83, %p84
    %p86 = scmp.ne.s32.totalorder %s74, %s75
    %p87 = scmp.eq.s32.totalorder %s23, 1
    %p88 = por %p86, %p87
    %p90 = scmp.ne.s32.totalorder %s75, %s89
    %p91 = scmp.eq.s32.totalorder %s23, 0
    %p92 = por %p90, %p91
    %s94 = sadd.s32 %s93, 1
    %p97 = scmp.eq.s32.totalorder %s17, 1
    %p98 = scmp.ne.s32.totalorder %s93, %s95
    %p99 = scmp.eq.s32.totalorder %s17, 0
    %p100 = por %p98, %p99
    %p101 = scmp.ne.s32.totalorder %s93, %s95
    %p102 = scmp.eq.s32.totalorder %s22, 1
    %p103 = por %p101, %p102
    %p104 = scmp.ne.s32.totalorder %s95, %s96
    %p105 = scmp.eq.s32.totalorder %s22, 0
    %p106 = por %p104, %p105
    %p107 = scmp.ne.s32.totalorder %s95, %s96
    %p108 = scmp.eq.s32.totalorder %s23, 1
    %p109 = por %p107, %p108
    %p111 = scmp.ne.s32.totalorder %s96, %s110
    %p112 = scmp.eq.s32.totalorder %s23, 0
    %p113 = por %p111, %p112
    %s115 = sadd.s32 %s114, 1
    %p118 = scmp.eq.s32.totalorder %s17, 1
    %p119 = scmp.ne.s32.totalorder %s114, %s116
    %p120 = scmp.eq.s32.totalorder %s17, 0
    %p121 = por %p119, %p120
    %p122 = scmp.ne.s32.totalorder %s114, %s116
    %p123 = scmp.eq.s32.totalorder %s22, 1
    %p124 = por %p122, %p123
    %p125 = scmp.ne.s32.totalorder %s116, %s117
    %p126 = scmp.eq.s32.totalorder %s22, 0
    %p127 = por %p125, %p126
    %p128 = scmp.ne.s32.totalorder %s116, %s117
    %p129 = scmp.eq.s32.totalorder %s23, 1
    %p130 = por %p128, %p129
    %p132 = scmp.ne.s32.totalorder %s117, %s131
    %p133 = scmp.eq.s32.totalorder %s23, 0
    %p134 = por %p132, %p133
    %s136 = sadd.s32 %s135, 1
    %p139 = scmp.eq.s32.totalorder %s17, 1
    %p140 = scmp.ne.s32.totalorder %s135, %s137
    %p141 = scmp.eq.s32.totalorder %s17, 0
    %p142 = por %p140, %p141
    %p143 = scmp.ne.s32.totalorder %s135, %s137
    %p144 = scmp.eq.s32.totalorder %s22, 1
    %p145 = por %p143, %p144
    %p146 = scmp.ne.s32.totalorder %s137, %s138
    %p147 = scmp.eq.s32.totalorder %s22, 0
    %p148 = por %p146, %p147
    %p149 = scmp.ne.s32.totalorder %s137, %s138
    %p150 = scmp.eq.s32.totalorder %s23, 1
    %p151 = por %p149, %p150
    %p153 = scmp.ne.s32.totalorder %s138, %s152
    %p154 = scmp.eq.s32.totalorder %s23, 0
    %p155 = por %p153, %p154
    %s157 = sadd.s32 %s156, 1
    %p160 = scmp.eq.s32.totalorder %s17, 1
    %p161 = scmp.ne.s32.totalorder %s156, %s158
    %p162 = scmp.eq.s32.totalorder %s17, 0
    %p163 = por %p161, %p162
    %p164 = scmp.ne.s32.totalorder %s156, %s158
    %p165 = scmp.eq.s32.totalorder %s22, 1
    %p166 = por %p164, %p165
    %p167 = scmp.ne.s32.totalorder %s158, %s159
    %p168 = scmp.eq.s32.totalorder %s22, 0
    %p169 = por %p167, %p168
    %p170 = scmp.ne.s32.totalorder %s158, %s159
    %p171 = scmp.eq.s32.totalorder %s23, 1
    %p172 = por %p170, %p171
    %p174 = scmp.ne.s32.totalorder %s159, %s173
    %p175 = scmp.eq.s32.totalorder %s23, 0
    %p176 = por %p174, %p175
    %s178 = sadd.s32 %s177, 1
    %p181 = scmp.eq.s32.totalorder %s17, 1
    %p182 = scmp.ne.s32.totalorder %s177, %s179
    %p183 = scmp.eq.s32.totalorder %s17, 0
    %p184 = por %p182, %p183
    %p185 = scmp.ne.s32.totalorder %s177, %s179
    %p186 = scmp.eq.s32.totalorder %s22, 1
    %p187 = por %p185, %p186
    %p188 = scmp.ne.s32.totalorder %s179, %s180
    %p189 = scmp.eq.s32.totalorder %s22, 0
    %p190 = por %p188, %p189
    %p191 = scmp.ne.s32.totalorder %s179, %s180
    %p192 = scmp.eq.s32.totalorder %s23, 1
    %p193 = por %p191, %p192
    %p195 = scmp.ne.s32.totalorder %s180, %s194
    %p196 = scmp.eq.s32.totalorder %s23, 0
    %p197 = por %p195, %p196
    %s199 = sadd.s32 %s198, 1
    %p202 = scmp.eq.s32.totalorder %s17, 1
    %p203 = scmp.ne.s32.totalorder %s198, %s200
    %p204 = scmp.eq.s32.totalorder %s17, 0
    %p205 = por %p203, %p204
    %p206 = scmp.ne.s32.totalorder %s198, %s200
    %p207 = scmp.eq.s32.totalorder %s22, 1
    %p208 = por %p206, %p207
    %p209 = scmp.ne.s32.totalorder %s200, %s201
    %p210 = scmp.eq.s32.totalorder %s22, 0
    %p211 = por %p209, %p210
    %p212 = scmp.ne.s32.totalorder %s200, %s201
    %p213 = scmp.eq.s32.totalorder %s23, 1
    %p214 = por %p212, %p213
    %p216 = scmp.ne.s32.totalorder %s201, %s215
    %p217 = scmp.eq.s32.totalorder %s23, 0
    %p218 = por %p216, %p217
    %s219 = ssub.s32 %s17, %s24
    %p220 = scmp.eq.s32.totalorder %s219, 0
    %s222 = sadd.s32 %s221, 1
    %s223 = scalar_select %p220, %s221, %s222
    %p226 = pneg %p220
    %p227 = scmp.eq.s32.totalorder %s17, 1
    %p228 = por %p226, %p227
    %p229 = scmp.ne.s32.totalorder %s221, %s224
    %p230 = scmp.eq.s32.totalorder %s17, 0
    %p231 = por %p229, %p230
    %p232 = scmp.ne.s32.totalorder %s221, %s224
    %p233 = scmp.eq.s32.totalorder %s22, 1
    %p234 = por %p232, %p233
    %p235 = scmp.ne.s32.totalorder %s224, %s225
    %p236 = scmp.eq.s32.totalorder %s22, 0
    %p237 = por %p235, %p236
    %p238 = scmp.ne.s32.totalorder %s224, %s225
    %p239 = scmp.eq.s32.totalorder %s23, 1
    %p240 = por %p238, %p239
    %p242 = scmp.ne.s32.totalorder %s225, %s241
    %p243 = scmp.eq.s32.totalorder %s23, 0
    %p244 = por %p242, %p243
    %p245 = scmp.le.s32.totalorder 1, %s17
    %p246 = scmp.lt.s32.totalorder %s17, 3
    %p247 = pnand %p245, %p246
    %p248 = pneg %p247
    // Predicated region
    $region9: #{tpu_custom_call.1} parent=5 // pred_check
      _
    $region10: #{tpu_custom_call.1} parent=5 // pred_check_branch
      %250 = sbr.rel (%p247) target = $region12
    $region11: #{tpu_custom_call.1} parent=5 // pred_region
      %s251 = ssub.s32 %s17, 1
      // Predicated region
      $region13: #{tpu_custom_call.1} parent=11 // pred_check
        %p252 = pneg %p64
      $region14: #{tpu_custom_call.1} parent=11 // pred_check_branch
        %254 = sbr.rel (%p252) target = $region16
      $region15: #{tpu_custom_call.1} parent=11 // pred_region
        _
      $region16: #{tpu_custom_call.1} parent=11 // pred_fallthru
        _
      // Predicated region
      $region17: #{tpu_custom_call.1} parent=11 // pred_check
        %p255 = pneg %p85
      $region18: #{tpu_custom_call.1} parent=11 // pred_check_branch
        %257 = sbr.rel (%p255) target = $region20
      $region19: #{tpu_custom_call.1} parent=11 // pred_region
        _
      $region20: #{tpu_custom_call.1} parent=11 // pred_fallthru
        _
      // Predicated region
      $region21: #{tpu_custom_call.1} parent=11 // pred_check
        %p258 = pneg %p106
      $region22: #{tpu_custom_call.1} parent=11 // pred_check_branch
        %260 = sbr.rel (%p258) target = $region24
      $region23: #{tpu_custom_call.1} parent=11 // pred_region
        _
      $region24: #{tpu_custom_call.1} parent=11 // pred_fallthru
        _
      // Predicated region
      $region25: #{tpu_custom_call.1} parent=11 // pred_check
        %p261 = pneg %p127
      $region26: #{tpu_custom_call.1} parent=11 // pred_check_branch
        %263 = sbr.rel (%p261) target = $region28
      $region27: #{tpu_custom_call.1} parent=11 // pred_region
        _
      $region28: #{tpu_custom_call.1} parent=11 // pred_fallthru
        _
      // Predicated region
      $region29: #{tpu_custom_call.1} parent=11 // pred_check
        %p264 = pneg %p148
      $region30: #{tpu_custom_call.1} parent=11 // pred_check_branch
        %266 = sbr.rel (%p264) target = $region32
      $region31: #{tpu_custom_call.1} parent=11 // pred_region
        _
      $region32: #{tpu_custom_call.1} parent=11 // pred_fallthru
        _
      // Predicated region
      $region33: #{tpu_custom_call.1} parent=11 // pred_check
        %p267 = pneg %p169
      $region34: #{tpu_custom_call.1} parent=11 // pred_check_branch
        %269 = sbr.rel (%p267) target = $region36
      $region35: #{tpu_custom_call.1} parent=11 // pred_region
        _
      $region36: #{tpu_custom_call.1} parent=11 // pred_fallthru
        _
      // Predicated region
      $region37: #{tpu_custom_call.1} parent=11 // pred_check
        %p270 = pneg %p190
      $region38: #{tpu_custom_call.1} parent=11 // pred_check_branch
        %272 = sbr.rel (%p270) target = $region40
      $region39: #{tpu_custom_call.1} parent=11 // pred_region
        _
      $region40: #{tpu_custom_call.1} parent=11 // pred_fallthru
        _
      // Predicated region
      $region41: #{tpu_custom_call.1} parent=11 // pred_check
        %p273 = pneg %p211
      $region42: #{tpu_custom_call.1} parent=11 // pred_check_branch
        %275 = sbr.rel (%p273) target = $region44
      $region43: #{tpu_custom_call.1} parent=11 // pred_region
        _
      $region44: #{tpu_custom_call.1} parent=11 // pred_fallthru
        _
    $region12: #{tpu_custom_call.1} parent=5 // pred_fallthru
      _
    %p276 = scmp.lt.s32.totalorder %s17, 2
    // Predicated region
    $region45: #{tpu_custom_call.1} parent=5 // pred_check
      %p277 = pneg %p276
    $region46: #{tpu_custom_call.1} parent=5 // pred_check_branch
      %279 = sbr.rel (%p277) target = $region48
    $region47: #{tpu_custom_call.1} parent=5 // pred_region
      // Predicated region
      $region49: #{tpu_custom_call.1} parent=47 // pred_check
        %p280 = pneg %p37
      $region50: #{tpu_custom_call.1} parent=47 // pred_check_branch
        %282 = sbr.rel (%p280) target = $region52
      $region51: #{tpu_custom_call.1} parent=47 // pred_region
        %s283 = smul.u32 16, %s17
        %p284 = scmp.lt.s32.totalorder %s283, 31
        %s285 = scalar_select %p284, %s283, 31
        %s286 = smul.addr %s285, 8
        %s287 = scalar_lea.vmem %s0, %s286
        %s288 = smul.u32 16, %s17
      $region52: #{tpu_custom_call.1} parent=47 // pred_fallthru
        _
    $region48: #{tpu_custom_call.1} parent=5 // pred_fallthru
      _
    %p289 = scmp.le.s32.totalorder 1, %s17
    %p290 = scmp.lt.s32.totalorder %s17, 3
    %p291 = pnand %p289, %p290
    %p292 = pneg %p291
    // Predicated region
    $region53: #{tpu_custom_call.1} parent=5 // pred_check
      _
    $region54: #{tpu_custom_call.1} parent=5 // pred_check_branch
      %294 = sbr.rel (%p291) target = $region56
    $region55: #{tpu_custom_call.1} parent=5 // pred_region
      %s295 = ssub.s32 %s17, 1
      %s296 = smul.u32 16, %s22
      %p297 = scmp.lt.s32.totalorder %s296, 31
      %s298 = scalar_select %p297, %s296, 31
      %s299 = smul.addr %s298, 8
      %s300 = scalar_lea.vmem %s0, %s299
      %p301 = pneg %p43
      %p302 = pneg %p40
      %p303 = pneg %p64
      %p304 = pneg %p61
      %p305 = pneg %p85
      %p306 = pneg %p82
      %p307 = pneg %p106
      %p308 = pneg %p103
      %p309 = pneg %p127
      %p310 = pneg %p124
      %p311 = pneg %p148
      %p312 = pneg %p145
      %p313 = pneg %p169
      %p314 = pneg %p166
      %p315 = pneg %p190
      %p316 = pneg %p187
      %p317 = pneg %p211
      %p318 = pneg %p208
      %p319 = pneg %p237
      %p320 = pneg %p234
      %s321 = smul.u32 16, %s22
      %p322 = scmp.lt.s32.totalorder %s321, 31
      %s323 = scalar_select %p322, %s321, 31
      %s324 = smul.addr %s323, 8
      %s325 = scalar_lea.vmem %s9, %s324
      %s326 = smul.u32 16, %s22
      %p327 = scmp.lt.s32.totalorder %s326, 31
      %s328 = scalar_select %p327, %s326, 31
      %s329 = smul.addr %s328, 8
      %s330 = scalar_lea.vmem %s0, %s329
      %s331 = smul.u32 16, %s22
      %s332 = smul.u32 16, %s22
      %p333 = scmp.lt.s32.totalorder %s332, 31
      %s334 = scalar_select %p333, %s332, 31
      %s335 = smul.addr %s334, 8
      %s336 = scalar_lea.vmem %s9, %s335
      %s337 = smul.u32 16, %s22
      %v338 = vld [vmem:[%s330] sm:$0xff]
      %v339 = vld [vmem:[%s330 + $0x8] sm:$0xff]
      %v340 = vld [vmem:[%s330 + $0x10] sm:$0xff]
      %v341 = vld [vmem:[%s330 + $0x18] sm:$0xff]
      %v342 = vld [vmem:[%s330 + $0x20] sm:$0xff]
      %v343 = vld [vmem:[%s330 + $0x28] sm:$0xff]
      %v344 = vld [vmem:[%s330 + $0x30] sm:$0xff]
      %v345 = vld [vmem:[%s330 + $0x38] sm:$0xff]
      %v346 = vld [vmem:[%s330 + $0x40] sm:$0xff]
      %v347 = vld [vmem:[%s330 + $0x48] sm:$0xff]
      %v348 = vld [vmem:[%s330 + $0x50] sm:$0xff]
      %v349 = vld [vmem:[%s330 + $0x58] sm:$0xff]
      %v350 = vld [vmem:[%s330 + $0x60] sm:$0xff]
      %v351 = vld [vmem:[%s330 + $0x68] sm:$0xff]
      %v352 = vld [vmem:[%s330 + $0x70] sm:$0xff]
      %v353 = vld [vmem:[%s330 + $0x78] sm:$0xff]
      %vm354 = vcmask 392192
      %v355 = vsel %vm354, %v338, 0.0
      %356 = vadd.xlane.f32.xlu0 %v355
      %v357 = vpop.xlane.xlu0 %356
      %v358 = vsel %vm354, %v339, 0.0
      %359 = vadd.xlane.f32.xlu0 %v358
      %v360 = vpop.xlane.xlu0 %359
      %v361 = vsel %vm354, %v340, 0.0
      %362 = vadd.xlane.f32.xlu0 %v361
      %v363 = vpop.xlane.xlu0 %362
      %v364 = vsel %vm354, %v341, 0.0
      %365 = vadd.xlane.f32.xlu0 %v364
      %v366 = vpop.xlane.xlu0 %365
      %v367 = vsel %vm354, %v342, 0.0
      %368 = vadd.xlane.f32.xlu0 %v367
      %v369 = vpop.xlane.xlu0 %368
      %v370 = vsel %vm354, %v343, 0.0
      %371 = vadd.xlane.f32.xlu0 %v370
      %v372 = vpop.xlane.xlu0 %371
      %v373 = vsel %vm354, %v344, 0.0
      %374 = vadd.xlane.f32.xlu0 %v373
      %v375 = vpop.xlane.xlu0 %374
      %v376 = vsel %vm354, %v345, 0.0
      %377 = vadd.xlane.f32.xlu0 %v376
      %v378 = vpop.xlane.xlu0 %377
      %v379 = vsel %vm354, %v346, 0.0
      %380 = vadd.xlane.f32.xlu0 %v379
      %v381 = vpop.xlane.xlu0 %380
      %v382 = vsel %vm354, %v347, 0.0
      %383 = vadd.xlane.f32.xlu0 %v382
      %v384 = vpop.xlane.xlu0 %383
      %v385 = vsel %vm354, %v348, 0.0
      %386 = vadd.xlane.f32.xlu0 %v385
      %v387 = vpop.xlane.xlu0 %386
      %v388 = vsel %vm354, %v349, 0.0
      %389 = vadd.xlane.f32.xlu0 %v388
      %v390 = vpop.xlane.xlu0 %389
      %v391 = vsel %vm354, %v350, 0.0
      %392 = vadd.xlane.f32.xlu0 %v391
      %v393 = vpop.xlane.xlu0 %392
      %v394 = vsel %vm354, %v351, 0.0
      %395 = vadd.xlane.f32.xlu0 %v394
      %v396 = vpop.xlane.xlu0 %395
      %v397 = vsel %vm354, %v352, 0.0
      %398 = vadd.xlane.f32.xlu0 %v397
      %v399 = vpop.xlane.xlu0 %398
      %v400 = vsel %vm354, %v353, 0.0
      %401 = vadd.xlane.f32.xlu0 %v400
      %v402 = vpop.xlane.xlu0 %401
      %v403 = vrcp.pop 48.0
      %v404 = vmul.f32 %v357, %v403
      %v405 = vmul.f32 %v360, %v403
      %v406 = vmul.f32 %v363, %v403
      %v407 = vmul.f32 %v366, %v403
      %v408 = vmul.f32 %v369, %v403
      %v409 = vmul.f32 %v372, %v403
      %v410 = vmul.f32 %v375, %v403
      %v411 = vmul.f32 %v378, %v403
      %v412 = vmul.f32 %v381, %v403
      %v413 = vmul.f32 %v384, %v403
      %v414 = vmul.f32 %v387, %v403
      %v415 = vmul.f32 %v390, %v403
      %v416 = vmul.f32 %v393, %v403
      %v417 = vmul.f32 %v396, %v403
      %v418 = vmul.f32 %v399, %v403
      %v419 = vmul.f32 %v402, %v403
      %v420 = vsub.f32 %v338, %v404
      %v421 = vsub.f32 %v339, %v405
      %v422 = vsub.f32 %v340, %v406
      %v423 = vsub.f32 %v341, %v407
      %v424 = vsub.f32 %v342, %v408
      %v425 = vsub.f32 %v343, %v409
      %v426 = vsub.f32 %v344, %v410
      %v427 = vsub.f32 %v345, %v411
      %v428 = vsub.f32 %v346, %v412
      %v429 = vsub.f32 %v347, %v413
      %v430 = vsub.f32 %v348, %v414
      %v431 = vsub.f32 %v349, %v415
      %v432 = vsub.f32 %v350, %v416
      %v433 = vsub.f32 %v351, %v417
      %v434 = vsub.f32 %v352, %v418
      %v435 = vsub.f32 %v353, %v419
      %v436 = vmul.f32 %v420, %v420
      %v437 = vmul.f32 %v421, %v421
      %v438 = vmul.f32 %v422, %v422
      %v439 = vmul.f32 %v423, %v423
      %v440 = vmul.f32 %v424, %v424
      %v441 = vmul.f32 %v425, %v425
      %v442 = vmul.f32 %v426, %v426
      %v443 = vmul.f32 %v427, %v427
      %v444 = vmul.f32 %v428, %v428
      %v445 = vmul.f32 %v429, %v429
      %v446 = vmul.f32 %v430, %v430
      %v447 = vmul.f32 %v431, %v431
      %v448 = vmul.f32 %v432, %v432
      %v449 = vmul.f32 %v433, %v433
      %v450 = vmul.f32 %v434, %v434
      %v451 = vmul.f32 %v435, %v435
      %v452 = vsel %vm354, %v436, 0.0
      %453 = vadd.xlane.f32.xlu0 %v452
      %v454 = vpop.xlane.xlu0 %453
      %v455 = vsel %vm354, %v437, 0.0
      %456 = vadd.xlane.f32.xlu0 %v455
      %v457 = vpop.xlane.xlu0 %456
      %v458 = vsel %vm354, %v438, 0.0
      %459 = vadd.xlane.f32.xlu0 %v458
      %v460 = vpop.xlane.xlu0 %459
      %v461 = vsel %vm354, %v439, 0.0
      %462 = vadd.xlane.f32.xlu0 %v461
      %v463 = vpop.xlane.xlu0 %462
      %v464 = vsel %vm354, %v440, 0.0
      %465 = vadd.xlane.f32.xlu0 %v464
      %v466 = vpop.xlane.xlu0 %465
      %v467 = vsel %vm354, %v441, 0.0
      %468 = vadd.xlane.f32.xlu0 %v467
      %v469 = vpop.xlane.xlu0 %468
      %v470 = vsel %vm354, %v442, 0.0
      %471 = vadd.xlane.f32.xlu0 %v470
      %v472 = vpop.xlane.xlu0 %471
      %v473 = vsel %vm354, %v443, 0.0
      %474 = vadd.xlane.f32.xlu0 %v473
      %v475 = vpop.xlane.xlu0 %474
      %v476 = vsel %vm354, %v444, 0.0
      %477 = vadd.xlane.f32.xlu0 %v476
      %v478 = vpop.xlane.xlu0 %477
      %v479 = vsel %vm354, %v445, 0.0
      %480 = vadd.xlane.f32.xlu0 %v479
      %v481 = vpop.xlane.xlu0 %480
      %v482 = vsel %vm354, %v446, 0.0
      %483 = vadd.xlane.f32.xlu0 %v482
      %v484 = vpop.xlane.xlu0 %483
      %v485 = vsel %vm354, %v447, 0.0
      %486 = vadd.xlane.f32.xlu0 %v485
      %v487 = vpop.xlane.xlu0 %486
      %v488 = vsel %vm354, %v448, 0.0
      %489 = vadd.xlane.f32.xlu0 %v488
      %v490 = vpop.xlane.xlu0 %489
      %v491 = vsel %vm354, %v449, 0.0
      %492 = vadd.xlane.f32.xlu0 %v491
      %v493 = vpop.xlane.xlu0 %492
      %v494 = vsel %vm354, %v450, 0.0
      %495 = vadd.xlane.f32.xlu0 %v494
      %v496 = vpop.xlane.xlu0 %495
      %v497 = vsel %vm354, %v451, 0.0
      %498 = vadd.xlane.f32.xlu0 %v497
      %v499 = vpop.xlane.xlu0 %498
      %v500 = vmul.f32 %v454, %v403
      %v501 = vmul.f32 %v457, %v403
      %v502 = vmul.f32 %v460, %v403
      %v503 = vmul.f32 %v463, %v403
      %v504 = vmul.f32 %v466, %v403
      %v505 = vmul.f32 %v469, %v403
      %v506 = vmul.f32 %v472, %v403
      %v507 = vmul.f32 %v475, %v403
      %v508 = vmul.f32 %v478, %v403
      %v509 = vmul.f32 %v481, %v403
      %v510 = vmul.f32 %v484, %v403
      %v511 = vmul.f32 %v487, %v403
      %v512 = vmul.f32 %v490, %v403
      %v513 = vmul.f32 %v493, %v403
      %v514 = vmul.f32 %v496, %v403
      %v515 = vmul.f32 %v499, %v403
      %v516 = vadd.f32 %v500, 1e-05
      %v517 = vadd.f32 %v501, 1e-05
      %v518 = vadd.f32 %v502, 1e-05
      %v519 = vadd.f32 %v503, 1e-05
      %v520 = vadd.f32 %v504, 1e-05
      %v521 = vadd.f32 %v505, 1e-05
      %v522 = vadd.f32 %v506, 1e-05
      %v523 = vadd.f32 %v507, 1e-05
      %v524 = vadd.f32 %v508, 1e-05
      %v525 = vadd.f32 %v509, 1e-05
      %v526 = vadd.f32 %v510, 1e-05
      %v527 = vadd.f32 %v511, 1e-05
      %v528 = vadd.f32 %v512, 1e-05
      %v529 = vadd.f32 %v513, 1e-05
      %v530 = vadd.f32 %v514, 1e-05
      %v531 = vadd.f32 %v515, 1e-05
      %v532 = vrsqrt.pop %v516
      %v533 = vrsqrt.pop %v517
      %v534 = vrsqrt.pop %v518
      %v535 = vrsqrt.pop %v519
      %v536 = vrsqrt.pop %v520
      %v537 = vrsqrt.pop %v521
      %v538 = vrsqrt.pop %v522
      %v539 = vrsqrt.pop %v523
      %v540 = vrsqrt.pop %v524
      %v541 = vrsqrt.pop %v525
      %v542 = vrsqrt.pop %v526
      %v543 = vrsqrt.pop %v527
      %v544 = vrsqrt.pop %v528
      %v545 = vrsqrt.pop %v529
      %v546 = vrsqrt.pop %v530
      %v547 = vrsqrt.pop %v531
      %v548 = vmul.f32 %v420, %v532
      %v549 = vmul.f32 %v421, %v533
      %v550 = vmul.f32 %v422, %v534
      %v551 = vmul.f32 %v423, %v535
      %v552 = vmul.f32 %v424, %v536
      %v553 = vmul.f32 %v425, %v537
      %v554 = vmul.f32 %v426, %v538
      %v555 = vmul.f32 %v427, %v539
      %v556 = vmul.f32 %v428, %v540
      %v557 = vmul.f32 %v429, %v541
      %v558 = vmul.f32 %v430, %v542
      %v559 = vmul.f32 %v431, %v543
      %v560 = vmul.f32 %v432, %v544
      %v561 = vmul.f32 %v433, %v545
      %v562 = vmul.f32 %v434, %v546
      %v563 = vmul.f32 %v435, %v547
      %v564 = vld [vmem:[%s1] sm:$0x1]
      %v566 = vlaneseq
      %v567 = vshrl.u32 %v566, 7
      %v568 = vsub.s32 0, %v567
      %v569 = vrot.slane %v564, %v568
      %v571 = vmul.f32 %v548, %v569
      %v572 = vmul.f32 %v549, %v569
      %v573 = vmul.f32 %v550, %v569
      %v574 = vmul.f32 %v551, %v569
      %v575 = vmul.f32 %v552, %v569
      %v576 = vmul.f32 %v553, %v569
      %v577 = vmul.f32 %v554, %v569
      %v578 = vmul.f32 %v555, %v569
      %v579 = vmul.f32 %v556, %v569
      %v580 = vmul.f32 %v557, %v569
      %v581 = vmul.f32 %v558, %v569
      %v582 = vmul.f32 %v559, %v569
      %v583 = vmul.f32 %v560, %v569
      %v584 = vmul.f32 %v561, %v569
      %v585 = vmul.f32 %v562, %v569
      %v586 = vmul.f32 %v563, %v569
      %v587 = vld [vmem:[%s2] sm:$0x1]
      %v589 = vlaneseq
      %v590 = vshrl.u32 %v589, 7
      %v591 = vsub.s32 0, %v590
      %v592 = vrot.slane %v587, %v591
      %v594 = vadd.f32 %v571, %v592
      %v595 = vadd.f32 %v572, %v592
      %v596 = vadd.f32 %v573, %v592
      %v597 = vadd.f32 %v574, %v592
      %v598 = vadd.f32 %v575, %v592
      %v599 = vadd.f32 %v576, %v592
      %v600 = vadd.f32 %v577, %v592
      %v601 = vadd.f32 %v578, %v592
      %v602 = vadd.f32 %v579, %v592
      %v603 = vadd.f32 %v580, %v592
      %v604 = vadd.f32 %v581, %v592
      %v605 = vadd.f32 %v582, %v592
      %v606 = vadd.f32 %v583, %v592
      %v607 = vadd.f32 %v584, %v592
      %v608 = vadd.f32 %v585, %v592
      %v609 = vadd.f32 %v586, %v592
      %v610 = vld [vmem:[%s3] sm:$0xff]
      %v611 = vld [vmem:[%s3 + $0x8] sm:$0xff]
      %v612 = vld [vmem:[%s3 + $0x10] sm:$0xff]
      %v613 = vld [vmem:[%s3 + $0x18] sm:$0xff]
      %v614 = vld [vmem:[%s3 + $0x20] sm:$0xff]
      %v615 = vld [vmem:[%s3 + $0x28] sm:$0xff]
      %v616 = vld [vmem:[%s3 + $0x30] sm:$0xff]
      %v617 = vld [vmem:[%s3 + $0x38] sm:$0xff]
      %v618 = vld [vmem:[%s3 + $0x40] sm:$0xff]
      %v619 = vld [vmem:[%s3 + $0x48] sm:$0xff]
      %v620 = vld [vmem:[%s3 + $0x50] sm:$0xff]
      %v621 = vld [vmem:[%s3 + $0x58] sm:$0xff]
      %v622 = vld [vmem:[%s4] sm:$0x3]
      %v624 = vlaneseq
      %v625 = vshrl.u32 %v624, 7
      %v626 = vsub.s32 0, %v625
      %v627 = vrot.slane %v622, %v626
      %v628 = vlaneseq
      %v629 = vshrl.u32 %v628, 7
      %v630 = vsub.s32 1, %v629
      %v631 = vrot.slane %v622, %v630
      %v635 = vsel %vm354, %v594, 0
      %v638 = vsel %vm354, %v595, 0
      %v641 = vsel %vm354, %v596, 0
      %v644 = vsel %vm354, %v597, 0
      %v647 = vsel %vm354, %v598, 0
      %v650 = vsel %vm354, %v599, 0
      %v653 = vsel %vm354, %v600, 0
      %v656 = vsel %vm354, %v601, 0
      %v659 = vsel %vm354, %v602, 0
      %v662 = vsel %vm354, %v603, 0
      %v665 = vsel %vm354, %v604, 0
      %v668 = vsel %vm354, %v605, 0
      %v671 = vsel %vm354, %v606, 0
      %v674 = vsel %vm354, %v607, 0
      %v677 = vsel %vm354, %v608, 0
      %v680 = vsel %vm354, %v609, 0
      %682 = vmatprep.subr.mxu0 0.0
      %683 = vmatpush1.msra.mxu0 0.0
      %684 = vmatprep.subr.mxu0 0.0
      %685 = vmatpush1.msra.mxu0 0.0
      %686 = vmatprep.subr.mxu0 0.0
      %687 = vmatpush1.msra.mxu0 0.0
      %688 = vmatprep.subr.mxu0 0.0
      %689 = vmatpush1.msra.mxu0 0.0
      %690 = vmatprep.subr.mxu0 0.0
      %691 = vmatpush1.msra.mxu0 0.0
      %692 = vmatprep.subr.mxu0 0.0
      %693 = vmatpush1.msra.mxu0 0.0
      %694 = vmatprep.subr.mxu0 0.0
      %695 = vmatpush1.msra.mxu0 0.0
      %696 = vmatprep.subr.mxu0 0.0
      %697 = vmatpush1.msra.mxu0 0.0
      %698 = vmatprep.subr.mxu0 0.0
      %699 = vmatpush1.msra.mxu0 0.0
      %700 = vmatprep.subr.mxu0 0.0
      %701 = vmatpush1.msra.mxu0 0.0
      %v702 = vand.u32 %v621, 4294901760
      %703 = vmatprep.subr.mxu0 %v702
      %v704 = vand.u32 %v620, 4294901760
      %705 = vmatpush1.msra.mxu0 %v704
      %v706 = vand.u32 %v619, 4294901760
      %707 = vmatprep.subr.mxu0 %v706
      %v708 = vand.u32 %v618, 4294901760
      %709 = vmatpush1.msra.mxu0 %v708
      %v710 = vand.u32 %v617, 4294901760
      %711 = vmatprep.subr.mxu0 %v710
      %v712 = vand.u32 %v616, 4294901760
      %713 = vmatpush1.msra.mxu0 %v712
      %v714 = vand.u32 %v615, 4294901760
      %715 = vmatprep.subr.mxu0 %v714
      %v716 = vand.u32 %v614, 4294901760
      %717 = vmatpush1.msra.mxu0 %v716
      %v718 = vand.u32 %v613, 4294901760
      %719 = vmatprep.subr.mxu0 %v718
      %v720 = vand.u32 %v612, 4294901760
      %721 = vmatpush1.msra.mxu0 %v720
      %v722 = vand.u32 %v611, 4294901760
      %723 = vmatprep.subr.mxu0 %v722
      %v724 = vand.u32 %v610, 4294901760
      %725 = vmatpush1.msra.mxu0 %v724
      %726 = vmatprep.subr.mxu0 0.0
      %727 = vmatpush2.msra.mxu0 0.0
      %728 = vmatprep.subr.mxu0 0.0
      %729 = vmatpush2.msra.mxu0 0.0
      %730 = vmatprep.subr.mxu0 0.0
      %731 = vmatpush2.msra.mxu0 0.0
      %732 = vmatprep.subr.mxu0 0.0
      %733 = vmatpush2.msra.mxu0 0.0
      %734 = vmatprep.subr.mxu0 0.0
      %735 = vmatpush2.msra.mxu0 0.0
      %736 = vmatprep.subr.mxu0 0.0
      %737 = vmatpush2.msra.mxu0 0.0
      %738 = vmatprep.subr.mxu0 0.0
      %739 = vmatpush2.msra.mxu0 0.0
      %740 = vmatprep.subr.mxu0 0.0
      %741 = vmatpush2.msra.mxu0 0.0
      %742 = vmatprep.subr.mxu0 0.0
      %743 = vmatpush2.msra.mxu0 0.0
      %744 = vmatprep.subr.mxu0 0.0
      %745 = vmatpush2.msra.mxu0 0.0
      %746 = vmatprep.subr.mxu0 0.0
      %747 = vmatpush2.msra.mxu0 0.0
      %748 = vmatprep.subr.mxu0 0.0
      %749 = vmatpush2.msra.mxu0 0.0
      %750 = vmatprep.subr.mxu0 0.0
      %751 = vmatpush2.msra.mxu0 0.0
      %752 = vmatprep.subr.mxu0 0.0
      %753 = vmatpush2.msra.mxu0 0.0
      %754 = vmatprep.subr.mxu0 0.0
      %755 = vmatpush2.msra.mxu0 0.0
      %756 = vmatprep.subr.mxu0 0.0
      %757 = vmatpush2.msra.mxu0 0.0
      %758 = vmatprep.mubr.f32.mxu0 0.0
      %v759 = vand.u32 %v635, 4294901760
      %v760 = vsub.f32 %v635, %v759
      %v761 = vand.u32 %v760, 4294901760
      %v762 = vsub.f32 %v760, %v761
      %v763 = vand.u32 %v762, 4294901760
      %764 = vmatmul.mubr.f32.gmra.mxu0 %v763
      %v765 = vpop.f32.mrf.mxu0
      %v766 = vadd.f32 %v627, %v765
      %v767 = vpop.f32.mrf.mxu0
      %v768 = vadd.f32 %v631, %v767
      %769 = vmatprep.mubr.f32.mxu0 0.0
      %v770 = vand.u32 %v638, 4294901760
      %v771 = vsub.f32 %v638, %v770
      %v772 = vand.u32 %v771, 4294901760
      %v773 = vsub.f32 %v771, %v772
      %v774 = vand.u32 %v773, 4294901760
      %775 = vmatmul.mubr.f32.gmra.mxu0 %v774
      %v776 = vpop.f32.mrf.mxu0
      %v777 = vadd.f32 %v627, %v776
      %v778 = vpop.f32.mrf.mxu0
      %v779 = vadd.f32 %v631, %v778
      %780 = vmatprep.mubr.f32.mxu0 0.0
      %v781 = vand.u32 %v641, 4294901760
      %v782 = vsub.f32 %v641, %v781
      %v783 = vand.u32 %v782, 4294901760
      %v784 = vsub.f32 %v782, %v783
      %v785 = vand.u32 %v784, 4294901760
      %786 = vmatmul.mubr.f32.gmra.mxu0 %v785
      %v787 = vpop.f32.mrf.mxu0
      %v788 = vadd.f32 %v627, %v787
      %v789 = vpop.f32.mrf.mxu0
      %v790 = vadd.f32 %v631, %v789
      %791 = vmatprep.mubr.f32.mxu0 0.0
      %v792 = vand.u32 %v644, 4294901760
      %v793 = vsub.f32 %v644, %v792
      %v794 = vand.u32 %v793, 4294901760
      %v795 = vsub.f32 %v793, %v794
      %v796 = vand.u32 %v795, 4294901760
      %797 = vmatmul.mubr.f32.gmra.mxu0 %v796
      %v798 = vpop.f32.mrf.mxu0
      %v799 = vadd.f32 %v627, %v798
      %v800 = vpop.f32.mrf.mxu0
      %v801 = vadd.f32 %v631, %v800
      %802 = vmatprep.mubr.f32.mxu0 0.0
      %v803 = vand.u32 %v647, 4294901760
      %v804 = vsub.f32 %v647, %v803
      %v805 = vand.u32 %v804, 4294901760
      %v806 = vsub.f32 %v804, %v805
      %v807 = vand.u32 %v806, 4294901760
      %808 = vmatmul.mubr.f32.gmra.mxu0 %v807
      %v809 = vpop.f32.mrf.mxu0
      %v810 = vadd.f32 %v627, %v809
      %v811 = vpop.f32.mrf.mxu0
      %v812 = vadd.f32 %v631, %v811
      %813 = vmatprep.mubr.f32.mxu0 0.0
      %v814 = vand.u32 %v650, 4294901760
      %v815 = vsub.f32 %v650, %v814
      %v816 = vand.u32 %v815, 4294901760
      %v817 = vsub.f32 %v815, %v816
      %v818 = vand.u32 %v817, 4294901760
      %819 = vmatmul.mubr.f32.gmra.mxu0 %v818
      %v820 = vpop.f32.mrf.mxu0
      %v821 = vadd.f32 %v627, %v820
      %v822 = vpop.f32.mrf.mxu0
      %v823 = vadd.f32 %v631, %v822
      %824 = vmatprep.mubr.f32.mxu0 0.0
      %v825 = vand.u32 %v653, 4294901760
      %v826 = vsub.f32 %v653, %v825
      %v827 = vand.u32 %v826, 4294901760
      %v828 = vsub.f32 %v826, %v827
      %v829 = vand.u32 %v828, 4294901760
      %830 = vmatmul.mubr.f32.gmra.mxu0 %v829
      %v831 = vpop.f32.mrf.mxu0
      %v832 = vadd.f32 %v627, %v831
      %v833 = vpop.f32.mrf.mxu0
      %v834 = vadd.f32 %v631, %v833
      %835 = vmatprep.mubr.f32.mxu0 0.0
      %v836 = vand.u32 %v656, 4294901760
      %v837 = vsub.f32 %v656, %v836
      %v838 = vand.u32 %v837, 4294901760
      %v839 = vsub.f32 %v837, %v838
      %v840 = vand.u32 %v839, 4294901760
      %841 = vmatmul.mubr.f32.gmra.mxu0 %v840
      %v842 = vpop.f32.mrf.mxu0
      %v843 = vadd.f32 %v627, %v842
      %v844 = vpop.f32.mrf.mxu0
      %v845 = vadd.f32 %v631, %v844
      %846 = vmatprep.mubr.f32.mxu0 0.0
      %v847 = vand.u32 %v659, 4294901760
      %v848 = vsub.f32 %v659, %v847
      %v849 = vand.u32 %v848, 4294901760
      %v850 = vsub.f32 %v848, %v849
      %v851 = vand.u32 %v850, 4294901760
      %852 = vmatmul.mubr.f32.gmra.mxu0 %v851
      %v853 = vpop.f32.mrf.mxu0
      %v854 = vadd.f32 %v627, %v853
      %v855 = vpop.f32.mrf.mxu0
      %v856 = vadd.f32 %v631, %v855
      %857 = vmatprep.mubr.f32.mxu0 0.0
      %v858 = vand.u32 %v662, 4294901760
      %v859 = vsub.f32 %v662, %v858
      %v860 = vand.u32 %v859, 4294901760
      %v861 = vsub.f32 %v859, %v860
      %v862 = vand.u32 %v861, 4294901760
      %863 = vmatmul.mubr.f32.gmra.mxu0 %v862
      %v864 = vpop.f32.mrf.mxu0
      %v865 = vadd.f32 %v627, %v864
      %v866 = vpop.f32.mrf.mxu0
      %v867 = vadd.f32 %v631, %v866
      %868 = vmatprep.mubr.f32.mxu0 0.0
      %v869 = vand.u32 %v665, 4294901760
      %v870 = vsub.f32 %v665, %v869
      %v871 = vand.u32 %v870, 4294901760
      %v872 = vsub.f32 %v870, %v871
      %v873 = vand.u32 %v872, 4294901760
      %874 = vmatmul.mubr.f32.gmra.mxu0 %v873
      %v875 = vpop.f32.mrf.mxu0
      %v876 = vadd.f32 %v627, %v875
      %v877 = vpop.f32.mrf.mxu0
      %v878 = vadd.f32 %v631, %v877
      %879 = vmatprep.mubr.f32.mxu0 0.0
      %v880 = vand.u32 %v668, 4294901760
      %v881 = vsub.f32 %v668, %v880
      %v882 = vand.u32 %v881, 4294901760
      %v883 = vsub.f32 %v881, %v882
      %v884 = vand.u32 %v883, 4294901760
      %885 = vmatmul.mubr.f32.gmra.mxu0 %v884
      %v886 = vpop.f32.mrf.mxu0
      %v887 = vadd.f32 %v627, %v886
      %v888 = vpop.f32.mrf.mxu0
      %v889 = vadd.f32 %v631, %v888
      %890 = vmatprep.mubr.f32.mxu0 0.0
      %v891 = vand.u32 %v671, 4294901760
      %v892 = vsub.f32 %v671, %v891
      %v893 = vand.u32 %v892, 4294901760
      %v894 = vsub.f32 %v892, %v893
      %v895 = vand.u32 %v894, 4294901760
      %896 = vmatmul.mubr.f32.gmra.mxu0 %v895
      %v897 = vpop.f32.mrf.mxu0
      %v898 = vadd.f32 %v627, %v897
      %v899 = vpop.f32.mrf.mxu0
      %v900 = vadd.f32 %v631, %v899
      %901 = vmatprep.mubr.f32.mxu0 0.0
      %v902 = vand.u32 %v674, 4294901760
      %v903 = vsub.f32 %v674, %v902
      %v904 = vand.u32 %v903, 4294901760
      %v905 = vsub.f32 %v903, %v904
      %v906 = vand.u32 %v905, 4294901760
      %907 = vmatmul.mubr.f32.gmra.mxu0 %v906
      %v908 = vpop.f32.mrf.mxu0
      %v909 = vadd.f32 %v627, %v908
      %v910 = vpop.f32.mrf.mxu0
      %v911 = vadd.f32 %v631, %v910
      %912 = vmatprep.mubr.f32.mxu0 0.0
      %v913 = vand.u32 %v677, 4294901760
      %v914 = vsub.f32 %v677, %v913
      %v915 = vand.u32 %v914, 4294901760
      %v916 = vsub.f32 %v914, %v915
      %v917 = vand.u32 %v916, 4294901760
      %918 = vmatmul.mubr.f32.gmra.mxu0 %v917
      %v919 = vpop.f32.mrf.mxu0
      %v920 = vadd.f32 %v627, %v919
      %v921 = vpop.f32.mrf.mxu0
      %v922 = vadd.f32 %v631, %v921
      %923 = vmatprep.mubr.f32.mxu0 0.0
      %v924 = vand.u32 %v680, 4294901760
      %v925 = vsub.f32 %v680, %v924
      %v926 = vand.u32 %v925, 4294901760
      %v927 = vsub.f32 %v925, %v926
      %v928 = vand.u32 %v927, 4294901760
      %929 = vmatmul.mubr.f32.gmra.mxu0 %v928
      %v930 = vpop.f32.mrf.mxu0
      %v931 = vadd.f32 %v627, %v930
      %v932 = vpop.f32.mrf.mxu0
      %v933 = vadd.f32 %v631, %v932
      %934 = vdwg.mxu0
      %935 = vmatprep.subr.mxu0 0.0
      %936 = vmatpush1.msra.mxu0 0.0
      %937 = vmatprep.subr.mxu0 0.0
      %938 = vmatpush1.msra.mxu0 0.0
      %939 = vmatprep.subr.mxu0 0.0
      %940 = vmatpush1.msra.mxu0 0.0
      %941 = vmatprep.subr.mxu0 0.0
      %942 = vmatpush1.msra.mxu0 0.0
      %943 = vmatprep.subr.mxu0 0.0
      %944 = vmatpush1.msra.mxu0 0.0
      %945 = vmatprep.subr.mxu0 0.0
      %946 = vmatpush1.msra.mxu0 0.0
      %947 = vmatprep.subr.mxu0 0.0
      %948 = vmatpush1.msra.mxu0 0.0
      %949 = vmatprep.subr.mxu0 0.0
      %950 = vmatpush1.msra.mxu0 0.0
      %951 = vmatprep.subr.mxu0 0.0
      %952 = vmatpush1.msra.mxu0 0.0
      %953 = vmatprep.subr.mxu0 0.0
      %954 = vmatpush1.msra.mxu0 0.0
      %v955 = vand.u32 %v621, 4294901760
      %v956 = vsub.f32 %v621, %v955
      %v957 = vand.u32 %v956, 4294901760
      %v958 = vsub.f32 %v956, %v957
      %v959 = vand.u32 %v958, 4294901760
      %960 = vmatprep.subr.mxu0 %v959
      %v961 = vand.u32 %v620, 4294901760
      %v962 = vsub.f32 %v620, %v961
      %v963 = vand.u32 %v962, 4294901760
      %v964 = vsub.f32 %v962, %v963
      %v965 = vand.u32 %v964, 4294901760
      %966 = vmatpush1.msra.mxu0 %v965
      %v967 = vand.u32 %v619, 4294901760
      %v968 = vsub.f32 %v619, %v967
      %v969 = vand.u32 %v968, 4294901760
      %v970 = vsub.f32 %v968, %v969
      %v971 = vand.u32 %v970, 4294901760
      %972 = vmatprep.subr.mxu0 %v971
      %v973 = vand.u32 %v618, 4294901760
      %v974 = vsub.f32 %v618, %v973
      %v975 = vand.u32 %v974, 4294901760
      %v976 = vsub.f32 %v974, %v975
      %v977 = vand.u32 %v976, 4294901760
      %978 = vmatpush1.msra.mxu0 %v977
      %v979 = vand.u32 %v617, 4294901760
      %v980 = vsub.f32 %v617, %v979
      %v981 = vand.u32 %v980, 4294901760
      %v982 = vsub.f32 %v980, %v981
      %v983 = vand.u32 %v982, 4294901760
      %984 = vmatprep.subr.mxu0 %v983
      %v985 = vand.u32 %v616, 4294901760
      %v986 = vsub.f32 %v616, %v985
      %v987 = vand.u32 %v986, 4294901760
      %v988 = vsub.f32 %v986, %v987
      %v989 = vand.u32 %v988, 4294901760
      %990 = vmatpush1.msra.mxu0 %v989
      %v991 = vand.u32 %v615, 4294901760
      %v992 = vsub.f32 %v615, %v991
      %v993 = vand.u32 %v992, 4294901760
      %v994 = vsub.f32 %v992, %v993
      %v995 = vand.u32 %v994, 4294901760
      %996 = vmatprep.subr.mxu0 %v995
      %v997 = vand.u32 %v614, 4294901760
      %v998 = vsub.f32 %v614, %v997
      %v999 = vand.u32 %v998, 4294901760
      %v1000 = vsub.f32 %v998, %v999
      %v1001 = vand.u32 %v1000, 4294901760
      %1002 = vmatpush1.msra.mxu0 %v1001
      %v1003 = vand.u32 %v613, 4294901760
      %v1004 = vsub.f32 %v613, %v1003
      %v1005 = vand.u32 %v1004, 4294901760
      %v1006 = vsub.f32 %v1004, %v1005
      %v1007 = vand.u32 %v1006, 4294901760
      %1008 = vmatprep.subr.mxu0 %v1007
      %v1009 = vand.u32 %v612, 4294901760
      %v1010 = vsub.f32 %v612, %v1009
      %v1011 = vand.u32 %v1010, 4294901760
      %v1012 = vsub.f32 %v1010, %v1011
      %v1013 = vand.u32 %v1012, 4294901760
      %1014 = vmatpush1.msra.mxu0 %v1013
      %v1015 = vand.u32 %v611, 4294901760
      %v1016 = vsub.f32 %v611, %v1015
      %v1017 = vand.u32 %v1016, 4294901760
      %v1018 = vsub.f32 %v1016, %v1017
      %v1019 = vand.u32 %v1018, 4294901760
      %1020 = vmatprep.subr.mxu0 %v1019
      %v1021 = vand.u32 %v610, 4294901760
      %v1022 = vsub.f32 %v610, %v1021
      %v1023 = vand.u32 %v1022, 4294901760
      %v1024 = vsub.f32 %v1022, %v1023
      %v1025 = vand.u32 %v1024, 4294901760
      %1026 = vmatpush1.msra.mxu0 %v1025
      %1027 = vmatprep.subr.mxu0 0.0
      %1028 = vmatpush2.msra.mxu0 0.0
      %1029 = vmatprep.subr.mxu0 0.0
      %1030 = vmatpush2.msra.mxu0 0.0
      %1031 = vmatprep.subr.mxu0 0.0
      %1032 = vmatpush2.msra.mxu0 0.0
      %1033 = vmatprep.subr.mxu0 0.0
      %1034 = vmatpush2.msra.mxu0 0.0
      %1035 = vmatprep.subr.mxu0 0.0
      %1036 = vmatpush2.msra.mxu0 0.0
      %1037 = vmatprep.subr.mxu0 0.0
      %1038 = vmatpush2.msra.mxu0 0.0
      %1039 = vmatprep.subr.mxu0 0.0
      %1040 = vmatpush2.msra.mxu0 0.0
      %1041 = vmatprep.subr.mxu0 0.0
      %1042 = vmatpush2.msra.mxu0 0.0
      %1043 = vmatprep.subr.mxu0 0.0
      %1044 = vmatpush2.msra.mxu0 0.0
      %1045 = vmatprep.subr.mxu0 0.0
      %1046 = vmatpush2.msra.mxu0 0.0
      %1047 = vmatprep.subr.mxu0 0.0
      %1048 = vmatpush2.msra.mxu0 0.0
      %1049 = vmatprep.subr.mxu0 0.0
      %1050 = vmatpush2.msra.mxu0 0.0
      %1051 = vmatprep.subr.mxu0 0.0
      %1052 = vmatpush2.msra.mxu0 0.0
      %1053 = vmatprep.subr.mxu0 0.0
      %1054 = vmatpush2.msra.mxu0 0.0
      %1055 = vmatprep.subr.mxu0 0.0
      %1056 = vmatpush2.msra.mxu0 0.0
      %1057 = vmatprep.subr.mxu0 0.0
      %1058 = vmatpush2.msra.mxu0 0.0
      %1059 = vmatprep.mubr.f32.mxu0 0.0
      %v1060 = vand.u32 %v635, 4294901760
      %1061 = vmatmul.mubr.f32.gmra.mxu0 %v1060
      %v1062 = vpop.f32.mrf.mxu0
      %v1063 = vadd.f32 %v766, %v1062
      %v1064 = vpop.f32.mrf.mxu0
      %v1065 = vadd.f32 %v768, %v1064
      %1066 = vmatprep.mubr.f32.mxu0 0.0
      %v1067 = vand.u32 %v638, 4294901760
      %1068 = vmatmul.mubr.f32.gmra.mxu0 %v1067
      %v1069 = vpop.f32.mrf.mxu0
      %v1070 = vadd.f32 %v777, %v1069
      %v1071 = vpop.f32.mrf.mxu0
      %v1072 = vadd.f32 %v779, %v1071
      %1073 = vmatprep.mubr.f32.mxu0 0.0
      %v1074 = vand.u32 %v641, 4294901760
      %1075 = vmatmul.mubr.f32.gmra.mxu0 %v1074
      %v1076 = vpop.f32.mrf.mxu0
      %v1077 = vadd.f32 %v788, %v1076
      %v1078 = vpop.f32.mrf.mxu0
      %v1079 = vadd.f32 %v790, %v1078
      %1080 = vmatprep.mubr.f32.mxu0 0.0
      %v1081 = vand.u32 %v644, 4294901760
      %1082 = vmatmul.mubr.f32.gmra.mxu0 %v1081
      %v1083 = vpop.f32.mrf.mxu0
      %v1084 = vadd.f32 %v799, %v1083
      %v1085 = vpop.f32.mrf.mxu0
      %v1086 = vadd.f32 %v801, %v1085
      %1087 = vmatprep.mubr.f32.mxu0 0.0
      %v1088 = vand.u32 %v647, 4294901760
      %1089 = vmatmul.mubr.f32.gmra.mxu0 %v1088
      %v1090 = vpop.f32.mrf.mxu0
      %v1091 = vadd.f32 %v810, %v1090
      %v1092 = vpop.f32.mrf.mxu0
      %v1093 = vadd.f32 %v812, %v1092
      %1094 = vmatprep.mubr.f32.mxu0 0.0
      %v1095 = vand.u32 %v650, 4294901760
      %1096 = vmatmul.mubr.f32.gmra.mxu0 %v1095
      %v1097 = vpop.f32.mrf.mxu0
      %v1098 = vadd.f32 %v821, %v1097
      %v1099 = vpop.f32.mrf.mxu0
      %v1100 = vadd.f32 %v823, %v1099
      %1101 = vmatprep.mubr.f32.mxu0 0.0
      %v1102 = vand.u32 %v653, 4294901760
      %1103 = vmatmul.mubr.f32.gmra.mxu0 %v1102
      %v1104 = vpop.f32.mrf.mxu0
      %v1105 = vadd.f32 %v832, %v1104
      %v1106 = vpop.f32.mrf.mxu0
      %v1107 = vadd.f32 %v834, %v1106
      %1108 = vmatprep.mubr.f32.mxu0 0.0
      %v1109 = vand.u32 %v656, 4294901760
      %1110 = vmatmul.mubr.f32.gmra.mxu0 %v1109
      %v1111 = vpop.f32.mrf.mxu0
      %v1112 = vadd.f32 %v843, %v1111
      %v1113 = vpop.f32.mrf.mxu0
      %v1114 = vadd.f32 %v845, %v1113
      %1115 = vmatprep.mubr.f32.mxu0 0.0
      %v1116 = vand.u32 %v659, 4294901760
      %1117 = vmatmul.mubr.f32.gmra.mxu0 %v1116
      %v1118 = vpop.f32.mrf.mxu0
      %v1119 = vadd.f32 %v854, %v1118
      %v1120 = vpop.f32.mrf.mxu0
      %v1121 = vadd.f32 %v856, %v1120
      %1122 = vmatprep.mubr.f32.mxu0 0.0
      %v1123 = vand.u32 %v662, 4294901760
      %1124 = vmatmul.mubr.f32.gmra.mxu0 %v1123
      %v1125 = vpop.f32.mrf.mxu0
      %v1126 = vadd.f32 %v865, %v1125
      %v1127 = vpop.f32.mrf.mxu0
      %v1128 = vadd.f32 %v867, %v1127
      %1129 = vmatprep.mubr.f32.mxu0 0.0
      %v1130 = vand.u32 %v665, 4294901760
      %1131 = vmatmul.mubr.f32.gmra.mxu0 %v1130
      %v1132 = vpop.f32.mrf.mxu0
      %v1133 = vadd.f32 %v876, %v1132
      %v1134 = vpop.f32.mrf.mxu0
      %v1135 = vadd.f32 %v878, %v1134
      %1136 = vmatprep.mubr.f32.mxu0 0.0
      %v1137 = vand.u32 %v668, 4294901760
      %1138 = vmatmul.mubr.f32.gmra.mxu0 %v1137
      %v1139 = vpop.f32.mrf.mxu0
      %v1140 = vadd.f32 %v887, %v1139
      %v1141 = vpop.f32.mrf.mxu0
      %v1142 = vadd.f32 %v889, %v1141
      %1143 = vmatprep.mubr.f32.mxu0 0.0
      %v1144 = vand.u32 %v671, 4294901760
      %1145 = vmatmul.mubr.f32.gmra.mxu0 %v1144
      %v1146 = vpop.f32.mrf.mxu0
      %v1147 = vadd.f32 %v898, %v1146
      %v1148 = vpop.f32.mrf.mxu0
      %v1149 = vadd.f32 %v900, %v1148
      %1150 = vmatprep.mubr.f32.mxu0 0.0
      %v1151 = vand.u32 %v674, 4294901760
      %1152 = vmatmul.mubr.f32.gmra.mxu0 %v1151
      %v1153 = vpop.f32.mrf.mxu0
      %v1154 = vadd.f32 %v909, %v1153
      %v1155 = vpop.f32.mrf.mxu0
      %v1156 = vadd.f32 %v911, %v1155
      %1157 = vmatprep.mubr.f32.mxu0 0.0
      %v1158 = vand.u32 %v677, 4294901760
      %1159 = vmatmul.mubr.f32.gmra.mxu0 %v1158
      %v1160 = vpop.f32.mrf.mxu0
      %v1161 = vadd.f32 %v920, %v1160
      %v1162 = vpop.f32.mrf.mxu0
      %v1163 = vadd.f32 %v922, %v1162
      %1164 = vmatprep.mubr.f32.mxu0 0.0
      %v1165 = vand.u32 %v680, 4294901760
      %1166 = vmatmul.mubr.f32.gmra.mxu0 %v1165
      %v1167 = vpop.f32.mrf.mxu0
      %v1168 = vadd.f32 %v931, %v1167
      %v1169 = vpop.f32.mrf.mxu0
      %v1170 = vadd.f32 %v933, %v1169
      %1171 = vdwg.mxu0
      %1172 = vmatprep.subr.mxu0 0.0
      %1173 = vmatpush1.msra.mxu0 0.0
      %1174 = vmatprep.subr.mxu0 0.0
      %1175 = vmatpush1.msra.mxu0 0.0
      %1176 = vmatprep.subr.mxu0 0.0
      %1177 = vmatpush1.msra.mxu0 0.0
      %1178 = vmatprep.subr.mxu0 0.0
      %1179 = vmatpush1.msra.mxu0 0.0
      %1180 = vmatprep.subr.mxu0 0.0
      %1181 = vmatpush1.msra.mxu0 0.0
      %1182 = vmatprep.subr.mxu0 0.0
      %1183 = vmatpush1.msra.mxu0 0.0
      %1184 = vmatprep.subr.mxu0 0.0
      %1185 = vmatpush1.msra.mxu0 0.0
      %1186 = vmatprep.subr.mxu0 0.0
      %1187 = vmatpush1.msra.mxu0 0.0
      %1188 = vmatprep.subr.mxu0 0.0
      %1189 = vmatpush1.msra.mxu0 0.0
      %1190 = vmatprep.subr.mxu0 0.0
      %1191 = vmatpush1.msra.mxu0 0.0
      %v1192 = vand.u32 %v621, 4294901760
      %v1193 = vsub.f32 %v621, %v1192
      %1194 = vmatprep.subr.mxu0 %v1193
      %v1195 = vand.u32 %v620, 4294901760
      %v1196 = vsub.f32 %v620, %v1195
      %1197 = vmatpush1.msra.mxu0 %v1196
      %v1198 = vand.u32 %v619, 4294901760
      %v1199 = vsub.f32 %v619, %v1198
      %1200 = vmatprep.subr.mxu0 %v1199
      %v1201 = vand.u32 %v618, 4294901760
      %v1202 = vsub.f32 %v618, %v1201
      %1203 = vmatpush1.msra.mxu0 %v1202
      %v1204 = vand.u32 %v617, 4294901760
      %v1205 = vsub.f32 %v617, %v1204
      %1206 = vmatprep.subr.mxu0 %v1205
      %v1207 = vand.u32 %v616, 4294901760
      %v1208 = vsub.f32 %v616, %v1207
      %1209 = vmatpush1.msra.mxu0 %v1208
      %v1210 = vand.u32 %v615, 4294901760
      %v1211 = vsub.f32 %v615, %v1210
      %1212 = vmatprep.subr.mxu0 %v1211
      %v1213 = vand.u32 %v614, 4294901760
      %v1214 = vsub.f32 %v614, %v1213
      %1215 = vmatpush1.msra.mxu0 %v1214
      %v1216 = vand.u32 %v613, 4294901760
      %v1217 = vsub.f32 %v613, %v1216
      %1218 = vmatprep.subr.mxu0 %v1217
      %v1219 = vand.u32 %v612, 4294901760
      %v1220 = vsub.f32 %v612, %v1219
      %1221 = vmatpush1.msra.mxu0 %v1220
      %v1222 = vand.u32 %v611, 4294901760
      %v1223 = vsub.f32 %v611, %v1222
      %1224 = vmatprep.subr.mxu0 %v1223
      %v1225 = vand.u32 %v610, 4294901760
      %v1226 = vsub.f32 %v610, %v1225
      %1227 = vmatpush1.msra.mxu0 %v1226
      %1228 = vmatprep.subr.mxu0 0.0
      %1229 = vmatpush2.msra.mxu0 0.0
      %1230 = vmatprep.subr.mxu0 0.0
      %1231 = vmatpush2.msra.mxu0 0.0
      %1232 = vmatprep.subr.mxu0 0.0
      %1233 = vmatpush2.msra.mxu0 0.0
      %1234 = vmatprep.subr.mxu0 0.0
      %1235 = vmatpush2.msra.mxu0 0.0
      %1236 = vmatprep.subr.mxu0 0.0
      %1237 = vmatpush2.msra.mxu0 0.0
      %1238 = vmatprep.subr.mxu0 0.0
      %1239 = vmatpush2.msra.mxu0 0.0
      %1240 = vmatprep.subr.mxu0 0.0
      %1241 = vmatpush2.msra.mxu0 0.0
      %1242 = vmatprep.subr.mxu0 0.0
      %1243 = vmatpush2.msra.mxu0 0.0
      %1244 = vmatprep.subr.mxu0 0.0
      %1245 = vmatpush2.msra.mxu0 0.0
      %1246 = vmatprep.subr.mxu0 0.0
      %1247 = vmatpush2.msra.mxu0 0.0
      %1248 = vmatprep.subr.mxu0 0.0
      %1249 = vmatpush2.msra.mxu0 0.0
      %1250 = vmatprep.subr.mxu0 0.0
      %1251 = vmatpush2.msra.mxu0 0.0
      %1252 = vmatprep.subr.mxu0 0.0
      %1253 = vmatpush2.msra.mxu0 0.0
      %1254 = vmatprep.subr.mxu0 0.0
      %1255 = vmatpush2.msra.mxu0 0.0
      %1256 = vmatprep.subr.mxu0 0.0
      %1257 = vmatpush2.msra.mxu0 0.0
      %1258 = vmatprep.subr.mxu0 0.0
      %1259 = vmatpush2.msra.mxu0 0.0
      %1260 = vmatprep.mubr.f32.mxu0 0.0
      %v1261 = vand.u32 %v635, 4294901760
      %v1262 = vsub.f32 %v635, %v1261
      %1263 = vmatmul.mubr.f32.gmra.mxu0 %v1262
      %v1264 = vpop.f32.mrf.mxu0
      %v1265 = vadd.f32 %v1063, %v1264
      %v1266 = vpop.f32.mrf.mxu0
      %v1267 = vadd.f32 %v1065, %v1266
      %1268 = vmatprep.mubr.f32.mxu0 0.0
      %v1269 = vand.u32 %v638, 4294901760
      %v1270 = vsub.f32 %v638, %v1269
      %1271 = vmatmul.mubr.f32.gmra.mxu0 %v1270
      %v1272 = vpop.f32.mrf.mxu0
      %v1273 = vadd.f32 %v1070, %v1272
      %v1274 = vpop.f32.mrf.mxu0
      %v1275 = vadd.f32 %v1072, %v1274
      %1276 = vmatprep.mubr.f32.mxu0 0.0
      %v1277 = vand.u32 %v641, 4294901760
      %v1278 = vsub.f32 %v641, %v1277
      %1279 = vmatmul.mubr.f32.gmra.mxu0 %v1278
      %v1280 = vpop.f32.mrf.mxu0
      %v1281 = vadd.f32 %v1077, %v1280
      %v1282 = vpop.f32.mrf.mxu0
      %v1283 = vadd.f32 %v1079, %v1282
      %1284 = vmatprep.mubr.f32.mxu0 0.0
      %v1285 = vand.u32 %v644, 4294901760
      %v1286 = vsub.f32 %v644, %v1285
      %1287 = vmatmul.mubr.f32.gmra.mxu0 %v1286
      %v1288 = vpop.f32.mrf.mxu0
      %v1289 = vadd.f32 %v1084, %v1288
      %v1290 = vpop.f32.mrf.mxu0
      %v1291 = vadd.f32 %v1086, %v1290
      %1292 = vmatprep.mubr.f32.mxu0 0.0
      %v1293 = vand.u32 %v647, 4294901760
      %v1294 = vsub.f32 %v647, %v1293
      %1295 = vmatmul.mubr.f32.gmra.mxu0 %v1294
      %v1296 = vpop.f32.mrf.mxu0
      %v1297 = vadd.f32 %v1091, %v1296
      %v1298 = vpop.f32.mrf.mxu0
      %v1299 = vadd.f32 %v1093, %v1298
      %1300 = vmatprep.mubr.f32.mxu0 0.0
      %v1301 = vand.u32 %v650, 4294901760
      %v1302 = vsub.f32 %v650, %v1301
      %1303 = vmatmul.mubr.f32.gmra.mxu0 %v1302
      %v1304 = vpop.f32.mrf.mxu0
      %v1305 = vadd.f32 %v1098, %v1304
      %v1306 = vpop.f32.mrf.mxu0
      %v1307 = vadd.f32 %v1100, %v1306
      %1308 = vmatprep.mubr.f32.mxu0 0.0
      %v1309 = vand.u32 %v653, 4294901760
      %v1310 = vsub.f32 %v653, %v1309
      %1311 = vmatmul.mubr.f32.gmra.mxu0 %v1310
      %v1312 = vpop.f32.mrf.mxu0
      %v1313 = vadd.f32 %v1105, %v1312
      %v1314 = vpop.f32.mrf.mxu0
      %v1315 = vadd.f32 %v1107, %v1314
      %1316 = vmatprep.mubr.f32.mxu0 0.0
      %v1317 = vand.u32 %v656, 4294901760
      %v1318 = vsub.f32 %v656, %v1317
      %1319 = vmatmul.mubr.f32.gmra.mxu0 %v1318
      %v1320 = vpop.f32.mrf.mxu0
      %v1321 = vadd.f32 %v1112, %v1320
      %v1322 = vpop.f32.mrf.mxu0
      %v1323 = vadd.f32 %v1114, %v1322
      %1324 = vmatprep.mubr.f32.mxu0 0.0
      %v1325 = vand.u32 %v659, 4294901760
      %v1326 = vsub.f32 %v659, %v1325
      %1327 = vmatmul.mubr.f32.gmra.mxu0 %v1326
      %v1328 = vpop.f32.mrf.mxu0
      %v1329 = vadd.f32 %v1119, %v1328
      %v1330 = vpop.f32.mrf.mxu0
      %v1331 = vadd.f32 %v1121, %v1330
      %1332 = vmatprep.mubr.f32.mxu0 0.0
      %v1333 = vand.u32 %v662, 4294901760
      %v1334 = vsub.f32 %v662, %v1333
      %1335 = vmatmul.mubr.f32.gmra.mxu0 %v1334
      %v1336 = vpop.f32.mrf.mxu0
      %v1337 = vadd.f32 %v1126, %v1336
      %v1338 = vpop.f32.mrf.mxu0
      %v1339 = vadd.f32 %v1128, %v1338
      %1340 = vmatprep.mubr.f32.mxu0 0.0
      %v1341 = vand.u32 %v665, 4294901760
      %v1342 = vsub.f32 %v665, %v1341
      %1343 = vmatmul.mubr.f32.gmra.mxu0 %v1342
      %v1344 = vpop.f32.mrf.mxu0
      %v1345 = vadd.f32 %v1133, %v1344
      %v1346 = vpop.f32.mrf.mxu0
      %v1347 = vadd.f32 %v1135, %v1346
      %1348 = vmatprep.mubr.f32.mxu0 0.0
      %v1349 = vand.u32 %v668, 4294901760
      %v1350 = vsub.f32 %v668, %v1349
      %1351 = vmatmul.mubr.f32.gmra.mxu0 %v1350
      %v1352 = vpop.f32.mrf.mxu0
      %v1353 = vadd.f32 %v1140, %v1352
      %v1354 = vpop.f32.mrf.mxu0
      %v1355 = vadd.f32 %v1142, %v1354
      %1356 = vmatprep.mubr.f32.mxu0 0.0
      %v1357 = vand.u32 %v671, 4294901760
      %v1358 = vsub.f32 %v671, %v1357
      %1359 = vmatmul.mubr.f32.gmra.mxu0 %v1358
      %v1360 = vpop.f32.mrf.mxu0
      %v1361 = vadd.f32 %v1147, %v1360
      %v1362 = vpop.f32.mrf.mxu0
      %v1363 = vadd.f32 %v1149, %v1362
      %1364 = vmatprep.mubr.f32.mxu0 0.0
      %v1365 = vand.u32 %v674, 4294901760
      %v1366 = vsub.f32 %v674, %v1365
      %1367 = vmatmul.mubr.f32.gmra.mxu0 %v1366
      %v1368 = vpop.f32.mrf.mxu0
      %v1369 = vadd.f32 %v1154, %v1368
      %v1370 = vpop.f32.mrf.mxu0
      %v1371 = vadd.f32 %v1156, %v1370
      %1372 = vmatprep.mubr.f32.mxu0 0.0
      %v1373 = vand.u32 %v677, 4294901760
      %v1374 = vsub.f32 %v677, %v1373
      %1375 = vmatmul.mubr.f32.gmra.mxu0 %v1374
      %v1376 = vpop.f32.mrf.mxu0
      %v1377 = vadd.f32 %v1161, %v1376
      %v1378 = vpop.f32.mrf.mxu0
      %v1379 = vadd.f32 %v1163, %v1378
      %1380 = vmatprep.mubr.f32.mxu0 0.0
      %v1381 = vand.u32 %v680, 4294901760
      %v1382 = vsub.f32 %v680, %v1381
      %1383 = vmatmul.mubr.f32.gmra.mxu0 %v1382
      %v1384 = vpop.f32.mrf.mxu0
      %v1385 = vadd.f32 %v1168, %v1384
      %v1386 = vpop.f32.mrf.mxu0
      %v1387 = vadd.f32 %v1170, %v1386
      %1388 = vdwg.mxu0
      %1389 = vmatprep.subr.mxu0 0.0
      %1390 = vmatpush1.msra.mxu0 0.0
      %1391 = vmatprep.subr.mxu0 0.0
      %1392 = vmatpush1.msra.mxu0 0.0
      %1393 = vmatprep.subr.mxu0 0.0
      %1394 = vmatpush1.msra.mxu0 0.0
      %1395 = vmatprep.subr.mxu0 0.0
      %1396 = vmatpush1.msra.mxu0 0.0
      %1397 = vmatprep.subr.mxu0 0.0
      %1398 = vmatpush1.msra.mxu0 0.0
      %1399 = vmatprep.subr.mxu0 0.0
      %1400 = vmatpush1.msra.mxu0 0.0
      %1401 = vmatprep.subr.mxu0 0.0
      %1402 = vmatpush1.msra.mxu0 0.0
      %1403 = vmatprep.subr.mxu0 0.0
      %1404 = vmatpush1.msra.mxu0 0.0
      %1405 = vmatprep.subr.mxu0 0.0
      %1406 = vmatpush1.msra.mxu0 0.0
      %1407 = vmatprep.subr.mxu0 0.0
      %1408 = vmatpush1.msra.mxu0 0.0
      %v1409 = vand.u32 %v621, 4294901760
      %1410 = vmatprep.subr.mxu0 %v1409
      %v1411 = vand.u32 %v620, 4294901760
      %1412 = vmatpush1.msra.mxu0 %v1411
      %v1413 = vand.u32 %v619, 4294901760
      %1414 = vmatprep.subr.mxu0 %v1413
      %v1415 = vand.u32 %v618, 4294901760
      %1416 = vmatpush1.msra.mxu0 %v1415
      %v1417 = vand.u32 %v617, 4294901760
      %1418 = vmatprep.subr.mxu0 %v1417
      %v1419 = vand.u32 %v616, 4294901760
      %1420 = vmatpush1.msra.mxu0 %v1419
      %v1421 = vand.u32 %v615, 4294901760
      %1422 = vmatprep.subr.mxu0 %v1421
      %v1423 = vand.u32 %v614, 4294901760
      %1424 = vmatpush1.msra.mxu0 %v1423
      %v1425 = vand.u32 %v613, 4294901760
      %1426 = vmatprep.subr.mxu0 %v1425
      %v1427 = vand.u32 %v612, 4294901760
      %1428 = vmatpush1.msra.mxu0 %v1427
      %v1429 = vand.u32 %v611, 4294901760
      %1430 = vmatprep.subr.mxu0 %v1429
      %v1431 = vand.u32 %v610, 4294901760
      %1432 = vmatpush1.msra.mxu0 %v1431
      %1433 = vmatprep.subr.mxu0 0.0
      %1434 = vmatpush2.msra.mxu0 0.0
      %1435 = vmatprep.subr.mxu0 0.0
      %1436 = vmatpush2.msra.mxu0 0.0
      %1437 = vmatprep.subr.mxu0 0.0
      %1438 = vmatpush2.msra.mxu0 0.0
      %1439 = vmatprep.subr.mxu0 0.0
      %1440 = vmatpush2.msra.mxu0 0.0
      %1441 = vmatprep.subr.mxu0 0.0
      %1442 = vmatpush2.msra.mxu0 0.0
      %1443 = vmatprep.subr.mxu0 0.0
      %1444 = vmatpush2.msra.mxu0 0.0
      %1445 = vmatprep.subr.mxu0 0.0
      %1446 = vmatpush2.msra.mxu0 0.0
      %1447 = vmatprep.subr.mxu0 0.0
      %1448 = vmatpush2.msra.mxu0 0.0
      %1449 = vmatprep.subr.mxu0 0.0
      %1450 = vmatpush2.msra.mxu0 0.0
      %1451 = vmatprep.subr.mxu0 0.0
      %1452 = vmatpush2.msra.mxu0 0.0
      %1453 = vmatprep.subr.mxu0 0.0
      %1454 = vmatpush2.msra.mxu0 0.0
      %1455 = vmatprep.subr.mxu0 0.0
      %1456 = vmatpush2.msra.mxu0 0.0
      %1457 = vmatprep.subr.mxu0 0.0
      %1458 = vmatpush2.msra.mxu0 0.0
      %1459 = vmatprep.subr.mxu0 0.0
      %1460 = vmatpush2.msra.mxu0 0.0
      %1461 = vmatprep.subr.mxu0 0.0
      %1462 = vmatpush2.msra.mxu0 0.0
      %1463 = vmatprep.subr.mxu0 0.0
      %1464 = vmatpush2.msra.mxu0 0.0
      %1465 = vmatprep.mubr.f32.mxu0 0.0
      %v1466 = vand.u32 %v635, 4294901760
      %v1467 = vsub.f32 %v635, %v1466
      %v1468 = vand.u32 %v1467, 4294901760
      %1469 = vmatmul.mubr.f32.gmra.mxu0 %v1468
      %v1470 = vpop.f32.mrf.mxu0
      %v1471 = vadd.f32 %v1265, %v1470
      %v1472 = vpop.f32.mrf.mxu0
      %v1473 = vadd.f32 %v1267, %v1472
      %1474 = vmatprep.mubr.f32.mxu0 0.0
      %v1475 = vand.u32 %v638, 4294901760
      %v1476 = vsub.f32 %v638, %v1475
      %v1477 = vand.u32 %v1476, 4294901760
      %1478 = vmatmul.mubr.f32.gmra.mxu0 %v1477
      %v1479 = vpop.f32.mrf.mxu0
      %v1480 = vadd.f32 %v1273, %v1479
      %v1481 = vpop.f32.mrf.mxu0
      %v1482 = vadd.f32 %v1275, %v1481
      %1483 = vmatprep.mubr.f32.mxu0 0.0
      %v1484 = vand.u32 %v641, 4294901760
      %v1485 = vsub.f32 %v641, %v1484
      %v1486 = vand.u32 %v1485, 4294901760
      %1487 = vmatmul.mubr.f32.gmra.mxu0 %v1486
      %v1488 = vpop.f32.mrf.mxu0
      %v1489 = vadd.f32 %v1281, %v1488
      %v1490 = vpop.f32.mrf.mxu0
      %v1491 = vadd.f32 %v1283, %v1490
      %1492 = vmatprep.mubr.f32.mxu0 0.0
      %v1493 = vand.u32 %v644, 4294901760
      %v1494 = vsub.f32 %v644, %v1493
      %v1495 = vand.u32 %v1494, 4294901760
      %1496 = vmatmul.mubr.f32.gmra.mxu0 %v1495
      %v1497 = vpop.f32.mrf.mxu0
      %v1498 = vadd.f32 %v1289, %v1497
      %v1499 = vpop.f32.mrf.mxu0
      %v1500 = vadd.f32 %v1291, %v1499
      %1501 = vmatprep.mubr.f32.mxu0 0.0
      %v1502 = vand.u32 %v647, 4294901760
      %v1503 = vsub.f32 %v647, %v1502
      %v1504 = vand.u32 %v1503, 4294901760
      %1505 = vmatmul.mubr.f32.gmra.mxu0 %v1504
      %v1506 = vpop.f32.mrf.mxu0
      %v1507 = vadd.f32 %v1297, %v1506
      %v1508 = vpop.f32.mrf.mxu0
      %v1509 = vadd.f32 %v1299, %v1508
      %1510 = vmatprep.mubr.f32.mxu0 0.0
      %v1511 = vand.u32 %v650, 4294901760
      %v1512 = vsub.f32 %v650, %v1511
      %v1513 = vand.u32 %v1512, 4294901760
      %1514 = vmatmul.mubr.f32.gmra.mxu0 %v1513
      %v1515 = vpop.f32.mrf.mxu0
      %v1516 = vadd.f32 %v1305, %v1515
      %v1517 = vpop.f32.mrf.mxu0
      %v1518 = vadd.f32 %v1307, %v1517
      %1519 = vmatprep.mubr.f32.mxu0 0.0
      %v1520 = vand.u32 %v653, 4294901760
      %v1521 = vsub.f32 %v653, %v1520
      %v1522 = vand.u32 %v1521, 4294901760
      %1523 = vmatmul.mubr.f32.gmra.mxu0 %v1522
      %v1524 = vpop.f32.mrf.mxu0
      %v1525 = vadd.f32 %v1313, %v1524
      %v1526 = vpop.f32.mrf.mxu0
      %v1527 = vadd.f32 %v1315, %v1526
      %1528 = vmatprep.mubr.f32.mxu0 0.0
      %v1529 = vand.u32 %v656, 4294901760
      %v1530 = vsub.f32 %v656, %v1529
      %v1531 = vand.u32 %v1530, 4294901760
      %1532 = vmatmul.mubr.f32.gmra.mxu0 %v1531
      %v1533 = vpop.f32.mrf.mxu0
      %v1534 = vadd.f32 %v1321, %v1533
      %v1535 = vpop.f32.mrf.mxu0
      %v1536 = vadd.f32 %v1323, %v1535
      %1537 = vmatprep.mubr.f32.mxu0 0.0
      %v1538 = vand.u32 %v659, 4294901760
      %v1539 = vsub.f32 %v659, %v1538
      %v1540 = vand.u32 %v1539, 4294901760
      %1541 = vmatmul.mubr.f32.gmra.mxu0 %v1540
      %v1542 = vpop.f32.mrf.mxu0
      %v1543 = vadd.f32 %v1329, %v1542
      %v1544 = vpop.f32.mrf.mxu0
      %v1545 = vadd.f32 %v1331, %v1544
      %1546 = vmatprep.mubr.f32.mxu0 0.0
      %v1547 = vand.u32 %v662, 4294901760
      %v1548 = vsub.f32 %v662, %v1547
      %v1549 = vand.u32 %v1548, 4294901760
      %1550 = vmatmul.mubr.f32.gmra.mxu0 %v1549
      %v1551 = vpop.f32.mrf.mxu0
      %v1552 = vadd.f32 %v1337, %v1551
      %v1553 = vpop.f32.mrf.mxu0
      %v1554 = vadd.f32 %v1339, %v1553
      %1555 = vmatprep.mubr.f32.mxu0 0.0
      %v1556 = vand.u32 %v665, 4294901760
      %v1557 = vsub.f32 %v665, %v1556
      %v1558 = vand.u32 %v1557, 4294901760
      %1559 = vmatmul.mubr.f32.gmra.mxu0 %v1558
      %v1560 = vpop.f32.mrf.mxu0
      %v1561 = vadd.f32 %v1345, %v1560
      %v1562 = vpop.f32.mrf.mxu0
      %v1563 = vadd.f32 %v1347, %v1562
      %1564 = vmatprep.mubr.f32.mxu0 0.0
      %v1565 = vand.u32 %v668, 4294901760
      %v1566 = vsub.f32 %v668, %v1565
      %v1567 = vand.u32 %v1566, 4294901760
      %1568 = vmatmul.mubr.f32.gmra.mxu0 %v1567
      %v1569 = vpop.f32.mrf.mxu0
      %v1570 = vadd.f32 %v1353, %v1569
      %v1571 = vpop.f32.mrf.mxu0
      %v1572 = vadd.f32 %v1355, %v1571
      %1573 = vmatprep.mubr.f32.mxu0 0.0
      %v1574 = vand.u32 %v671, 4294901760
      %v1575 = vsub.f32 %v671, %v1574
      %v1576 = vand.u32 %v1575, 4294901760
      %1577 = vmatmul.mubr.f32.gmra.mxu0 %v1576
      %v1578 = vpop.f32.mrf.mxu0
      %v1579 = vadd.f32 %v1361, %v1578
      %v1580 = vpop.f32.mrf.mxu0
      %v1581 = vadd.f32 %v1363, %v1580
      %1582 = vmatprep.mubr.f32.mxu0 0.0
      %v1583 = vand.u32 %v674, 4294901760
      %v1584 = vsub.f32 %v674, %v1583
      %v1585 = vand.u32 %v1584, 4294901760
      %1586 = vmatmul.mubr.f32.gmra.mxu0 %v1585
      %v1587 = vpop.f32.mrf.mxu0
      %v1588 = vadd.f32 %v1369, %v1587
      %v1589 = vpop.f32.mrf.mxu0
      %v1590 = vadd.f32 %v1371, %v1589
      %1591 = vmatprep.mubr.f32.mxu0 0.0
      %v1592 = vand.u32 %v677, 4294901760
      %v1593 = vsub.f32 %v677, %v1592
      %v1594 = vand.u32 %v1593, 4294901760
      %1595 = vmatmul.mubr.f32.gmra.mxu0 %v1594
      %v1596 = vpop.f32.mrf.mxu0
      %v1597 = vadd.f32 %v1377, %v1596
      %v1598 = vpop.f32.mrf.mxu0
      %v1599 = vadd.f32 %v1379, %v1598
      %1600 = vmatprep.mubr.f32.mxu0 0.0
      %v1601 = vand.u32 %v680, 4294901760
      %v1602 = vsub.f32 %v680, %v1601
      %v1603 = vand.u32 %v1602, 4294901760
      %1604 = vmatmul.mubr.f32.gmra.mxu0 %v1603
      %v1605 = vpop.f32.mrf.mxu0
      %v1606 = vadd.f32 %v1385, %v1605
      %v1607 = vpop.f32.mrf.mxu0
      %v1608 = vadd.f32 %v1387, %v1607
      %1609 = vdwg.mxu0
      %1610 = vmatprep.subr.mxu0 0.0
      %1611 = vmatpush1.msra.mxu0 0.0
      %1612 = vmatprep.subr.mxu0 0.0
      %1613 = vmatpush1.msra.mxu0 0.0
      %1614 = vmatprep.subr.mxu0 0.0
      %1615 = vmatpush1.msra.mxu0 0.0
      %1616 = vmatprep.subr.mxu0 0.0
      %1617 = vmatpush1.msra.mxu0 0.0
      %1618 = vmatprep.subr.mxu0 0.0
      %1619 = vmatpush1.msra.mxu0 0.0
      %1620 = vmatprep.subr.mxu0 0.0
      %1621 = vmatpush1.msra.mxu0 0.0
      %1622 = vmatprep.subr.mxu0 0.0
      %1623 = vmatpush1.msra.mxu0 0.0
      %1624 = vmatprep.subr.mxu0 0.0
      %1625 = vmatpush1.msra.mxu0 0.0
      %1626 = vmatprep.subr.mxu0 0.0
      %1627 = vmatpush1.msra.mxu0 0.0
      %1628 = vmatprep.subr.mxu0 0.0
      %1629 = vmatpush1.msra.mxu0 0.0
      %v1630 = vand.u32 %v621, 4294901760
      %v1631 = vsub.f32 %v621, %v1630
      %v1632 = vand.u32 %v1631, 4294901760
      %1633 = vmatprep.subr.mxu0 %v1632
      %v1634 = vand.u32 %v620, 4294901760
      %v1635 = vsub.f32 %v620, %v1634
      %v1636 = vand.u32 %v1635, 4294901760
      %1637 = vmatpush1.msra.mxu0 %v1636
      %v1638 = vand.u32 %v619, 4294901760
      %v1639 = vsub.f32 %v619, %v1638
      %v1640 = vand.u32 %v1639, 4294901760
      %1641 = vmatprep.subr.mxu0 %v1640
      %v1642 = vand.u32 %v618, 4294901760
      %v1643 = vsub.f32 %v618, %v1642
      %v1644 = vand.u32 %v1643, 4294901760
      %1645 = vmatpush1.msra.mxu0 %v1644
      %v1646 = vand.u32 %v617, 4294901760
      %v1647 = vsub.f32 %v617, %v1646
      %v1648 = vand.u32 %v1647, 4294901760
      %1649 = vmatprep.subr.mxu0 %v1648
      %v1650 = vand.u32 %v616, 4294901760
      %v1651 = vsub.f32 %v616, %v1650
      %v1652 = vand.u32 %v1651, 4294901760
      %1653 = vmatpush1.msra.mxu0 %v1652
      %v1654 = vand.u32 %v615, 4294901760
      %v1655 = vsub.f32 %v615, %v1654
      %v1656 = vand.u32 %v1655, 4294901760
      %1657 = vmatprep.subr.mxu0 %v1656
      %v1658 = vand.u32 %v614, 4294901760
      %v1659 = vsub.f32 %v614, %v1658
      %v1660 = vand.u32 %v1659, 4294901760
      %1661 = vmatpush1.msra.mxu0 %v1660
      %v1662 = vand.u32 %v613, 4294901760
      %v1663 = vsub.f32 %v613, %v1662
      %v1664 = vand.u32 %v1663, 4294901760
      %1665 = vmatprep.subr.mxu0 %v1664
      %v1666 = vand.u32 %v612, 4294901760
      %v1667 = vsub.f32 %v612, %v1666
      %v1668 = vand.u32 %v1667, 4294901760
      %1669 = vmatpush1.msra.mxu0 %v1668
      %v1670 = vand.u32 %v611, 4294901760
      %v1671 = vsub.f32 %v611, %v1670
      %v1672 = vand.u32 %v1671, 4294901760
      %1673 = vmatprep.subr.mxu0 %v1672
      %v1674 = vand.u32 %v610, 4294901760
      %v1675 = vsub.f32 %v610, %v1674
      %v1676 = vand.u32 %v1675, 4294901760
      %1677 = vmatpush1.msra.mxu0 %v1676
      %1678 = vmatprep.subr.mxu0 0.0
      %1679 = vmatpush2.msra.mxu0 0.0
      %1680 = vmatprep.subr.mxu0 0.0
      %1681 = vmatpush2.msra.mxu0 0.0
      %1682 = vmatprep.subr.mxu0 0.0
      %1683 = vmatpush2.msra.mxu0 0.0
      %1684 = vmatprep.subr.mxu0 0.0
      %1685 = vmatpush2.msra.mxu0 0.0
      %1686 = vmatprep.subr.mxu0 0.0
      %1687 = vmatpush2.msra.mxu0 0.0
      %1688 = vmatprep.subr.mxu0 0.0
      %1689 = vmatpush2.msra.mxu0 0.0
      %1690 = vmatprep.subr.mxu0 0.0
      %1691 = vmatpush2.msra.mxu0 0.0
      %1692 = vmatprep.subr.mxu0 0.0
      %1693 = vmatpush2.msra.mxu0 0.0
      %1694 = vmatprep.subr.mxu0 0.0
      %1695 = vmatpush2.msra.mxu0 0.0
      %1696 = vmatprep.subr.mxu0 0.0
      %1697 = vmatpush2.msra.mxu0 0.0
      %1698 = vmatprep.subr.mxu0 0.0
      %1699 = vmatpush2.msra.mxu0 0.0
      %1700 = vmatprep.subr.mxu0 0.0
      %1701 = vmatpush2.msra.mxu0 0.0
      %1702 = vmatprep.subr.mxu0 0.0
      %1703 = vmatpush2.msra.mxu0 0.0
      %1704 = vmatprep.subr.mxu0 0.0
      %1705 = vmatpush2.msra.mxu0 0.0
      %1706 = vmatprep.subr.mxu0 0.0
      %1707 = vmatpush2.msra.mxu0 0.0
      %1708 = vmatprep.subr.mxu0 0.0
      %1709 = vmatpush2.msra.mxu0 0.0
      %1710 = vmatprep.mubr.f32.mxu0 0.0
      %v1711 = vand.u32 %v635, 4294901760
      %1712 = vmatmul.mubr.f32.gmra.mxu0 %v1711
      %v1713 = vpop.f32.mrf.mxu0
      %v1714 = vadd.f32 %v1471, %v1713
      %v1715 = vpop.f32.mrf.mxu0
      %v1716 = vadd.f32 %v1473, %v1715
      %1717 = vmatprep.mubr.f32.mxu0 0.0
      %v1718 = vand.u32 %v638, 4294901760
      %1719 = vmatmul.mubr.f32.gmra.mxu0 %v1718
      %v1720 = vpop.f32.mrf.mxu0
      %v1721 = vadd.f32 %v1480, %v1720
      %v1722 = vpop.f32.mrf.mxu0
      %v1723 = vadd.f32 %v1482, %v1722
      %1724 = vmatprep.mubr.f32.mxu0 0.0
      %v1725 = vand.u32 %v641, 4294901760
      %1726 = vmatmul.mubr.f32.gmra.mxu0 %v1725
      %v1727 = vpop.f32.mrf.mxu0
      %v1728 = vadd.f32 %v1489, %v1727
      %v1729 = vpop.f32.mrf.mxu0
      %v1730 = vadd.f32 %v1491, %v1729
      %1731 = vmatprep.mubr.f32.mxu0 0.0
      %v1732 = vand.u32 %v644, 4294901760
      %1733 = vmatmul.mubr.f32.gmra.mxu0 %v1732
      %v1734 = vpop.f32.mrf.mxu0
      %v1735 = vadd.f32 %v1498, %v1734
      %v1736 = vpop.f32.mrf.mxu0
      %v1737 = vadd.f32 %v1500, %v1736
      %1738 = vmatprep.mubr.f32.mxu0 0.0
      %v1739 = vand.u32 %v647, 4294901760
      %1740 = vmatmul.mubr.f32.gmra.mxu0 %v1739
      %v1741 = vpop.f32.mrf.mxu0
      %v1742 = vadd.f32 %v1507, %v1741
      %v1743 = vpop.f32.mrf.mxu0
      %v1744 = vadd.f32 %v1509, %v1743
      %1745 = vmatprep.mubr.f32.mxu0 0.0
      %v1746 = vand.u32 %v650, 4294901760
      %1747 = vmatmul.mubr.f32.gmra.mxu0 %v1746
      %v1748 = vpop.f32.mrf.mxu0
      %v1749 = vadd.f32 %v1516, %v1748
      %v1750 = vpop.f32.mrf.mxu0
      %v1751 = vadd.f32 %v1518, %v1750
      %1752 = vmatprep.mubr.f32.mxu0 0.0
      %v1753 = vand.u32 %v653, 4294901760
      %1754 = vmatmul.mubr.f32.gmra.mxu0 %v1753
      %v1755 = vpop.f32.mrf.mxu0
      %v1756 = vadd.f32 %v1525, %v1755
      %v1757 = vpop.f32.mrf.mxu0
      %v1758 = vadd.f32 %v1527, %v1757
      %1759 = vmatprep.mubr.f32.mxu0 0.0
      %v1760 = vand.u32 %v656, 4294901760
      %1761 = vmatmul.mubr.f32.gmra.mxu0 %v1760
      %v1762 = vpop.f32.mrf.mxu0
      %v1763 = vadd.f32 %v1534, %v1762
      %v1764 = vpop.f32.mrf.mxu0
      %v1765 = vadd.f32 %v1536, %v1764
      %1766 = vmatprep.mubr.f32.mxu0 0.0
      %v1767 = vand.u32 %v659, 4294901760
      %1768 = vmatmul.mubr.f32.gmra.mxu0 %v1767
      %v1769 = vpop.f32.mrf.mxu0
      %v1770 = vadd.f32 %v1543, %v1769
      %v1771 = vpop.f32.mrf.mxu0
      %v1772 = vadd.f32 %v1545, %v1771
      %1773 = vmatprep.mubr.f32.mxu0 0.0
      %v1774 = vand.u32 %v662, 4294901760
      %1775 = vmatmul.mubr.f32.gmra.mxu0 %v1774
      %v1776 = vpop.f32.mrf.mxu0
      %v1777 = vadd.f32 %v1552, %v1776
      %v1778 = vpop.f32.mrf.mxu0
      %v1779 = vadd.f32 %v1554, %v1778
      %1780 = vmatprep.mubr.f32.mxu0 0.0
      %v1781 = vand.u32 %v665, 4294901760
      %1782 = vmatmul.mubr.f32.gmra.mxu0 %v1781
      %v1783 = vpop.f32.mrf.mxu0
      %v1784 = vadd.f32 %v1561, %v1783
      %v1785 = vpop.f32.mrf.mxu0
      %v1786 = vadd.f32 %v1563, %v1785
      %1787 = vmatprep.mubr.f32.mxu0 0.0
      %v1788 = vand.u32 %v668, 4294901760
      %1789 = vmatmul.mubr.f32.gmra.mxu0 %v1788
      %v1790 = vpop.f32.mrf.mxu0
      %v1791 = vadd.f32 %v1570, %v1790
      %v1792 = vpop.f32.mrf.mxu0
      %v1793 = vadd.f32 %v1572, %v1792
      %1794 = vmatprep.mubr.f32.mxu0 0.0
      %v1795 = vand.u32 %v671, 4294901760
      %1796 = vmatmul.mubr.f32.gmra.mxu0 %v1795
      %v1797 = vpop.f32.mrf.mxu0
      %v1798 = vadd.f32 %v1579, %v1797
      %v1799 = vpop.f32.mrf.mxu0
      %v1800 = vadd.f32 %v1581, %v1799
      %1801 = vmatprep.mubr.f32.mxu0 0.0
      %v1802 = vand.u32 %v674, 4294901760
      %1803 = vmatmul.mubr.f32.gmra.mxu0 %v1802
      %v1804 = vpop.f32.mrf.mxu0
      %v1805 = vadd.f32 %v1588, %v1804
      %v1806 = vpop.f32.mrf.mxu0
      %v1807 = vadd.f32 %v1590, %v1806
      %1808 = vmatprep.mubr.f32.mxu0 0.0
      %v1809 = vand.u32 %v677, 4294901760
      %1810 = vmatmul.mubr.f32.gmra.mxu0 %v1809
      %v1811 = vpop.f32.mrf.mxu0
      %v1812 = vadd.f32 %v1597, %v1811
      %v1813 = vpop.f32.mrf.mxu0
      %v1814 = vadd.f32 %v1599, %v1813
      %1815 = vmatprep.mubr.f32.mxu0 0.0
      %v1816 = vand.u32 %v680, 4294901760
      %1817 = vmatmul.mubr.f32.gmra.mxu0 %v1816
      %v1818 = vpop.f32.mrf.mxu0
      %v1819 = vadd.f32 %v1606, %v1818
      %v1820 = vpop.f32.mrf.mxu0
      %v1821 = vadd.f32 %v1608, %v1820
      %1822 = vdwg.mxu0
      %1823 = vmatprep.subr.mxu0 0.0
      %1824 = vmatpush1.msra.mxu0 0.0
      %1825 = vmatprep.subr.mxu0 0.0
      %1826 = vmatpush1.msra.mxu0 0.0
      %1827 = vmatprep.subr.mxu0 0.0
      %1828 = vmatpush1.msra.mxu0 0.0
      %1829 = vmatprep.subr.mxu0 0.0
      %1830 = vmatpush1.msra.mxu0 0.0
      %1831 = vmatprep.subr.mxu0 0.0
      %1832 = vmatpush1.msra.mxu0 0.0
      %1833 = vmatprep.subr.mxu0 0.0
      %1834 = vmatpush1.msra.mxu0 0.0
      %1835 = vmatprep.subr.mxu0 0.0
      %1836 = vmatpush1.msra.mxu0 0.0
      %1837 = vmatprep.subr.mxu0 0.0
      %1838 = vmatpush1.msra.mxu0 0.0
      %1839 = vmatprep.subr.mxu0 0.0
      %1840 = vmatpush1.msra.mxu0 0.0
      %1841 = vmatprep.subr.mxu0 0.0
      %1842 = vmatpush1.msra.mxu0 0.0
      %v1843 = vand.u32 %v621, 4294901760
      %1844 = vmatprep.subr.mxu0 %v1843
      %v1845 = vand.u32 %v620, 4294901760
      %1846 = vmatpush1.msra.mxu0 %v1845
      %v1847 = vand.u32 %v619, 4294901760
      %1848 = vmatprep.subr.mxu0 %v1847
      %v1849 = vand.u32 %v618, 4294901760
      %1850 = vmatpush1.msra.mxu0 %v1849
      %v1851 = vand.u32 %v617, 4294901760
      %1852 = vmatprep.subr.mxu0 %v1851
      %v1853 = vand.u32 %v616, 4294901760
      %1854 = vmatpush1.msra.mxu0 %v1853
      %v1855 = vand.u32 %v615, 4294901760
      %1856 = vmatprep.subr.mxu0 %v1855
      %v1857 = vand.u32 %v614, 4294901760
      %1858 = vmatpush1.msra.mxu0 %v1857
      %v1859 = vand.u32 %v613, 4294901760
      %1860 = vmatprep.subr.mxu0 %v1859
      %v1861 = vand.u32 %v612, 4294901760
      %1862 = vmatpush1.msra.mxu0 %v1861
      %v1863 = vand.u32 %v611, 4294901760
      %1864 = vmatprep.subr.mxu0 %v1863
      %v1865 = vand.u32 %v610, 4294901760
      %1866 = vmatpush1.msra.mxu0 %v1865
      %1867 = vmatprep.subr.mxu0 0.0
      %1868 = vmatpush2.msra.mxu0 0.0
      %1869 = vmatprep.subr.mxu0 0.0
      %1870 = vmatpush2.msra.mxu0 0.0
      %1871 = vmatprep.subr.mxu0 0.0
      %1872 = vmatpush2.msra.mxu0 0.0
      %1873 = vmatprep.subr.mxu0 0.0
      %1874 = vmatpush2.msra.mxu0 0.0
      %1875 = vmatprep.subr.mxu0 0.0
      %1876 = vmatpush2.msra.mxu0 0.0
      %1877 = vmatprep.subr.mxu0 0.0
      %1878 = vmatpush2.msra.mxu0 0.0
      %1879 = vmatprep.subr.mxu0 0.0
      %1880 = vmatpush2.msra.mxu0 0.0
      %1881 = vmatprep.subr.mxu0 0.0
      %1882 = vmatpush2.msra.mxu0 0.0
      %1883 = vmatprep.subr.mxu0 0.0
      %1884 = vmatpush2.msra.mxu0 0.0
      %1885 = vmatprep.subr.mxu0 0.0
      %1886 = vmatpush2.msra.mxu0 0.0
      %1887 = vmatprep.subr.mxu0 0.0
      %1888 = vmatpush2.msra.mxu0 0.0
      %1889 = vmatprep.subr.mxu0 0.0
      %1890 = vmatpush2.msra.mxu0 0.0
      %1891 = vmatprep.subr.mxu0 0.0
      %1892 = vmatpush2.msra.mxu0 0.0
      %1893 = vmatprep.subr.mxu0 0.0
      %1894 = vmatpush2.msra.mxu0 0.0
      %1895 = vmatprep.subr.mxu0 0.0
      %1896 = vmatpush2.msra.mxu0 0.0
      %1897 = vmatprep.subr.mxu0 0.0
      %1898 = vmatpush2.msra.mxu0 0.0
      %1899 = vmatprep.mubr.f32.mxu0 0.0
      %v1900 = vand.u32 %v635, 4294901760
      %1901 = vmatmul.mubr.f32.gmra.mxu0 %v1900
      %v1902 = vpop.f32.mrf.mxu0
      %v1903 = vadd.f32 %v1714, %v1902
      %v1904 = vpop.f32.mrf.mxu0
      %v1905 = vadd.f32 %v1716, %v1904
      %1906 = vmatprep.mubr.f32.mxu0 0.0
      %v1907 = vand.u32 %v638, 4294901760
      %1908 = vmatmul.mubr.f32.gmra.mxu0 %v1907
      %v1909 = vpop.f32.mrf.mxu0
      %v1910 = vadd.f32 %v1721, %v1909
      %v1911 = vpop.f32.mrf.mxu0
      %v1912 = vadd.f32 %v1723, %v1911
      %1913 = vmatprep.mubr.f32.mxu0 0.0
      %v1914 = vand.u32 %v641, 4294901760
      %1915 = vmatmul.mubr.f32.gmra.mxu0 %v1914
      %v1916 = vpop.f32.mrf.mxu0
      %v1917 = vadd.f32 %v1728, %v1916
      %v1918 = vpop.f32.mrf.mxu0
      %v1919 = vadd.f32 %v1730, %v1918
      %1920 = vmatprep.mubr.f32.mxu0 0.0
      %v1921 = vand.u32 %v644, 4294901760
      %1922 = vmatmul.mubr.f32.gmra.mxu0 %v1921
      %v1923 = vpop.f32.mrf.mxu0
      %v1924 = vadd.f32 %v1735, %v1923
      %v1925 = vpop.f32.mrf.mxu0
      %v1926 = vadd.f32 %v1737, %v1925
      %1927 = vmatprep.mubr.f32.mxu0 0.0
      %v1928 = vand.u32 %v647, 4294901760
      %1929 = vmatmul.mubr.f32.gmra.mxu0 %v1928
      %v1930 = vpop.f32.mrf.mxu0
      %v1931 = vadd.f32 %v1742, %v1930
      %v1932 = vpop.f32.mrf.mxu0
      %v1933 = vadd.f32 %v1744, %v1932
      %1934 = vmatprep.mubr.f32.mxu0 0.0
      %v1935 = vand.u32 %v650, 4294901760
      %1936 = vmatmul.mubr.f32.gmra.mxu0 %v1935
      %v1937 = vpop.f32.mrf.mxu0
      %v1938 = vadd.f32 %v1749, %v1937
      %v1939 = vpop.f32.mrf.mxu0
      %v1940 = vadd.f32 %v1751, %v1939
      %1941 = vmatprep.mubr.f32.mxu0 0.0
      %v1942 = vand.u32 %v653, 4294901760
      %1943 = vmatmul.mubr.f32.gmra.mxu0 %v1942
      %v1944 = vpop.f32.mrf.mxu0
      %v1945 = vadd.f32 %v1756, %v1944
      %v1946 = vpop.f32.mrf.mxu0
      %v1947 = vadd.f32 %v1758, %v1946
      %1948 = vmatprep.mubr.f32.mxu0 0.0
      %v1949 = vand.u32 %v656, 4294901760
      %1950 = vmatmul.mubr.f32.gmra.mxu0 %v1949
      %v1951 = vpop.f32.mrf.mxu0
      %v1952 = vadd.f32 %v1763, %v1951
      %v1953 = vpop.f32.mrf.mxu0
      %v1954 = vadd.f32 %v1765, %v1953
      %1955 = vmatprep.mubr.f32.mxu0 0.0
      %v1956 = vand.u32 %v659, 4294901760
      %1957 = vmatmul.mubr.f32.gmra.mxu0 %v1956
      %v1958 = vpop.f32.mrf.mxu0
      %v1959 = vadd.f32 %v1770, %v1958
      %v1960 = vpop.f32.mrf.mxu0
      %v1961 = vadd.f32 %v1772, %v1960
      %1962 = vmatprep.mubr.f32.mxu0 0.0
      %v1963 = vand.u32 %v662, 4294901760
      %1964 = vmatmul.mubr.f32.gmra.mxu0 %v1963
      %v1965 = vpop.f32.mrf.mxu0
      %v1966 = vadd.f32 %v1777, %v1965
      %v1967 = vpop.f32.mrf.mxu0
      %v1968 = vadd.f32 %v1779, %v1967
      %1969 = vmatprep.mubr.f32.mxu0 0.0
      %v1970 = vand.u32 %v665, 4294901760
      %1971 = vmatmul.mubr.f32.gmra.mxu0 %v1970
      %v1972 = vpop.f32.mrf.mxu0
      %v1973 = vadd.f32 %v1784, %v1972
      %v1974 = vpop.f32.mrf.mxu0
      %v1975 = vadd.f32 %v1786, %v1974
      %1976 = vmatprep.mubr.f32.mxu0 0.0
      %v1977 = vand.u32 %v668, 4294901760
      %1978 = vmatmul.mubr.f32.gmra.mxu0 %v1977
      %v1979 = vpop.f32.mrf.mxu0
      %v1980 = vadd.f32 %v1791, %v1979
      %v1981 = vpop.f32.mrf.mxu0
      %v1982 = vadd.f32 %v1793, %v1981
      %1983 = vmatprep.mubr.f32.mxu0 0.0
      %v1984 = vand.u32 %v671, 4294901760
      %1985 = vmatmul.mubr.f32.gmra.mxu0 %v1984
      %v1986 = vpop.f32.mrf.mxu0
      %v1987 = vadd.f32 %v1798, %v1986
      %v1988 = vpop.f32.mrf.mxu0
      %v1989 = vadd.f32 %v1800, %v1988
      %1990 = vmatprep.mubr.f32.mxu0 0.0
      %v1991 = vand.u32 %v674, 4294901760
      %1992 = vmatmul.mubr.f32.gmra.mxu0 %v1991
      %v1993 = vpop.f32.mrf.mxu0
      %v1994 = vadd.f32 %v1805, %v1993
      %v1995 = vpop.f32.mrf.mxu0
      %v1996 = vadd.f32 %v1807, %v1995
      %1997 = vmatprep.mubr.f32.mxu0 0.0
      %v1998 = vand.u32 %v677, 4294901760
      %1999 = vmatmul.mubr.f32.gmra.mxu0 %v1998
      %v2000 = vpop.f32.mrf.mxu0
      %v2001 = vadd.f32 %v1812, %v2000
      %v2002 = vpop.f32.mrf.mxu0
      %v2003 = vadd.f32 %v1814, %v2002
      %2004 = vmatprep.mubr.f32.mxu0 0.0
      %v2005 = vand.u32 %v680, 4294901760
      %2006 = vmatmul.mubr.f32.gmra.mxu0 %v2005
      %v2007 = vpop.f32.mrf.mxu0
      %v2008 = vadd.f32 %v1819, %v2007
      %v2009 = vpop.f32.mrf.mxu0
      %v2010 = vadd.f32 %v1821, %v2009
      %2011 = vdwg.mxu0
      %v2012 = vmax.f32 %v1903, 0.0
      %v2013 = vmax.f32 %v1910, 0.0
      %v2014 = vmax.f32 %v1917, 0.0
      %v2015 = vmax.f32 %v1924, 0.0
      %v2016 = vmax.f32 %v1931, 0.0
      %v2017 = vmax.f32 %v1938, 0.0
      %v2018 = vmax.f32 %v1945, 0.0
      %v2019 = vmax.f32 %v1952, 0.0
      %v2020 = vmax.f32 %v1959, 0.0
      %v2021 = vmax.f32 %v1966, 0.0
      %v2022 = vmax.f32 %v1973, 0.0
      %v2023 = vmax.f32 %v1980, 0.0
      %v2024 = vmax.f32 %v1987, 0.0
      %v2025 = vmax.f32 %v1994, 0.0
      %v2026 = vmax.f32 %v2001, 0.0
      %v2027 = vmax.f32 %v2008, 0.0
      %v2028 = vmax.f32 %v1905, 0.0
      %v2029 = vmax.f32 %v1912, 0.0
      %v2030 = vmax.f32 %v1919, 0.0
      %v2031 = vmax.f32 %v1926, 0.0
      %v2032 = vmax.f32 %v1933, 0.0
      %v2033 = vmax.f32 %v1940, 0.0
      %v2034 = vmax.f32 %v1947, 0.0
      %v2035 = vmax.f32 %v1954, 0.0
      %v2036 = vmax.f32 %v1961, 0.0
      %v2037 = vmax.f32 %v1968, 0.0
      %v2038 = vmax.f32 %v1975, 0.0
      %v2039 = vmax.f32 %v1982, 0.0
      %v2040 = vmax.f32 %v1989, 0.0
      %v2041 = vmax.f32 %v1996, 0.0
      %v2042 = vmax.f32 %v2003, 0.0
      %v2043 = vmax.f32 %v2010, 0.0
      %v2044 = vmax.f32 %v1905, -5.0
      %v2045 = vmax.f32 %v1912, -5.0
      %v2046 = vmax.f32 %v1919, -5.0
      %v2047 = vmax.f32 %v1926, -5.0
      %v2048 = vmax.f32 %v1933, -5.0
      %v2049 = vmax.f32 %v1940, -5.0
      %v2050 = vmax.f32 %v1947, -5.0
      %v2051 = vmax.f32 %v1954, -5.0
      %v2052 = vmax.f32 %v1961, -5.0
      %v2053 = vmax.f32 %v1968, -5.0
      %v2054 = vmax.f32 %v1975, -5.0
      %v2055 = vmax.f32 %v1982, -5.0
      %v2056 = vmax.f32 %v1989, -5.0
      %v2057 = vmax.f32 %v1996, -5.0
      %v2058 = vmax.f32 %v2003, -5.0
      %v2059 = vmax.f32 %v2010, -5.0
      %v2060 = vmin.f32 %v2044, 5.0
      %v2061 = vmin.f32 %v2045, 5.0
      %v2062 = vmin.f32 %v2046, 5.0
      %v2063 = vmin.f32 %v2047, 5.0
      %v2064 = vmin.f32 %v2048, 5.0
      %v2065 = vmin.f32 %v2049, 5.0
      %v2066 = vmin.f32 %v2050, 5.0
      %v2067 = vmin.f32 %v2051, 5.0
      %v2068 = vmin.f32 %v2052, 5.0
      %v2069 = vmin.f32 %v2053, 5.0
      %v2070 = vmin.f32 %v2054, 5.0
      %v2071 = vmin.f32 %v2055, 5.0
      %v2072 = vmin.f32 %v2056, 5.0
      %v2073 = vmin.f32 %v2057, 5.0
      %v2074 = vmin.f32 %v2058, 5.0
      %v2075 = vmin.f32 %v2059, 5.0
      %v2076 = vld [vmem:[%s5] sm:$0xff]
      %v2077 = vld [vmem:[%s5 + $0x8] sm:$0xff]
      %v2078 = vld [vmem:[%s5 + $0x10] sm:$0xff]
      %v2079 = vld [vmem:[%s5 + $0x18] sm:$0xff]
      %v2080 = vld [vmem:[%s5 + $0x20] sm:$0xff]
      %v2081 = vld [vmem:[%s5 + $0x28] sm:$0xff]
      %v2082 = vld [vmem:[%s5 + $0x30] sm:$0xff]
      %v2083 = vld [vmem:[%s5 + $0x38] sm:$0xff]
      %v2084 = vld [vmem:[%s5 + $0x40] sm:$0xff]
      %v2085 = vld [vmem:[%s5 + $0x48] sm:$0xff]
      %v2086 = vld [vmem:[%s5 + $0x50] sm:$0xff]
      %v2087 = vld [vmem:[%s5 + $0x58] sm:$0xff]
      %v2088 = vld [vmem:[%s5 + $0x60] sm:$0xff]
      %v2089 = vld [vmem:[%s5 + $0x68] sm:$0xff]
      %v2090 = vld [vmem:[%s5 + $0x70] sm:$0xff]
      %v2091 = vld [vmem:[%s5 + $0x78] sm:$0xff]
      %v2092 = vld [vmem:[%s5 + $0x80] sm:$0xff]
      %v2093 = vld [vmem:[%s5 + $0x88] sm:$0xff]
      %v2094 = vld [vmem:[%s5 + $0x90] sm:$0xff]
      %v2095 = vld [vmem:[%s5 + $0x98] sm:$0xff]
      %v2096 = vld [vmem:[%s5 + $0xa0] sm:$0xff]
      %v2097 = vld [vmem:[%s5 + $0xa8] sm:$0xff]
      %v2098 = vld [vmem:[%s5 + $0xb0] sm:$0xff]
      %v2099 = vld [vmem:[%s5 + $0xb8] sm:$0xff]
      %v2100 = vld [vmem:[%s5 + $0xc0] sm:$0xff]
      %v2101 = vld [vmem:[%s5 + $0xc8] sm:$0xff]
      %v2102 = vld [vmem:[%s5 + $0xd0] sm:$0xff]
      %v2103 = vld [vmem:[%s5 + $0xd8] sm:$0xff]
      %v2104 = vld [vmem:[%s5 + $0xe0] sm:$0xff]
      %v2105 = vld [vmem:[%s5 + $0xe8] sm:$0xff]
      %v2106 = vld [vmem:[%s5 + $0xf0] sm:$0xff]
      %v2107 = vld [vmem:[%s5 + $0xf8] sm:$0xff]
      %v2108 = vld [vmem:[%s6] sm:$0x3]
      %v2110 = vlaneseq
      %v2111 = vshrl.u32 %v2110, 7
      %v2112 = vsub.s32 0, %v2111
      %v2113 = vrot.slane %v2108, %v2112
      %v2114 = vlaneseq
      %v2115 = vshrl.u32 %v2114, 7
      %v2116 = vsub.s32 1, %v2115
      %v2117 = vrot.slane %v2108, %v2116
      %v2120 = vand.u32 %v2107, 4294901760
      %2121 = vmatprep.subr.mxu0 %v2120
      %v2122 = vand.u32 %v2106, 4294901760
      %2123 = vmatpush1.msra.mxu0 %v2122
      %v2124 = vand.u32 %v2105, 4294901760
      %2125 = vmatprep.subr.mxu0 %v2124
      %v2126 = vand.u32 %v2104, 4294901760
      %2127 = vmatpush1.msra.mxu0 %v2126
      %v2128 = vand.u32 %v2103, 4294901760
      %2129 = vmatprep.subr.mxu0 %v2128
      %v2130 = vand.u32 %v2102, 4294901760
      %2131 = vmatpush1.msra.mxu0 %v2130
      %v2132 = vand.u32 %v2101, 4294901760
      %2133 = vmatprep.subr.mxu0 %v2132
      %v2134 = vand.u32 %v2100, 4294901760
      %2135 = vmatpush1.msra.mxu0 %v2134
      %v2136 = vand.u32 %v2099, 4294901760
      %2137 = vmatprep.subr.mxu0 %v2136
      %v2138 = vand.u32 %v2098, 4294901760
      %2139 = vmatpush1.msra.mxu0 %v2138
      %v2140 = vand.u32 %v2097, 4294901760
      %2141 = vmatprep.subr.mxu0 %v2140
      %v2142 = vand.u32 %v2096, 4294901760
      %2143 = vmatpush1.msra.mxu0 %v2142
      %v2144 = vand.u32 %v2095, 4294901760
      %2145 = vmatprep.subr.mxu0 %v2144
      %v2146 = vand.u32 %v2094, 4294901760
      %2147 = vmatpush1.msra.mxu0 %v2146
      %v2148 = vand.u32 %v2093, 4294901760
      %2149 = vmatprep.subr.mxu0 %v2148
      %v2150 = vand.u32 %v2092, 4294901760
      %2151 = vmatpush1.msra.mxu0 %v2150
      %v2152 = vand.u32 %v2091, 4294901760
      %2153 = vmatprep.subr.mxu0 %v2152
      %v2154 = vand.u32 %v2090, 4294901760
      %2155 = vmatpush1.msra.mxu0 %v2154
      %v2156 = vand.u32 %v2089, 4294901760
      %2157 = vmatprep.subr.mxu0 %v2156
      %v2158 = vand.u32 %v2088, 4294901760
      %2159 = vmatpush1.msra.mxu0 %v2158
      %v2160 = vand.u32 %v2087, 4294901760
      %2161 = vmatprep.subr.mxu0 %v2160
      %v2162 = vand.u32 %v2086, 4294901760
      %2163 = vmatpush1.msra.mxu0 %v2162
      %v2164 = vand.u32 %v2085, 4294901760
      %2165 = vmatprep.subr.mxu0 %v2164
      %v2166 = vand.u32 %v2084, 4294901760
      %2167 = vmatpush1.msra.mxu0 %v2166
      %v2168 = vand.u32 %v2083, 4294901760
      %2169 = vmatprep.subr.mxu0 %v2168
      %v2170 = vand.u32 %v2082, 4294901760
      %2171 = vmatpush1.msra.mxu0 %v2170
      %v2172 = vand.u32 %v2081, 4294901760
      %2173 = vmatprep.subr.mxu0 %v2172
      %v2174 = vand.u32 %v2080, 4294901760
      %2175 = vmatpush1.msra.mxu0 %v2174
      %v2176 = vand.u32 %v2079, 4294901760
      %2177 = vmatprep.subr.mxu0 %v2176
      %v2178 = vand.u32 %v2078, 4294901760
      %2179 = vmatpush1.msra.mxu0 %v2178
      %v2180 = vand.u32 %v2077, 4294901760
      %2181 = vmatprep.subr.mxu0 %v2180
      %v2182 = vand.u32 %v2076, 4294901760
      %2183 = vmatpush1.msra.mxu0 %v2182
      %2184 = vmatprep.subr.mxu0 0.0
      %2185 = vmatpush2.msra.mxu0 0.0
      %2186 = vmatprep.subr.mxu0 0.0
      %2187 = vmatpush2.msra.mxu0 0.0
      %2188 = vmatprep.subr.mxu0 0.0
      %2189 = vmatpush2.msra.mxu0 0.0
      %2190 = vmatprep.subr.mxu0 0.0
      %2191 = vmatpush2.msra.mxu0 0.0
      %2192 = vmatprep.subr.mxu0 0.0
      %2193 = vmatpush2.msra.mxu0 0.0
      %2194 = vmatprep.subr.mxu0 0.0
      %2195 = vmatpush2.msra.mxu0 0.0
      %2196 = vmatprep.subr.mxu0 0.0
      %2197 = vmatpush2.msra.mxu0 0.0
      %2198 = vmatprep.subr.mxu0 0.0
      %2199 = vmatpush2.msra.mxu0 0.0
      %2200 = vmatprep.subr.mxu0 0.0
      %2201 = vmatpush2.msra.mxu0 0.0
      %2202 = vmatprep.subr.mxu0 0.0
      %2203 = vmatpush2.msra.mxu0 0.0
      %2204 = vmatprep.subr.mxu0 0.0
      %2205 = vmatpush2.msra.mxu0 0.0
      %2206 = vmatprep.subr.mxu0 0.0
      %2207 = vmatpush2.msra.mxu0 0.0
      %2208 = vmatprep.subr.mxu0 0.0
      %2209 = vmatpush2.msra.mxu0 0.0
      %2210 = vmatprep.subr.mxu0 0.0
      %2211 = vmatpush2.msra.mxu0 0.0
      %2212 = vmatprep.subr.mxu0 0.0
      %2213 = vmatpush2.msra.mxu0 0.0
      %2214 = vmatprep.subr.mxu0 0.0
      %2215 = vmatpush2.msra.mxu0 0.0
      %2216 = vmatprep.mubr.f32.mxu0 0.0
      %v2217 = vand.u32 %v2012, 4294901760
      %v2218 = vsub.f32 %v2012, %v2217
      %v2219 = vand.u32 %v2218, 4294901760
      %v2220 = vsub.f32 %v2218, %v2219
      %v2221 = vand.u32 %v2220, 4294901760
      %2222 = vmatmul.mubr.f32.gmra.mxu0 %v2221
      %v2223 = vpop.f32.mrf.mxu0
      %v2224 = vadd.f32 %v2113, %v2223
      %v2225 = vpop.f32.mrf.mxu0
      %v2226 = vadd.f32 %v2117, %v2225
      %2227 = vmatprep.mubr.f32.mxu0 0.0
      %v2228 = vand.u32 %v2013, 4294901760
      %v2229 = vsub.f32 %v2013, %v2228
      %v2230 = vand.u32 %v2229, 4294901760
      %v2231 = vsub.f32 %v2229, %v2230
      %v2232 = vand.u32 %v2231, 4294901760
      %2233 = vmatmul.mubr.f32.gmra.mxu0 %v2232
      %v2234 = vpop.f32.mrf.mxu0
      %v2235 = vadd.f32 %v2113, %v2234
      %v2236 = vpop.f32.mrf.mxu0
      %v2237 = vadd.f32 %v2117, %v2236
      %2238 = vmatprep.mubr.f32.mxu0 0.0
      %v2239 = vand.u32 %v2014, 4294901760
      %v2240 = vsub.f32 %v2014, %v2239
      %v2241 = vand.u32 %v2240, 4294901760
      %v2242 = vsub.f32 %v2240, %v2241
      %v2243 = vand.u32 %v2242, 4294901760
      %2244 = vmatmul.mubr.f32.gmra.mxu0 %v2243
      %v2245 = vpop.f32.mrf.mxu0
      %v2246 = vadd.f32 %v2113, %v2245
      %v2247 = vpop.f32.mrf.mxu0
      %v2248 = vadd.f32 %v2117, %v2247
      %2249 = vmatprep.mubr.f32.mxu0 0.0
      %v2250 = vand.u32 %v2015, 4294901760
      %v2251 = vsub.f32 %v2015, %v2250
      %v2252 = vand.u32 %v2251, 4294901760
      %v2253 = vsub.f32 %v2251, %v2252
      %v2254 = vand.u32 %v2253, 4294901760
      %2255 = vmatmul.mubr.f32.gmra.mxu0 %v2254
      %v2256 = vpop.f32.mrf.mxu0
      %v2257 = vadd.f32 %v2113, %v2256
      %v2258 = vpop.f32.mrf.mxu0
      %v2259 = vadd.f32 %v2117, %v2258
      %2260 = vmatprep.mubr.f32.mxu0 0.0
      %v2261 = vand.u32 %v2016, 4294901760
      %v2262 = vsub.f32 %v2016, %v2261
      %v2263 = vand.u32 %v2262, 4294901760
      %v2264 = vsub.f32 %v2262, %v2263
      %v2265 = vand.u32 %v2264, 4294901760
      %2266 = vmatmul.mubr.f32.gmra.mxu0 %v2265
      %v2267 = vpop.f32.mrf.mxu0
      %v2268 = vadd.f32 %v2113, %v2267
      %v2269 = vpop.f32.mrf.mxu0
      %v2270 = vadd.f32 %v2117, %v2269
      %2271 = vmatprep.mubr.f32.mxu0 0.0
      %v2272 = vand.u32 %v2017, 4294901760
      %v2273 = vsub.f32 %v2017, %v2272
      %v2274 = vand.u32 %v2273, 4294901760
      %v2275 = vsub.f32 %v2273, %v2274
      %v2276 = vand.u32 %v2275, 4294901760
      %2277 = vmatmul.mubr.f32.gmra.mxu0 %v2276
      %v2278 = vpop.f32.mrf.mxu0
      %v2279 = vadd.f32 %v2113, %v2278
      %v2280 = vpop.f32.mrf.mxu0
      %v2281 = vadd.f32 %v2117, %v2280
      %2282 = vmatprep.mubr.f32.mxu0 0.0
      %v2283 = vand.u32 %v2018, 4294901760
      %v2284 = vsub.f32 %v2018, %v2283
      %v2285 = vand.u32 %v2284, 4294901760
      %v2286 = vsub.f32 %v2284, %v2285
      %v2287 = vand.u32 %v2286, 4294901760
      %2288 = vmatmul.mubr.f32.gmra.mxu0 %v2287
      %v2289 = vpop.f32.mrf.mxu0
      %v2290 = vadd.f32 %v2113, %v2289
      %v2291 = vpop.f32.mrf.mxu0
      %v2292 = vadd.f32 %v2117, %v2291
      %2293 = vmatprep.mubr.f32.mxu0 0.0
      %v2294 = vand.u32 %v2019, 4294901760
      %v2295 = vsub.f32 %v2019, %v2294
      %v2296 = vand.u32 %v2295, 4294901760
      %v2297 = vsub.f32 %v2295, %v2296
      %v2298 = vand.u32 %v2297, 4294901760
      %2299 = vmatmul.mubr.f32.gmra.mxu0 %v2298
      %v2300 = vpop.f32.mrf.mxu0
      %v2301 = vadd.f32 %v2113, %v2300
      %v2302 = vpop.f32.mrf.mxu0
      %v2303 = vadd.f32 %v2117, %v2302
      %2304 = vmatprep.mubr.f32.mxu0 0.0
      %v2305 = vand.u32 %v2020, 4294901760
      %v2306 = vsub.f32 %v2020, %v2305
      %v2307 = vand.u32 %v2306, 4294901760
      %v2308 = vsub.f32 %v2306, %v2307
      %v2309 = vand.u32 %v2308, 4294901760
      %2310 = vmatmul.mubr.f32.gmra.mxu0 %v2309
      %v2311 = vpop.f32.mrf.mxu0
      %v2312 = vadd.f32 %v2113, %v2311
      %v2313 = vpop.f32.mrf.mxu0
      %v2314 = vadd.f32 %v2117, %v2313
      %2315 = vmatprep.mubr.f32.mxu0 0.0
      %v2316 = vand.u32 %v2021, 4294901760
      %v2317 = vsub.f32 %v2021, %v2316
      %v2318 = vand.u32 %v2317, 4294901760
      %v2319 = vsub.f32 %v2317, %v2318
      %v2320 = vand.u32 %v2319, 4294901760
      %2321 = vmatmul.mubr.f32.gmra.mxu0 %v2320
      %v2322 = vpop.f32.mrf.mxu0
      %v2323 = vadd.f32 %v2113, %v2322
      %v2324 = vpop.f32.mrf.mxu0
      %v2325 = vadd.f32 %v2117, %v2324
      %2326 = vmatprep.mubr.f32.mxu0 0.0
      %v2327 = vand.u32 %v2022, 4294901760
      %v2328 = vsub.f32 %v2022, %v2327
      %v2329 = vand.u32 %v2328, 4294901760
      %v2330 = vsub.f32 %v2328, %v2329
      %v2331 = vand.u32 %v2330, 4294901760
      %2332 = vmatmul.mubr.f32.gmra.mxu0 %v2331
      %v2333 = vpop.f32.mrf.mxu0
      %v2334 = vadd.f32 %v2113, %v2333
      %v2335 = vpop.f32.mrf.mxu0
      %v2336 = vadd.f32 %v2117, %v2335
      %2337 = vmatprep.mubr.f32.mxu0 0.0
      %v2338 = vand.u32 %v2023, 4294901760
      %v2339 = vsub.f32 %v2023, %v2338
      %v2340 = vand.u32 %v2339, 4294901760
      %v2341 = vsub.f32 %v2339, %v2340
      %v2342 = vand.u32 %v2341, 4294901760
      %2343 = vmatmul.mubr.f32.gmra.mxu0 %v2342
      %v2344 = vpop.f32.mrf.mxu0
      %v2345 = vadd.f32 %v2113, %v2344
      %v2346 = vpop.f32.mrf.mxu0
      %v2347 = vadd.f32 %v2117, %v2346
      %2348 = vmatprep.mubr.f32.mxu0 0.0
      %v2349 = vand.u32 %v2024, 4294901760
      %v2350 = vsub.f32 %v2024, %v2349
      %v2351 = vand.u32 %v2350, 4294901760
      %v2352 = vsub.f32 %v2350, %v2351
      %v2353 = vand.u32 %v2352, 4294901760
      %2354 = vmatmul.mubr.f32.gmra.mxu0 %v2353
      %v2355 = vpop.f32.mrf.mxu0
      %v2356 = vadd.f32 %v2113, %v2355
      %v2357 = vpop.f32.mrf.mxu0
      %v2358 = vadd.f32 %v2117, %v2357
      %2359 = vmatprep.mubr.f32.mxu0 0.0
      %v2360 = vand.u32 %v2025, 4294901760
      %v2361 = vsub.f32 %v2025, %v2360
      %v2362 = vand.u32 %v2361, 4294901760
      %v2363 = vsub.f32 %v2361, %v2362
      %v2364 = vand.u32 %v2363, 4294901760
      %2365 = vmatmul.mubr.f32.gmra.mxu0 %v2364
      %v2366 = vpop.f32.mrf.mxu0
      %v2367 = vadd.f32 %v2113, %v2366
      %v2368 = vpop.f32.mrf.mxu0
      %v2369 = vadd.f32 %v2117, %v2368
      %2370 = vmatprep.mubr.f32.mxu0 0.0
      %v2371 = vand.u32 %v2026, 4294901760
      %v2372 = vsub.f32 %v2026, %v2371
      %v2373 = vand.u32 %v2372, 4294901760
      %v2374 = vsub.f32 %v2372, %v2373
      %v2375 = vand.u32 %v2374, 4294901760
      %2376 = vmatmul.mubr.f32.gmra.mxu0 %v2375
      %v2377 = vpop.f32.mrf.mxu0
      %v2378 = vadd.f32 %v2113, %v2377
      %v2379 = vpop.f32.mrf.mxu0
      %v2380 = vadd.f32 %v2117, %v2379
      %2381 = vmatprep.mubr.f32.mxu0 0.0
      %v2382 = vand.u32 %v2027, 4294901760
      %v2383 = vsub.f32 %v2027, %v2382
      %v2384 = vand.u32 %v2383, 4294901760
      %v2385 = vsub.f32 %v2383, %v2384
      %v2386 = vand.u32 %v2385, 4294901760
      %2387 = vmatmul.mubr.f32.gmra.mxu0 %v2386
      %v2388 = vpop.f32.mrf.mxu0
      %v2389 = vadd.f32 %v2113, %v2388
      %v2390 = vpop.f32.mrf.mxu0
      %v2391 = vadd.f32 %v2117, %v2390
      %2392 = vdwg.mxu0
      %v2393 = vand.u32 %v2107, 4294901760
      %v2394 = vsub.f32 %v2107, %v2393
      %v2395 = vand.u32 %v2394, 4294901760
      %v2396 = vsub.f32 %v2394, %v2395
      %v2397 = vand.u32 %v2396, 4294901760
      %2398 = vmatprep.subr.mxu0 %v2397
      %v2399 = vand.u32 %v2106, 4294901760
      %v2400 = vsub.f32 %v2106, %v2399
      %v2401 = vand.u32 %v2400, 4294901760
      %v2402 = vsub.f32 %v2400, %v2401
      %v2403 = vand.u32 %v2402, 4294901760
      %2404 = vmatpush1.msra.mxu0 %v2403
      %v2405 = vand.u32 %v2105, 4294901760
      %v2406 = vsub.f32 %v2105, %v2405
      %v2407 = vand.u32 %v2406, 4294901760
      %v2408 = vsub.f32 %v2406, %v2407
      %v2409 = vand.u32 %v2408, 4294901760
      %2410 = vmatprep.subr.mxu0 %v2409
      %v2411 = vand.u32 %v2104, 4294901760
      %v2412 = vsub.f32 %v2104, %v2411
      %v2413 = vand.u32 %v2412, 4294901760
      %v2414 = vsub.f32 %v2412, %v2413
      %v2415 = vand.u32 %v2414, 4294901760
      %2416 = vmatpush1.msra.mxu0 %v2415
      %v2417 = vand.u32 %v2103, 4294901760
      %v2418 = vsub.f32 %v2103, %v2417
      %v2419 = vand.u32 %v2418, 4294901760
      %v2420 = vsub.f32 %v2418, %v2419
      %v2421 = vand.u32 %v2420, 4294901760
      %2422 = vmatprep.subr.mxu0 %v2421
      %v2423 = vand.u32 %v2102, 4294901760
      %v2424 = vsub.f32 %v2102, %v2423
      %v2425 = vand.u32 %v2424, 4294901760
      %v2426 = vsub.f32 %v2424, %v2425
      %v2427 = vand.u32 %v2426, 4294901760
      %2428 = vmatpush1.msra.mxu0 %v2427
      %v2429 = vand.u32 %v2101, 4294901760
      %v2430 = vsub.f32 %v2101, %v2429
      %v2431 = vand.u32 %v2430, 4294901760
      %v2432 = vsub.f32 %v2430, %v2431
      %v2433 = vand.u32 %v2432, 4294901760
      %2434 = vmatprep.subr.mxu0 %v2433
      %v2435 = vand.u32 %v2100, 4294901760
      %v2436 = vsub.f32 %v2100, %v2435
      %v2437 = vand.u32 %v2436, 4294901760
      %v2438 = vsub.f32 %v2436, %v2437
      %v2439 = vand.u32 %v2438, 4294901760
      %2440 = vmatpush1.msra.mxu0 %v2439
      %v2441 = vand.u32 %v2099, 4294901760
      %v2442 = vsub.f32 %v2099, %v2441
      %v2443 = vand.u32 %v2442, 4294901760
      %v2444 = vsub.f32 %v2442, %v2443
      %v2445 = vand.u32 %v2444, 4294901760
      %2446 = vmatprep.subr.mxu0 %v2445
      %v2447 = vand.u32 %v2098, 4294901760
      %v2448 = vsub.f32 %v2098, %v2447
      %v2449 = vand.u32 %v2448, 4294901760
      %v2450 = vsub.f32 %v2448, %v2449
      %v2451 = vand.u32 %v2450, 4294901760
      %2452 = vmatpush1.msra.mxu0 %v2451
      %v2453 = vand.u32 %v2097, 4294901760
      %v2454 = vsub.f32 %v2097, %v2453
      %v2455 = vand.u32 %v2454, 4294901760
      %v2456 = vsub.f32 %v2454, %v2455
      %v2457 = vand.u32 %v2456, 4294901760
      %2458 = vmatprep.subr.mxu0 %v2457
      %v2459 = vand.u32 %v2096, 4294901760
      %v2460 = vsub.f32 %v2096, %v2459
      %v2461 = vand.u32 %v2460, 4294901760
      %v2462 = vsub.f32 %v2460, %v2461
      %v2463 = vand.u32 %v2462, 4294901760
      %2464 = vmatpush1.msra.mxu0 %v2463
      %v2465 = vand.u32 %v2095, 4294901760
      %v2466 = vsub.f32 %v2095, %v2465
      %v2467 = vand.u32 %v2466, 4294901760
      %v2468 = vsub.f32 %v2466, %v2467
      %v2469 = vand.u32 %v2468, 4294901760
      %2470 = vmatprep.subr.mxu0 %v2469
      %v2471 = vand.u32 %v2094, 4294901760
      %v2472 = vsub.f32 %v2094, %v2471
      %v2473 = vand.u32 %v2472, 4294901760
      %v2474 = vsub.f32 %v2472, %v2473
      %v2475 = vand.u32 %v2474, 4294901760
      %2476 = vmatpush1.msra.mxu0 %v2475
      %v2477 = vand.u32 %v2093, 4294901760
      %v2478 = vsub.f32 %v2093, %v2477
      %v2479 = vand.u32 %v2478, 4294901760
      %v2480 = vsub.f32 %v2478, %v2479
      %v2481 = vand.u32 %v2480, 4294901760
      %2482 = vmatprep.subr.mxu0 %v2481
      %v2483 = vand.u32 %v2092, 4294901760
      %v2484 = vsub.f32 %v2092, %v2483
      %v2485 = vand.u32 %v2484, 4294901760
      %v2486 = vsub.f32 %v2484, %v2485
      %v2487 = vand.u32 %v2486, 4294901760
      %2488 = vmatpush1.msra.mxu0 %v2487
      %v2489 = vand.u32 %v2091, 4294901760
      %v2490 = vsub.f32 %v2091, %v2489
      %v2491 = vand.u32 %v2490, 4294901760
      %v2492 = vsub.f32 %v2490, %v2491
      %v2493 = vand.u32 %v2492, 4294901760
      %2494 = vmatprep.subr.mxu0 %v2493
      %v2495 = vand.u32 %v2090, 4294901760
      %v2496 = vsub.f32 %v2090, %v2495
      %v2497 = vand.u32 %v2496, 4294901760
      %v2498 = vsub.f32 %v2496, %v2497
      %v2499 = vand.u32 %v2498, 4294901760
      %2500 = vmatpush1.msra.mxu0 %v2499
      %v2501 = vand.u32 %v2089, 4294901760
      %v2502 = vsub.f32 %v2089, %v2501
      %v2503 = vand.u32 %v2502, 4294901760
      %v2504 = vsub.f32 %v2502, %v2503
      %v2505 = vand.u32 %v2504, 4294901760
      %2506 = vmatprep.subr.mxu0 %v2505
      %v2507 = vand.u32 %v2088, 4294901760
      %v2508 = vsub.f32 %v2088, %v2507
      %v2509 = vand.u32 %v2508, 4294901760
      %v2510 = vsub.f32 %v2508, %v2509
      %v2511 = vand.u32 %v2510, 4294901760
      %2512 = vmatpush1.msra.mxu0 %v2511
      %v2513 = vand.u32 %v2087, 4294901760
      %v2514 = vsub.f32 %v2087, %v2513
      %v2515 = vand.u32 %v2514, 4294901760
      %v2516 = vsub.f32 %v2514, %v2515
      %v2517 = vand.u32 %v2516, 4294901760
      %2518 = vmatprep.subr.mxu0 %v2517
      %v2519 = vand.u32 %v2086, 4294901760
      %v2520 = vsub.f32 %v2086, %v2519
      %v2521 = vand.u32 %v2520, 4294901760
      %v2522 = vsub.f32 %v2520, %v2521
      %v2523 = vand.u32 %v2522, 4294901760
      %2524 = vmatpush1.msra.mxu0 %v2523
      %v2525 = vand.u32 %v2085, 4294901760
      %v2526 = vsub.f32 %v2085, %v2525
      %v2527 = vand.u32 %v2526, 4294901760
      %v2528 = vsub.f32 %v2526, %v2527
      %v2529 = vand.u32 %v2528, 4294901760
      %2530 = vmatprep.subr.mxu0 %v2529
      %v2531 = vand.u32 %v2084, 4294901760
      %v2532 = vsub.f32 %v2084, %v2531
      %v2533 = vand.u32 %v2532, 4294901760
      %v2534 = vsub.f32 %v2532, %v2533
      %v2535 = vand.u32 %v2534, 4294901760
      %2536 = vmatpush1.msra.mxu0 %v2535
      %v2537 = vand.u32 %v2083, 4294901760
      %v2538 = vsub.f32 %v2083, %v2537
      %v2539 = vand.u32 %v2538, 4294901760
      %v2540 = vsub.f32 %v2538, %v2539
      %v2541 = vand.u32 %v2540, 4294901760
      %2542 = vmatprep.subr.mxu0 %v2541
      %v2543 = vand.u32 %v2082, 4294901760
      %v2544 = vsub.f32 %v2082, %v2543
      %v2545 = vand.u32 %v2544, 4294901760
      %v2546 = vsub.f32 %v2544, %v2545
      %v2547 = vand.u32 %v2546, 4294901760
      %2548 = vmatpush1.msra.mxu0 %v2547
      %v2549 = vand.u32 %v2081, 4294901760
      %v2550 = vsub.f32 %v2081, %v2549
      %v2551 = vand.u32 %v2550, 4294901760
      %v2552 = vsub.f32 %v2550, %v2551
      %v2553 = vand.u32 %v2552, 4294901760
      %2554 = vmatprep.subr.mxu0 %v2553
      %v2555 = vand.u32 %v2080, 4294901760
      %v2556 = vsub.f32 %v2080, %v2555
      %v2557 = vand.u32 %v2556, 4294901760
      %v2558 = vsub.f32 %v2556, %v2557
      %v2559 = vand.u32 %v2558, 4294901760
      %2560 = vmatpush1.msra.mxu0 %v2559
      %v2561 = vand.u32 %v2079, 4294901760
      %v2562 = vsub.f32 %v2079, %v2561
      %v2563 = vand.u32 %v2562, 4294901760
      %v2564 = vsub.f32 %v2562, %v2563
      %v2565 = vand.u32 %v2564, 4294901760
      %2566 = vmatprep.subr.mxu0 %v2565
      %v2567 = vand.u32 %v2078, 4294901760
      %v2568 = vsub.f32 %v2078, %v2567
      %v2569 = vand.u32 %v2568, 4294901760
      %v2570 = vsub.f32 %v2568, %v2569
      %v2571 = vand.u32 %v2570, 4294901760
      %2572 = vmatpush1.msra.mxu0 %v2571
      %v2573 = vand.u32 %v2077, 4294901760
      %v2574 = vsub.f32 %v2077, %v2573
      %v2575 = vand.u32 %v2574, 4294901760
      %v2576 = vsub.f32 %v2574, %v2575
      %v2577 = vand.u32 %v2576, 4294901760
      %2578 = vmatprep.subr.mxu0 %v2577
      %v2579 = vand.u32 %v2076, 4294901760
      %v2580 = vsub.f32 %v2076, %v2579
      %v2581 = vand.u32 %v2580, 4294901760
      %v2582 = vsub.f32 %v2580, %v2581
      %v2583 = vand.u32 %v2582, 4294901760
      %2584 = vmatpush1.msra.mxu0 %v2583
      %2585 = vmatprep.subr.mxu0 0.0
      %2586 = vmatpush2.msra.mxu0 0.0
      %2587 = vmatprep.subr.mxu0 0.0
      %2588 = vmatpush2.msra.mxu0 0.0
      %2589 = vmatprep.subr.mxu0 0.0
      %2590 = vmatpush2.msra.mxu0 0.0
      %2591 = vmatprep.subr.mxu0 0.0
      %2592 = vmatpush2.msra.mxu0 0.0
      %2593 = vmatprep.subr.mxu0 0.0
      %2594 = vmatpush2.msra.mxu0 0.0
      %2595 = vmatprep.subr.mxu0 0.0
      %2596 = vmatpush2.msra.mxu0 0.0
      %2597 = vmatprep.subr.mxu0 0.0
      %2598 = vmatpush2.msra.mxu0 0.0
      %2599 = vmatprep.subr.mxu0 0.0
      %2600 = vmatpush2.msra.mxu0 0.0
      %2601 = vmatprep.subr.mxu0 0.0
      %2602 = vmatpush2.msra.mxu0 0.0
      %2603 = vmatprep.subr.mxu0 0.0
      %2604 = vmatpush2.msra.mxu0 0.0
      %2605 = vmatprep.subr.mxu0 0.0
      %2606 = vmatpush2.msra.mxu0 0.0
      %2607 = vmatprep.subr.mxu0 0.0
      %2608 = vmatpush2.msra.mxu0 0.0
      %2609 = vmatprep.subr.mxu0 0.0
      %2610 = vmatpush2.msra.mxu0 0.0
      %2611 = vmatprep.subr.mxu0 0.0
      %2612 = vmatpush2.msra.mxu0 0.0
      %2613 = vmatprep.subr.mxu0 0.0
      %2614 = vmatpush2.msra.mxu0 0.0
      %2615 = vmatprep.subr.mxu0 0.0
      %2616 = vmatpush2.msra.mxu0 0.0
      %2617 = vmatprep.mubr.f32.mxu0 0.0
      %v2618 = vand.u32 %v2012, 4294901760
      %2619 = vmatmul.mubr.f32.gmra.mxu0 %v2618
      %v2620 = vpop.f32.mrf.mxu0
      %v2621 = vadd.f32 %v2224, %v2620
      %v2622 = vpop.f32.mrf.mxu0
      %v2623 = vadd.f32 %v2226, %v2622
      %2624 = vmatprep.mubr.f32.mxu0 0.0
      %v2625 = vand.u32 %v2013, 4294901760
      %2626 = vmatmul.mubr.f32.gmra.mxu0 %v2625
      %v2627 = vpop.f32.mrf.mxu0
      %v2628 = vadd.f32 %v2235, %v2627
      %v2629 = vpop.f32.mrf.mxu0
      %v2630 = vadd.f32 %v2237, %v2629
      %2631 = vmatprep.mubr.f32.mxu0 0.0
      %v2632 = vand.u32 %v2014, 4294901760
      %2633 = vmatmul.mubr.f32.gmra.mxu0 %v2632
      %v2634 = vpop.f32.mrf.mxu0
      %v2635 = vadd.f32 %v2246, %v2634
      %v2636 = vpop.f32.mrf.mxu0
      %v2637 = vadd.f32 %v2248, %v2636
      %2638 = vmatprep.mubr.f32.mxu0 0.0
      %v2639 = vand.u32 %v2015, 4294901760
      %2640 = vmatmul.mubr.f32.gmra.mxu0 %v2639
      %v2641 = vpop.f32.mrf.mxu0
      %v2642 = vadd.f32 %v2257, %v2641
      %v2643 = vpop.f32.mrf.mxu0
      %v2644 = vadd.f32 %v2259, %v2643
      %2645 = vmatprep.mubr.f32.mxu0 0.0
      %v2646 = vand.u32 %v2016, 4294901760
      %2647 = vmatmul.mubr.f32.gmra.mxu0 %v2646
      %v2648 = vpop.f32.mrf.mxu0
      %v2649 = vadd.f32 %v2268, %v2648
      %v2650 = vpop.f32.mrf.mxu0
      %v2651 = vadd.f32 %v2270, %v2650
      %2652 = vmatprep.mubr.f32.mxu0 0.0
      %v2653 = vand.u32 %v2017, 4294901760
      %2654 = vmatmul.mubr.f32.gmra.mxu0 %v2653
      %v2655 = vpop.f32.mrf.mxu0
      %v2656 = vadd.f32 %v2279, %v2655
      %v2657 = vpop.f32.mrf.mxu0
      %v2658 = vadd.f32 %v2281, %v2657
      %2659 = vmatprep.mubr.f32.mxu0 0.0
      %v2660 = vand.u32 %v2018, 4294901760
      %2661 = vmatmul.mubr.f32.gmra.mxu0 %v2660
      %v2662 = vpop.f32.mrf.mxu0
      %v2663 = vadd.f32 %v2290, %v2662
      %v2664 = vpop.f32.mrf.mxu0
      %v2665 = vadd.f32 %v2292, %v2664
      %2666 = vmatprep.mubr.f32.mxu0 0.0
      %v2667 = vand.u32 %v2019, 4294901760
      %2668 = vmatmul.mubr.f32.gmra.mxu0 %v2667
      %v2669 = vpop.f32.mrf.mxu0
      %v2670 = vadd.f32 %v2301, %v2669
      %v2671 = vpop.f32.mrf.mxu0
      %v2672 = vadd.f32 %v2303, %v2671
      %2673 = vmatprep.mubr.f32.mxu0 0.0
      %v2674 = vand.u32 %v2020, 4294901760
      %2675 = vmatmul.mubr.f32.gmra.mxu0 %v2674
      %v2676 = vpop.f32.mrf.mxu0
      %v2677 = vadd.f32 %v2312, %v2676
      %v2678 = vpop.f32.mrf.mxu0
      %v2679 = vadd.f32 %v2314, %v2678
      %2680 = vmatprep.mubr.f32.mxu0 0.0
      %v2681 = vand.u32 %v2021, 4294901760
      %2682 = vmatmul.mubr.f32.gmra.mxu0 %v2681
      %v2683 = vpop.f32.mrf.mxu0
      %v2684 = vadd.f32 %v2323, %v2683
      %v2685 = vpop.f32.mrf.mxu0
      %v2686 = vadd.f32 %v2325, %v2685
      %2687 = vmatprep.mubr.f32.mxu0 0.0
      %v2688 = vand.u32 %v2022, 4294901760
      %2689 = vmatmul.mubr.f32.gmra.mxu0 %v2688
      %v2690 = vpop.f32.mrf.mxu0
      %v2691 = vadd.f32 %v2334, %v2690
      %v2692 = vpop.f32.mrf.mxu0
      %v2693 = vadd.f32 %v2336, %v2692
      %2694 = vmatprep.mubr.f32.mxu0 0.0
      %v2695 = vand.u32 %v2023, 4294901760
      %2696 = vmatmul.mubr.f32.gmra.mxu0 %v2695
      %v2697 = vpop.f32.mrf.mxu0
      %v2698 = vadd.f32 %v2345, %v2697
      %v2699 = vpop.f32.mrf.mxu0
      %v2700 = vadd.f32 %v2347, %v2699
      %2701 = vmatprep.mubr.f32.mxu0 0.0
      %v2702 = vand.u32 %v2024, 4294901760
      %2703 = vmatmul.mubr.f32.gmra.mxu0 %v2702
      %v2704 = vpop.f32.mrf.mxu0
      %v2705 = vadd.f32 %v2356, %v2704
      %v2706 = vpop.f32.mrf.mxu0
      %v2707 = vadd.f32 %v2358, %v2706
      %2708 = vmatprep.mubr.f32.mxu0 0.0
      %v2709 = vand.u32 %v2025, 4294901760
      %2710 = vmatmul.mubr.f32.gmra.mxu0 %v2709
      %v2711 = vpop.f32.mrf.mxu0
      %v2712 = vadd.f32 %v2367, %v2711
      %v2713 = vpop.f32.mrf.mxu0
      %v2714 = vadd.f32 %v2369, %v2713
      %2715 = vmatprep.mubr.f32.mxu0 0.0
      %v2716 = vand.u32 %v2026, 4294901760
      %2717 = vmatmul.mubr.f32.gmra.mxu0 %v2716
      %v2718 = vpop.f32.mrf.mxu0
      %v2719 = vadd.f32 %v2378, %v2718
      %v2720 = vpop.f32.mrf.mxu0
      %v2721 = vadd.f32 %v2380, %v2720
      %2722 = vmatprep.mubr.f32.mxu0 0.0
      %v2723 = vand.u32 %v2027, 4294901760
      %2724 = vmatmul.mubr.f32.gmra.mxu0 %v2723
      %v2725 = vpop.f32.mrf.mxu0
      %v2726 = vadd.f32 %v2389, %v2725
      %v2727 = vpop.f32.mrf.mxu0
      %v2728 = vadd.f32 %v2391, %v2727
      %2729 = vdwg.mxu0
      %v2730 = vand.u32 %v2107, 4294901760
      %v2731 = vsub.f32 %v2107, %v2730
      %2732 = vmatprep.subr.mxu0 %v2731
      %v2733 = vand.u32 %v2106, 4294901760
      %v2734 = vsub.f32 %v2106, %v2733
      %2735 = vmatpush1.msra.mxu0 %v2734
      %v2736 = vand.u32 %v2105, 4294901760
      %v2737 = vsub.f32 %v2105, %v2736
      %2738 = vmatprep.subr.mxu0 %v2737
      %v2739 = vand.u32 %v2104, 4294901760
      %v2740 = vsub.f32 %v2104, %v2739
      %2741 = vmatpush1.msra.mxu0 %v2740
      %v2742 = vand.u32 %v2103, 4294901760
      %v2743 = vsub.f32 %v2103, %v2742
      %2744 = vmatprep.subr.mxu0 %v2743
      %v2745 = vand.u32 %v2102, 4294901760
      %v2746 = vsub.f32 %v2102, %v2745
      %2747 = vmatpush1.msra.mxu0 %v2746
      %v2748 = vand.u32 %v2101, 4294901760
      %v2749 = vsub.f32 %v2101, %v2748
      %2750 = vmatprep.subr.mxu0 %v2749
      %v2751 = vand.u32 %v2100, 4294901760
      %v2752 = vsub.f32 %v2100, %v2751
      %2753 = vmatpush1.msra.mxu0 %v2752
      %v2754 = vand.u32 %v2099, 4294901760
      %v2755 = vsub.f32 %v2099, %v2754
      %2756 = vmatprep.subr.mxu0 %v2755
      %v2757 = vand.u32 %v2098, 4294901760
      %v2758 = vsub.f32 %v2098, %v2757
      %2759 = vmatpush1.msra.mxu0 %v2758
      %v2760 = vand.u32 %v2097, 4294901760
      %v2761 = vsub.f32 %v2097, %v2760
      %2762 = vmatprep.subr.mxu0 %v2761
      %v2763 = vand.u32 %v2096, 4294901760
      %v2764 = vsub.f32 %v2096, %v2763
      %2765 = vmatpush1.msra.mxu0 %v2764
      %v2766 = vand.u32 %v2095, 4294901760
      %v2767 = vsub.f32 %v2095, %v2766
      %2768 = vmatprep.subr.mxu0 %v2767
      %v2769 = vand.u32 %v2094, 4294901760
      %v2770 = vsub.f32 %v2094, %v2769
      %2771 = vmatpush1.msra.mxu0 %v2770
      %v2772 = vand.u32 %v2093, 4294901760
      %v2773 = vsub.f32 %v2093, %v2772
      %2774 = vmatprep.subr.mxu0 %v2773
      %v2775 = vand.u32 %v2092, 4294901760
      %v2776 = vsub.f32 %v2092, %v2775
      %2777 = vmatpush1.msra.mxu0 %v2776
      %v2778 = vand.u32 %v2091, 4294901760
      %v2779 = vsub.f32 %v2091, %v2778
      %2780 = vmatprep.subr.mxu0 %v2779
      %v2781 = vand.u32 %v2090, 4294901760
      %v2782 = vsub.f32 %v2090, %v2781
      %2783 = vmatpush1.msra.mxu0 %v2782
      %v2784 = vand.u32 %v2089, 4294901760
      %v2785 = vsub.f32 %v2089, %v2784
      %2786 = vmatprep.subr.mxu0 %v2785
      %v2787 = vand.u32 %v2088, 4294901760
      %v2788 = vsub.f32 %v2088, %v2787
      %2789 = vmatpush1.msra.mxu0 %v2788
      %v2790 = vand.u32 %v2087, 4294901760
      %v2791 = vsub.f32 %v2087, %v2790
      %2792 = vmatprep.subr.mxu0 %v2791
      %v2793 = vand.u32 %v2086, 4294901760
      %v2794 = vsub.f32 %v2086, %v2793
      %2795 = vmatpush1.msra.mxu0 %v2794
      %v2796 = vand.u32 %v2085, 4294901760
      %v2797 = vsub.f32 %v2085, %v2796
      %2798 = vmatprep.subr.mxu0 %v2797
      %v2799 = vand.u32 %v2084, 4294901760
      %v2800 = vsub.f32 %v2084, %v2799
      %2801 = vmatpush1.msra.mxu0 %v2800
      %v2802 = vand.u32 %v2083, 4294901760
      %v2803 = vsub.f32 %v2083, %v2802
      %2804 = vmatprep.subr.mxu0 %v2803
      %v2805 = vand.u32 %v2082, 4294901760
      %v2806 = vsub.f32 %v2082, %v2805
      %2807 = vmatpush1.msra.mxu0 %v2806
      %v2808 = vand.u32 %v2081, 4294901760
      %v2809 = vsub.f32 %v2081, %v2808
      %2810 = vmatprep.subr.mxu0 %v2809
      %v2811 = vand.u32 %v2080, 4294901760
      %v2812 = vsub.f32 %v2080, %v2811
      %2813 = vmatpush1.msra.mxu0 %v2812
      %v2814 = vand.u32 %v2079, 4294901760
      %v2815 = vsub.f32 %v2079, %v2814
      %2816 = vmatprep.subr.mxu0 %v2815
      %v2817 = vand.u32 %v2078, 4294901760
      %v2818 = vsub.f32 %v2078, %v2817
      %2819 = vmatpush1.msra.mxu0 %v2818
      %v2820 = vand.u32 %v2077, 4294901760
      %v2821 = vsub.f32 %v2077, %v2820
      %2822 = vmatprep.subr.mxu0 %v2821
      %v2823 = vand.u32 %v2076, 4294901760
      %v2824 = vsub.f32 %v2076, %v2823
      %2825 = vmatpush1.msra.mxu0 %v2824
      %2826 = vmatprep.subr.mxu0 0.0
      %2827 = vmatpush2.msra.mxu0 0.0
      %2828 = vmatprep.subr.mxu0 0.0
      %2829 = vmatpush2.msra.mxu0 0.0
      %2830 = vmatprep.subr.mxu0 0.0
      %2831 = vmatpush2.msra.mxu0 0.0
      %2832 = vmatprep.subr.mxu0 0.0
      %2833 = vmatpush2.msra.mxu0 0.0
      %2834 = vmatprep.subr.mxu0 0.0
      %2835 = vmatpush2.msra.mxu0 0.0
      %2836 = vmatprep.subr.mxu0 0.0
      %2837 = vmatpush2.msra.mxu0 0.0
      %2838 = vmatprep.subr.mxu0 0.0
      %2839 = vmatpush2.msra.mxu0 0.0
      %2840 = vmatprep.subr.mxu0 0.0
      %2841 = vmatpush2.msra.mxu0 0.0
      %2842 = vmatprep.subr.mxu0 0.0
      %2843 = vmatpush2.msra.mxu0 0.0
      %2844 = vmatprep.subr.mxu0 0.0
      %2845 = vmatpush2.msra.mxu0 0.0
      %2846 = vmatprep.subr.mxu0 0.0
      %2847 = vmatpush2.msra.mxu0 0.0
      %2848 = vmatprep.subr.mxu0 0.0
      %2849 = vmatpush2.msra.mxu0 0.0
      %2850 = vmatprep.subr.mxu0 0.0
      %2851 = vmatpush2.msra.mxu0 0.0
      %2852 = vmatprep.subr.mxu0 0.0
      %2853 = vmatpush2.msra.mxu0 0.0
      %2854 = vmatprep.subr.mxu0 0.0
      %2855 = vmatpush2.msra.mxu0 0.0
      %2856 = vmatprep.subr.mxu0 0.0
      %2857 = vmatpush2.msra.mxu0 0.0
      %2858 = vmatprep.mubr.f32.mxu0 0.0
      %v2859 = vand.u32 %v2012, 4294901760
      %v2860 = vsub.f32 %v2012, %v2859
      %2861 = vmatmul.mubr.f32.gmra.mxu0 %v2860
      %v2862 = vpop.f32.mrf.mxu0
      %v2863 = vadd.f32 %v2621, %v2862
      %v2864 = vpop.f32.mrf.mxu0
      %v2865 = vadd.f32 %v2623, %v2864
      %2866 = vmatprep.mubr.f32.mxu0 0.0
      %v2867 = vand.u32 %v2013, 4294901760
      %v2868 = vsub.f32 %v2013, %v2867
      %2869 = vmatmul.mubr.f32.gmra.mxu0 %v2868
      %v2870 = vpop.f32.mrf.mxu0
      %v2871 = vadd.f32 %v2628, %v2870
      %v2872 = vpop.f32.mrf.mxu0
      %v2873 = vadd.f32 %v2630, %v2872
      %2874 = vmatprep.mubr.f32.mxu0 0.0
      %v2875 = vand.u32 %v2014, 4294901760
      %v2876 = vsub.f32 %v2014, %v2875
      %2877 = vmatmul.mubr.f32.gmra.mxu0 %v2876
      %v2878 = vpop.f32.mrf.mxu0
      %v2879 = vadd.f32 %v2635, %v2878
      %v2880 = vpop.f32.mrf.mxu0
      %v2881 = vadd.f32 %v2637, %v2880
      %2882 = vmatprep.mubr.f32.mxu0 0.0
      %v2883 = vand.u32 %v2015, 4294901760
      %v2884 = vsub.f32 %v2015, %v2883
      %2885 = vmatmul.mubr.f32.gmra.mxu0 %v2884
      %v2886 = vpop.f32.mrf.mxu0
      %v2887 = vadd.f32 %v2642, %v2886
      %v2888 = vpop.f32.mrf.mxu0
      %v2889 = vadd.f32 %v2644, %v2888
      %2890 = vmatprep.mubr.f32.mxu0 0.0
      %v2891 = vand.u32 %v2016, 4294901760
      %v2892 = vsub.f32 %v2016, %v2891
      %2893 = vmatmul.mubr.f32.gmra.mxu0 %v2892
      %v2894 = vpop.f32.mrf.mxu0
      %v2895 = vadd.f32 %v2649, %v2894
      %v2896 = vpop.f32.mrf.mxu0
      %v2897 = vadd.f32 %v2651, %v2896
      %2898 = vmatprep.mubr.f32.mxu0 0.0
      %v2899 = vand.u32 %v2017, 4294901760
      %v2900 = vsub.f32 %v2017, %v2899
      %2901 = vmatmul.mubr.f32.gmra.mxu0 %v2900
      %v2902 = vpop.f32.mrf.mxu0
      %v2903 = vadd.f32 %v2656, %v2902
      %v2904 = vpop.f32.mrf.mxu0
      %v2905 = vadd.f32 %v2658, %v2904
      %2906 = vmatprep.mubr.f32.mxu0 0.0
      %v2907 = vand.u32 %v2018, 4294901760
      %v2908 = vsub.f32 %v2018, %v2907
      %2909 = vmatmul.mubr.f32.gmra.mxu0 %v2908
      %v2910 = vpop.f32.mrf.mxu0
      %v2911 = vadd.f32 %v2663, %v2910
      %v2912 = vpop.f32.mrf.mxu0
      %v2913 = vadd.f32 %v2665, %v2912
      %2914 = vmatprep.mubr.f32.mxu0 0.0
      %v2915 = vand.u32 %v2019, 4294901760
      %v2916 = vsub.f32 %v2019, %v2915
      %2917 = vmatmul.mubr.f32.gmra.mxu0 %v2916
      %v2918 = vpop.f32.mrf.mxu0
      %v2919 = vadd.f32 %v2670, %v2918
      %v2920 = vpop.f32.mrf.mxu0
      %v2921 = vadd.f32 %v2672, %v2920
      %2922 = vmatprep.mubr.f32.mxu0 0.0
      %v2923 = vand.u32 %v2020, 4294901760
      %v2924 = vsub.f32 %v2020, %v2923
      %2925 = vmatmul.mubr.f32.gmra.mxu0 %v2924
      %v2926 = vpop.f32.mrf.mxu0
      %v2927 = vadd.f32 %v2677, %v2926
      %v2928 = vpop.f32.mrf.mxu0
      %v2929 = vadd.f32 %v2679, %v2928
      %2930 = vmatprep.mubr.f32.mxu0 0.0
      %v2931 = vand.u32 %v2021, 4294901760
      %v2932 = vsub.f32 %v2021, %v2931
      %2933 = vmatmul.mubr.f32.gmra.mxu0 %v2932
      %v2934 = vpop.f32.mrf.mxu0
      %v2935 = vadd.f32 %v2684, %v2934
      %v2936 = vpop.f32.mrf.mxu0
      %v2937 = vadd.f32 %v2686, %v2936
      %2938 = vmatprep.mubr.f32.mxu0 0.0
      %v2939 = vand.u32 %v2022, 4294901760
      %v2940 = vsub.f32 %v2022, %v2939
      %2941 = vmatmul.mubr.f32.gmra.mxu0 %v2940
      %v2942 = vpop.f32.mrf.mxu0
      %v2943 = vadd.f32 %v2691, %v2942
      %v2944 = vpop.f32.mrf.mxu0
      %v2945 = vadd.f32 %v2693, %v2944
      %2946 = vmatprep.mubr.f32.mxu0 0.0
      %v2947 = vand.u32 %v2023, 4294901760
      %v2948 = vsub.f32 %v2023, %v2947
      %2949 = vmatmul.mubr.f32.gmra.mxu0 %v2948
      %v2950 = vpop.f32.mrf.mxu0
      %v2951 = vadd.f32 %v2698, %v2950
      %v2952 = vpop.f32.mrf.mxu0
      %v2953 = vadd.f32 %v2700, %v2952
      %2954 = vmatprep.mubr.f32.mxu0 0.0
      %v2955 = vand.u32 %v2024, 4294901760
      %v2956 = vsub.f32 %v2024, %v2955
      %2957 = vmatmul.mubr.f32.gmra.mxu0 %v2956
      %v2958 = vpop.f32.mrf.mxu0
      %v2959 = vadd.f32 %v2705, %v2958
      %v2960 = vpop.f32.mrf.mxu0
      %v2961 = vadd.f32 %v2707, %v2960
      %2962 = vmatprep.mubr.f32.mxu0 0.0
      %v2963 = vand.u32 %v2025, 4294901760
      %v2964 = vsub.f32 %v2025, %v2963
      %2965 = vmatmul.mubr.f32.gmra.mxu0 %v2964
      %v2966 = vpop.f32.mrf.mxu0
      %v2967 = vadd.f32 %v2712, %v2966
      %v2968 = vpop.f32.mrf.mxu0
      %v2969 = vadd.f32 %v2714, %v2968
      %2970 = vmatprep.mubr.f32.mxu0 0.0
      %v2971 = vand.u32 %v2026, 4294901760
      %v2972 = vsub.f32 %v2026, %v2971
      %2973 = vmatmul.mubr.f32.gmra.mxu0 %v2972
      %v2974 = vpop.f32.mrf.mxu0
      %v2975 = vadd.f32 %v2719, %v2974
      %v2976 = vpop.f32.mrf.mxu0
      %v2977 = vadd.f32 %v2721, %v2976
      %2978 = vmatprep.mubr.f32.mxu0 0.0
      %v2979 = vand.u32 %v2027, 4294901760
      %v2980 = vsub.f32 %v2027, %v2979
      %2981 = vmatmul.mubr.f32.gmra.mxu0 %v2980
      %v2982 = vpop.f32.mrf.mxu0
      %v2983 = vadd.f32 %v2726, %v2982
      %v2984 = vpop.f32.mrf.mxu0
      %v2985 = vadd.f32 %v2728, %v2984
      %2986 = vdwg.mxu0
      %v2987 = vand.u32 %v2107, 4294901760
      %2988 = vmatprep.subr.mxu0 %v2987
      %v2989 = vand.u32 %v2106, 4294901760
      %2990 = vmatpush1.msra.mxu0 %v2989
      %v2991 = vand.u32 %v2105, 4294901760
      %2992 = vmatprep.subr.mxu0 %v2991
      %v2993 = vand.u32 %v2104, 4294901760
      %2994 = vmatpush1.msra.mxu0 %v2993
      %v2995 = vand.u32 %v2103, 4294901760
      %2996 = vmatprep.subr.mxu0 %v2995
      %v2997 = vand.u32 %v2102, 4294901760
      %2998 = vmatpush1.msra.mxu0 %v2997
      %v2999 = vand.u32 %v2101, 4294901760
      %3000 = vmatprep.subr.mxu0 %v2999
      %v3001 = vand.u32 %v2100, 4294901760
      %3002 = vmatpush1.msra.mxu0 %v3001
      %v3003 = vand.u32 %v2099, 4294901760
      %3004 = vmatprep.subr.mxu0 %v3003
      %v3005 = vand.u32 %v2098, 4294901760
      %3006 = vmatpush1.msra.mxu0 %v3005
      %v3007 = vand.u32 %v2097, 4294901760
      %3008 = vmatprep.subr.mxu0 %v3007
      %v3009 = vand.u32 %v2096, 4294901760
      %3010 = vmatpush1.msra.mxu0 %v3009
      %v3011 = vand.u32 %v2095, 4294901760
      %3012 = vmatprep.subr.mxu0 %v3011
      %v3013 = vand.u32 %v2094, 4294901760
      %3014 = vmatpush1.msra.mxu0 %v3013
      %v3015 = vand.u32 %v2093, 4294901760
      %3016 = vmatprep.subr.mxu0 %v3015
      %v3017 = vand.u32 %v2092, 4294901760
      %3018 = vmatpush1.msra.mxu0 %v3017
      %v3019 = vand.u32 %v2091, 4294901760
      %3020 = vmatprep.subr.mxu0 %v3019
      %v3021 = vand.u32 %v2090, 4294901760
      %3022 = vmatpush1.msra.mxu0 %v3021
      %v3023 = vand.u32 %v2089, 4294901760
      %3024 = vmatprep.subr.mxu0 %v3023
      %v3025 = vand.u32 %v2088, 4294901760
      %3026 = vmatpush1.msra.mxu0 %v3025
      %v3027 = vand.u32 %v2087, 4294901760
      %3028 = vmatprep.subr.mxu0 %v3027
      %v3029 = vand.u32 %v2086, 4294901760
      %3030 = vmatpush1.msra.mxu0 %v3029
      %v3031 = vand.u32 %v2085, 4294901760
      %3032 = vmatprep.subr.mxu0 %v3031
      %v3033 = vand.u32 %v2084, 4294901760
      %3034 = vmatpush1.msra.mxu0 %v3033
      %v3035 = vand.u32 %v2083, 4294901760
      %3036 = vmatprep.subr.mxu0 %v3035
      %v3037 = vand.u32 %v2082, 4294901760
      %3038 = vmatpush1.msra.mxu0 %v3037
      %v3039 = vand.u32 %v2081, 4294901760
      %3040 = vmatprep.subr.mxu0 %v3039
      %v3041 = vand.u32 %v2080, 4294901760
      %3042 = vmatpush1.msra.mxu0 %v3041
      %v3043 = vand.u32 %v2079, 4294901760
      %3044 = vmatprep.subr.mxu0 %v3043
      %v3045 = vand.u32 %v2078, 4294901760
      %3046 = vmatpush1.msra.mxu0 %v3045
      %v3047 = vand.u32 %v2077, 4294901760
      %3048 = vmatprep.subr.mxu0 %v3047
      %v3049 = vand.u32 %v2076, 4294901760
      %3050 = vmatpush1.msra.mxu0 %v3049
      %3051 = vmatprep.subr.mxu0 0.0
      %3052 = vmatpush2.msra.mxu0 0.0
      %3053 = vmatprep.subr.mxu0 0.0
      %3054 = vmatpush2.msra.mxu0 0.0
      %3055 = vmatprep.subr.mxu0 0.0
      %3056 = vmatpush2.msra.mxu0 0.0
      %3057 = vmatprep.subr.mxu0 0.0
      %3058 = vmatpush2.msra.mxu0 0.0
      %3059 = vmatprep.subr.mxu0 0.0
      %3060 = vmatpush2.msra.mxu0 0.0
      %3061 = vmatprep.subr.mxu0 0.0
      %3062 = vmatpush2.msra.mxu0 0.0
      %3063 = vmatprep.subr.mxu0 0.0
      %3064 = vmatpush2.msra.mxu0 0.0
      %3065 = vmatprep.subr.mxu0 0.0
      %3066 = vmatpush2.msra.mxu0 0.0
      %3067 = vmatprep.subr.mxu0 0.0
      %3068 = vmatpush2.msra.mxu0 0.0
      %3069 = vmatprep.subr.mxu0 0.0
      %3070 = vmatpush2.msra.mxu0 0.0
      %3071 = vmatprep.subr.mxu0 0.0
      %3072 = vmatpush2.msra.mxu0 0.0
      %3073 = vmatprep.subr.mxu0 0.0
      %3074 = vmatpush2.msra.mxu0 0.0
      %3075 = vmatprep.subr.mxu0 0.0
      %3076 = vmatpush2.msra.mxu0 0.0
      %3077 = vmatprep.subr.mxu0 0.0
      %3078 = vmatpush2.msra.mxu0 0.0
      %3079 = vmatprep.subr.mxu0 0.0
      %3080 = vmatpush2.msra.mxu0 0.0
      %3081 = vmatprep.subr.mxu0 0.0
      %3082 = vmatpush2.msra.mxu0 0.0
      %3083 = vmatprep.mubr.f32.mxu0 0.0
      %v3084 = vand.u32 %v2012, 4294901760
      %v3085 = vsub.f32 %v2012, %v3084
      %v3086 = vand.u32 %v3085, 4294901760
      %3087 = vmatmul.mubr.f32.gmra.mxu0 %v3086
      %v3088 = vpop.f32.mrf.mxu0
      %v3089 = vadd.f32 %v2863, %v3088
      %v3090 = vpop.f32.mrf.mxu0
      %v3091 = vadd.f32 %v2865, %v3090
      %3092 = vmatprep.mubr.f32.mxu0 0.0
      %v3093 = vand.u32 %v2013, 4294901760
      %v3094 = vsub.f32 %v2013, %v3093
      %v3095 = vand.u32 %v3094, 4294901760
      %3096 = vmatmul.mubr.f32.gmra.mxu0 %v3095
      %v3097 = vpop.f32.mrf.mxu0
      %v3098 = vadd.f32 %v2871, %v3097
      %v3099 = vpop.f32.mrf.mxu0
      %v3100 = vadd.f32 %v2873, %v3099
      %3101 = vmatprep.mubr.f32.mxu0 0.0
      %v3102 = vand.u32 %v2014, 4294901760
      %v3103 = vsub.f32 %v2014, %v3102
      %v3104 = vand.u32 %v3103, 4294901760
      %3105 = vmatmul.mubr.f32.gmra.mxu0 %v3104
      %v3106 = vpop.f32.mrf.mxu0
      %v3107 = vadd.f32 %v2879, %v3106
      %v3108 = vpop.f32.mrf.mxu0
      %v3109 = vadd.f32 %v2881, %v3108
      %3110 = vmatprep.mubr.f32.mxu0 0.0
      %v3111 = vand.u32 %v2015, 4294901760
      %v3112 = vsub.f32 %v2015, %v3111
      %v3113 = vand.u32 %v3112, 4294901760
      %3114 = vmatmul.mubr.f32.gmra.mxu0 %v3113
      %v3115 = vpop.f32.mrf.mxu0
      %v3116 = vadd.f32 %v2887, %v3115
      %v3117 = vpop.f32.mrf.mxu0
      %v3118 = vadd.f32 %v2889, %v3117
      %3119 = vmatprep.mubr.f32.mxu0 0.0
      %v3120 = vand.u32 %v2016, 4294901760
      %v3121 = vsub.f32 %v2016, %v3120
      %v3122 = vand.u32 %v3121, 4294901760
      %3123 = vmatmul.mubr.f32.gmra.mxu0 %v3122
      %v3124 = vpop.f32.mrf.mxu0
      %v3125 = vadd.f32 %v2895, %v3124
      %v3126 = vpop.f32.mrf.mxu0
      %v3127 = vadd.f32 %v2897, %v3126
      %3128 = vmatprep.mubr.f32.mxu0 0.0
      %v3129 = vand.u32 %v2017, 4294901760
      %v3130 = vsub.f32 %v2017, %v3129
      %v3131 = vand.u32 %v3130, 4294901760
      %3132 = vmatmul.mubr.f32.gmra.mxu0 %v3131
      %v3133 = vpop.f32.mrf.mxu0
      %v3134 = vadd.f32 %v2903, %v3133
      %v3135 = vpop.f32.mrf.mxu0
      %v3136 = vadd.f32 %v2905, %v3135
      %3137 = vmatprep.mubr.f32.mxu0 0.0
      %v3138 = vand.u32 %v2018, 4294901760
      %v3139 = vsub.f32 %v2018, %v3138
      %v3140 = vand.u32 %v3139, 4294901760
      %3141 = vmatmul.mubr.f32.gmra.mxu0 %v3140
      %v3142 = vpop.f32.mrf.mxu0
      %v3143 = vadd.f32 %v2911, %v3142
      %v3144 = vpop.f32.mrf.mxu0
      %v3145 = vadd.f32 %v2913, %v3144
      %3146 = vmatprep.mubr.f32.mxu0 0.0
      %v3147 = vand.u32 %v2019, 4294901760
      %v3148 = vsub.f32 %v2019, %v3147
      %v3149 = vand.u32 %v3148, 4294901760
      %3150 = vmatmul.mubr.f32.gmra.mxu0 %v3149
      %v3151 = vpop.f32.mrf.mxu0
      %v3152 = vadd.f32 %v2919, %v3151
      %v3153 = vpop.f32.mrf.mxu0
      %v3154 = vadd.f32 %v2921, %v3153
      %3155 = vmatprep.mubr.f32.mxu0 0.0
      %v3156 = vand.u32 %v2020, 4294901760
      %v3157 = vsub.f32 %v2020, %v3156
      %v3158 = vand.u32 %v3157, 4294901760
      %3159 = vmatmul.mubr.f32.gmra.mxu0 %v3158
      %v3160 = vpop.f32.mrf.mxu0
      %v3161 = vadd.f32 %v2927, %v3160
      %v3162 = vpop.f32.mrf.mxu0
      %v3163 = vadd.f32 %v2929, %v3162
      %3164 = vmatprep.mubr.f32.mxu0 0.0
      %v3165 = vand.u32 %v2021, 4294901760
      %v3166 = vsub.f32 %v2021, %v3165
      %v3167 = vand.u32 %v3166, 4294901760
      %3168 = vmatmul.mubr.f32.gmra.mxu0 %v3167
      %v3169 = vpop.f32.mrf.mxu0
      %v3170 = vadd.f32 %v2935, %v3169
      %v3171 = vpop.f32.mrf.mxu0
      %v3172 = vadd.f32 %v2937, %v3171
      %3173 = vmatprep.mubr.f32.mxu0 0.0
      %v3174 = vand.u32 %v2022, 4294901760
      %v3175 = vsub.f32 %v2022, %v3174
      %v3176 = vand.u32 %v3175, 4294901760
      %3177 = vmatmul.mubr.f32.gmra.mxu0 %v3176
      %v3178 = vpop.f32.mrf.mxu0
      %v3179 = vadd.f32 %v2943, %v3178
      %v3180 = vpop.f32.mrf.mxu0
      %v3181 = vadd.f32 %v2945, %v3180
      %3182 = vmatprep.mubr.f32.mxu0 0.0
      %v3183 = vand.u32 %v2023, 4294901760
      %v3184 = vsub.f32 %v2023, %v3183
      %v3185 = vand.u32 %v3184, 4294901760
      %3186 = vmatmul.mubr.f32.gmra.mxu0 %v3185
      %v3187 = vpop.f32.mrf.mxu0
      %v3188 = vadd.f32 %v2951, %v3187
      %v3189 = vpop.f32.mrf.mxu0
      %v3190 = vadd.f32 %v2953, %v3189
      %3191 = vmatprep.mubr.f32.mxu0 0.0
      %v3192 = vand.u32 %v2024, 4294901760
      %v3193 = vsub.f32 %v2024, %v3192
      %v3194 = vand.u32 %v3193, 4294901760
      %3195 = vmatmul.mubr.f32.gmra.mxu0 %v3194
      %v3196 = vpop.f32.mrf.mxu0
      %v3197 = vadd.f32 %v2959, %v3196
      %v3198 = vpop.f32.mrf.mxu0
      %v3199 = vadd.f32 %v2961, %v3198
      %3200 = vmatprep.mubr.f32.mxu0 0.0
      %v3201 = vand.u32 %v2025, 4294901760
      %v3202 = vsub.f32 %v2025, %v3201
      %v3203 = vand.u32 %v3202, 4294901760
      %3204 = vmatmul.mubr.f32.gmra.mxu0 %v3203
      %v3205 = vpop.f32.mrf.mxu0
      %v3206 = vadd.f32 %v2967, %v3205
      %v3207 = vpop.f32.mrf.mxu0
      %v3208 = vadd.f32 %v2969, %v3207
      %3209 = vmatprep.mubr.f32.mxu0 0.0
      %v3210 = vand.u32 %v2026, 4294901760
      %v3211 = vsub.f32 %v2026, %v3210
      %v3212 = vand.u32 %v3211, 4294901760
      %3213 = vmatmul.mubr.f32.gmra.mxu0 %v3212
      %v3214 = vpop.f32.mrf.mxu0
      %v3215 = vadd.f32 %v2975, %v3214
      %v3216 = vpop.f32.mrf.mxu0
      %v3217 = vadd.f32 %v2977, %v3216
      %3218 = vmatprep.mubr.f32.mxu0 0.0
      %v3219 = vand.u32 %v2027, 4294901760
      %v3220 = vsub.f32 %v2027, %v3219
      %v3221 = vand.u32 %v3220, 4294901760
      %3222 = vmatmul.mubr.f32.gmra.mxu0 %v3221
      %v3223 = vpop.f32.mrf.mxu0
      %v3224 = vadd.f32 %v2983, %v3223
      %v3225 = vpop.f32.mrf.mxu0
      %v3226 = vadd.f32 %v2985, %v3225
      %3227 = vdwg.mxu0
      %v3228 = vand.u32 %v2107, 4294901760
      %v3229 = vsub.f32 %v2107, %v3228
      %v3230 = vand.u32 %v3229, 4294901760
      %3231 = vmatprep.subr.mxu0 %v3230
      %v3232 = vand.u32 %v2106, 4294901760
      %v3233 = vsub.f32 %v2106, %v3232
      %v3234 = vand.u32 %v3233, 4294901760
      %3235 = vmatpush1.msra.mxu0 %v3234
      %v3236 = vand.u32 %v2105, 4294901760
      %v3237 = vsub.f32 %v2105, %v3236
      %v3238 = vand.u32 %v3237, 4294901760
      %3239 = vmatprep.subr.mxu0 %v3238
      %v3240 = vand.u32 %v2104, 4294901760
      %v3241 = vsub.f32 %v2104, %v3240
      %v3242 = vand.u32 %v3241, 4294901760
      %3243 = vmatpush1.msra.mxu0 %v3242
      %v3244 = vand.u32 %v2103, 4294901760
      %v3245 = vsub.f32 %v2103, %v3244
      %v3246 = vand.u32 %v3245, 4294901760
      %3247 = vmatprep.subr.mxu0 %v3246
      %v3248 = vand.u32 %v2102, 4294901760
      %v3249 = vsub.f32 %v2102, %v3248
      %v3250 = vand.u32 %v3249, 4294901760
      %3251 = vmatpush1.msra.mxu0 %v3250
      %v3252 = vand.u32 %v2101, 4294901760
      %v3253 = vsub.f32 %v2101, %v3252
      %v3254 = vand.u32 %v3253, 4294901760
      %3255 = vmatprep.subr.mxu0 %v3254
      %v3256 = vand.u32 %v2100, 4294901760
      %v3257 = vsub.f32 %v2100, %v3256
      %v3258 = vand.u32 %v3257, 4294901760
      %3259 = vmatpush1.msra.mxu0 %v3258
      %v3260 = vand.u32 %v2099, 4294901760
      %v3261 = vsub.f32 %v2099, %v3260
      %v3262 = vand.u32 %v3261, 4294901760
      %3263 = vmatprep.subr.mxu0 %v3262
      %v3264 = vand.u32 %v2098, 4294901760
      %v3265 = vsub.f32 %v2098, %v3264
      %v3266 = vand.u32 %v3265, 4294901760
      %3267 = vmatpush1.msra.mxu0 %v3266
      %v3268 = vand.u32 %v2097, 4294901760
      %v3269 = vsub.f32 %v2097, %v3268
      %v3270 = vand.u32 %v3269, 4294901760
      %3271 = vmatprep.subr.mxu0 %v3270
      %v3272 = vand.u32 %v2096, 4294901760
      %v3273 = vsub.f32 %v2096, %v3272
      %v3274 = vand.u32 %v3273, 4294901760
      %3275 = vmatpush1.msra.mxu0 %v3274
      %v3276 = vand.u32 %v2095, 4294901760
      %v3277 = vsub.f32 %v2095, %v3276
      %v3278 = vand.u32 %v3277, 4294901760
      %3279 = vmatprep.subr.mxu0 %v3278
      %v3280 = vand.u32 %v2094, 4294901760
      %v3281 = vsub.f32 %v2094, %v3280
      %v3282 = vand.u32 %v3281, 4294901760
      %3283 = vmatpush1.msra.mxu0 %v3282
      %v3284 = vand.u32 %v2093, 4294901760
      %v3285 = vsub.f32 %v2093, %v3284
      %v3286 = vand.u32 %v3285, 4294901760
      %3287 = vmatprep.subr.mxu0 %v3286
      %v3288 = vand.u32 %v2092, 4294901760
      %v3289 = vsub.f32 %v2092, %v3288
      %v3290 = vand.u32 %v3289, 4294901760
      %3291 = vmatpush1.msra.mxu0 %v3290
      %v3292 = vand.u32 %v2091, 4294901760
      %v3293 = vsub.f32 %v2091, %v3292
      %v3294 = vand.u32 %v3293, 4294901760
      %3295 = vmatprep.subr.mxu0 %v3294
      %v3296 = vand.u32 %v2090, 4294901760
      %v3297 = vsub.f32 %v2090, %v3296
      %v3298 = vand.u32 %v3297, 4294901760
      %3299 = vmatpush1.msra.mxu0 %v3298
      %v3300 = vand.u32 %v2089, 4294901760
      %v3301 = vsub.f32 %v2089, %v3300
      %v3302 = vand.u32 %v3301, 4294901760
      %3303 = vmatprep.subr.mxu0 %v3302
      %v3304 = vand.u32 %v2088, 4294901760
      %v3305 = vsub.f32 %v2088, %v3304
      %v3306 = vand.u32 %v3305, 4294901760
      %3307 = vmatpush1.msra.mxu0 %v3306
      %v3308 = vand.u32 %v2087, 4294901760
      %v3309 = vsub.f32 %v2087, %v3308
      %v3310 = vand.u32 %v3309, 4294901760
      %3311 = vmatprep.subr.mxu0 %v3310
      %v3312 = vand.u32 %v2086, 4294901760
      %v3313 = vsub.f32 %v2086, %v3312
      %v3314 = vand.u32 %v3313, 4294901760
      %3315 = vmatpush1.msra.mxu0 %v3314
      %v3316 = vand.u32 %v2085, 4294901760
      %v3317 = vsub.f32 %v2085, %v3316
      %v3318 = vand.u32 %v3317, 4294901760
      %3319 = vmatprep.subr.mxu0 %v3318
      %v3320 = vand.u32 %v2084, 4294901760
      %v3321 = vsub.f32 %v2084, %v3320
      %v3322 = vand.u32 %v3321, 4294901760
      %3323 = vmatpush1.msra.mxu0 %v3322
      %v3324 = vand.u32 %v2083, 4294901760
      %v3325 = vsub.f32 %v2083, %v3324
      %v3326 = vand.u32 %v3325, 4294901760
      %3327 = vmatprep.subr.mxu0 %v3326
      %v3328 = vand.u32 %v2082, 4294901760
      %v3329 = vsub.f32 %v2082, %v3328
      %v3330 = vand.u32 %v3329, 4294901760
      %3331 = vmatpush1.msra.mxu0 %v3330
      %v3332 = vand.u32 %v2081, 4294901760
      %v3333 = vsub.f32 %v2081, %v3332
      %v3334 = vand.u32 %v3333, 4294901760
      %3335 = vmatprep.subr.mxu0 %v3334
      %v3336 = vand.u32 %v2080, 4294901760
      %v3337 = vsub.f32 %v2080, %v3336
      %v3338 = vand.u32 %v3337, 4294901760
      %3339 = vmatpush1.msra.mxu0 %v3338
      %v3340 = vand.u32 %v2079, 4294901760
      %v3341 = vsub.f32 %v2079, %v3340
      %v3342 = vand.u32 %v3341, 4294901760
      %3343 = vmatprep.subr.mxu0 %v3342
      %v3344 = vand.u32 %v2078, 4294901760
      %v3345 = vsub.f32 %v2078, %v3344
      %v3346 = vand.u32 %v3345, 4294901760
      %3347 = vmatpush1.msra.mxu0 %v3346
      %v3348 = vand.u32 %v2077, 4294901760
      %v3349 = vsub.f32 %v2077, %v3348
      %v3350 = vand.u32 %v3349, 4294901760
      %3351 = vmatprep.subr.mxu0 %v3350
      %v3352 = vand.u32 %v2076, 4294901760
      %v3353 = vsub.f32 %v2076, %v3352
      %v3354 = vand.u32 %v3353, 4294901760
      %3355 = vmatpush1.msra.mxu0 %v3354
      %3356 = vmatprep.subr.mxu0 0.0
      %3357 = vmatpush2.msra.mxu0 0.0
      %3358 = vmatprep.subr.mxu0 0.0
      %3359 = vmatpush2.msra.mxu0 0.0
      %3360 = vmatprep.subr.mxu0 0.0
      %3361 = vmatpush2.msra.mxu0 0.0
      %3362 = vmatprep.subr.mxu0 0.0
      %3363 = vmatpush2.msra.mxu0 0.0
      %3364 = vmatprep.subr.mxu0 0.0
      %3365 = vmatpush2.msra.mxu0 0.0
      %3366 = vmatprep.subr.mxu0 0.0
      %3367 = vmatpush2.msra.mxu0 0.0
      %3368 = vmatprep.subr.mxu0 0.0
      %3369 = vmatpush2.msra.mxu0 0.0
      %3370 = vmatprep.subr.mxu0 0.0
      %3371 = vmatpush2.msra.mxu0 0.0
      %3372 = vmatprep.subr.mxu0 0.0
      %3373 = vmatpush2.msra.mxu0 0.0
      %3374 = vmatprep.subr.mxu0 0.0
      %3375 = vmatpush2.msra.mxu0 0.0
      %3376 = vmatprep.subr.mxu0 0.0
      %3377 = vmatpush2.msra.mxu0 0.0
      %3378 = vmatprep.subr.mxu0 0.0
      %3379 = vmatpush2.msra.mxu0 0.0
      %3380 = vmatprep.subr.mxu0 0.0
      %3381 = vmatpush2.msra.mxu0 0.0
      %3382 = vmatprep.subr.mxu0 0.0
      %3383 = vmatpush2.msra.mxu0 0.0
      %3384 = vmatprep.subr.mxu0 0.0
      %3385 = vmatpush2.msra.mxu0 0.0
      %3386 = vmatprep.subr.mxu0 0.0
      %3387 = vmatpush2.msra.mxu0 0.0
      %3388 = vmatprep.mubr.f32.mxu0 0.0
      %v3389 = vand.u32 %v2012, 4294901760
      %3390 = vmatmul.mubr.f32.gmra.mxu0 %v3389
      %v3391 = vpop.f32.mrf.mxu0
      %v3392 = vadd.f32 %v3089, %v3391
      %v3393 = vpop.f32.mrf.mxu0
      %v3394 = vadd.f32 %v3091, %v3393
      %3395 = vmatprep.mubr.f32.mxu0 0.0
      %v3396 = vand.u32 %v2013, 4294901760
      %3397 = vmatmul.mubr.f32.gmra.mxu0 %v3396
      %v3398 = vpop.f32.mrf.mxu0
      %v3399 = vadd.f32 %v3098, %v3398
      %v3400 = vpop.f32.mrf.mxu0
      %v3401 = vadd.f32 %v3100, %v3400
      %3402 = vmatprep.mubr.f32.mxu0 0.0
      %v3403 = vand.u32 %v2014, 4294901760
      %3404 = vmatmul.mubr.f32.gmra.mxu0 %v3403
      %v3405 = vpop.f32.mrf.mxu0
      %v3406 = vadd.f32 %v3107, %v3405
      %v3407 = vpop.f32.mrf.mxu0
      %v3408 = vadd.f32 %v3109, %v3407
      %3409 = vmatprep.mubr.f32.mxu0 0.0
      %v3410 = vand.u32 %v2015, 4294901760
      %3411 = vmatmul.mubr.f32.gmra.mxu0 %v3410
      %v3412 = vpop.f32.mrf.mxu0
      %v3413 = vadd.f32 %v3116, %v3412
      %v3414 = vpop.f32.mrf.mxu0
      %v3415 = vadd.f32 %v3118, %v3414
      %3416 = vmatprep.mubr.f32.mxu0 0.0
      %v3417 = vand.u32 %v2016, 4294901760
      %3418 = vmatmul.mubr.f32.gmra.mxu0 %v3417
      %v3419 = vpop.f32.mrf.mxu0
      %v3420 = vadd.f32 %v3125, %v3419
      %v3421 = vpop.f32.mrf.mxu0
      %v3422 = vadd.f32 %v3127, %v3421
      %3423 = vmatprep.mubr.f32.mxu0 0.0
      %v3424 = vand.u32 %v2017, 4294901760
      %3425 = vmatmul.mubr.f32.gmra.mxu0 %v3424
      %v3426 = vpop.f32.mrf.mxu0
      %v3427 = vadd.f32 %v3134, %v3426
      %v3428 = vpop.f32.mrf.mxu0
      %v3429 = vadd.f32 %v3136, %v3428
      %3430 = vmatprep.mubr.f32.mxu0 0.0
      %v3431 = vand.u32 %v2018, 4294901760
      %3432 = vmatmul.mubr.f32.gmra.mxu0 %v3431
      %v3433 = vpop.f32.mrf.mxu0
      %v3434 = vadd.f32 %v3143, %v3433
      %v3435 = vpop.f32.mrf.mxu0
      %v3436 = vadd.f32 %v3145, %v3435
      %3437 = vmatprep.mubr.f32.mxu0 0.0
      %v3438 = vand.u32 %v2019, 4294901760
      %3439 = vmatmul.mubr.f32.gmra.mxu0 %v3438
      %v3440 = vpop.f32.mrf.mxu0
      %v3441 = vadd.f32 %v3152, %v3440
      %v3442 = vpop.f32.mrf.mxu0
      %v3443 = vadd.f32 %v3154, %v3442
      %3444 = vmatprep.mubr.f32.mxu0 0.0
      %v3445 = vand.u32 %v2020, 4294901760
      %3446 = vmatmul.mubr.f32.gmra.mxu0 %v3445
      %v3447 = vpop.f32.mrf.mxu0
      %v3448 = vadd.f32 %v3161, %v3447
      %v3449 = vpop.f32.mrf.mxu0
      %v3450 = vadd.f32 %v3163, %v3449
      %3451 = vmatprep.mubr.f32.mxu0 0.0
      %v3452 = vand.u32 %v2021, 4294901760
      %3453 = vmatmul.mubr.f32.gmra.mxu0 %v3452
      %v3454 = vpop.f32.mrf.mxu0
      %v3455 = vadd.f32 %v3170, %v3454
      %v3456 = vpop.f32.mrf.mxu0
      %v3457 = vadd.f32 %v3172, %v3456
      %3458 = vmatprep.mubr.f32.mxu0 0.0
      %v3459 = vand.u32 %v2022, 4294901760
      %3460 = vmatmul.mubr.f32.gmra.mxu0 %v3459
      %v3461 = vpop.f32.mrf.mxu0
      %v3462 = vadd.f32 %v3179, %v3461
      %v3463 = vpop.f32.mrf.mxu0
      %v3464 = vadd.f32 %v3181, %v3463
      %3465 = vmatprep.mubr.f32.mxu0 0.0
      %v3466 = vand.u32 %v2023, 4294901760
      %3467 = vmatmul.mubr.f32.gmra.mxu0 %v3466
      %v3468 = vpop.f32.mrf.mxu0
      %v3469 = vadd.f32 %v3188, %v3468
      %v3470 = vpop.f32.mrf.mxu0
      %v3471 = vadd.f32 %v3190, %v3470
      %3472 = vmatprep.mubr.f32.mxu0 0.0
      %v3473 = vand.u32 %v2024, 4294901760
      %3474 = vmatmul.mubr.f32.gmra.mxu0 %v3473
      %v3475 = vpop.f32.mrf.mxu0
      %v3476 = vadd.f32 %v3197, %v3475
      %v3477 = vpop.f32.mrf.mxu0
      %v3478 = vadd.f32 %v3199, %v3477
      %3479 = vmatprep.mubr.f32.mxu0 0.0
      %v3480 = vand.u32 %v2025, 4294901760
      %3481 = vmatmul.mubr.f32.gmra.mxu0 %v3480
      %v3482 = vpop.f32.mrf.mxu0
      %v3483 = vadd.f32 %v3206, %v3482
      %v3484 = vpop.f32.mrf.mxu0
      %v3485 = vadd.f32 %v3208, %v3484
      %3486 = vmatprep.mubr.f32.mxu0 0.0
      %v3487 = vand.u32 %v2026, 4294901760
      %3488 = vmatmul.mubr.f32.gmra.mxu0 %v3487
      %v3489 = vpop.f32.mrf.mxu0
      %v3490 = vadd.f32 %v3215, %v3489
      %v3491 = vpop.f32.mrf.mxu0
      %v3492 = vadd.f32 %v3217, %v3491
      %3493 = vmatprep.mubr.f32.mxu0 0.0
      %v3494 = vand.u32 %v2027, 4294901760
      %3495 = vmatmul.mubr.f32.gmra.mxu0 %v3494
      %v3496 = vpop.f32.mrf.mxu0
      %v3497 = vadd.f32 %v3224, %v3496
      %v3498 = vpop.f32.mrf.mxu0
      %v3499 = vadd.f32 %v3226, %v3498
      %3500 = vdwg.mxu0
      %v3501 = vand.u32 %v2107, 4294901760
      %3502 = vmatprep.subr.mxu0 %v3501
      %v3503 = vand.u32 %v2106, 4294901760
      %3504 = vmatpush1.msra.mxu0 %v3503
      %v3505 = vand.u32 %v2105, 4294901760
      %3506 = vmatprep.subr.mxu0 %v3505
      %v3507 = vand.u32 %v2104, 4294901760
      %3508 = vmatpush1.msra.mxu0 %v3507
      %v3509 = vand.u32 %v2103, 4294901760
      %3510 = vmatprep.subr.mxu0 %v3509
      %v3511 = vand.u32 %v2102, 4294901760
      %3512 = vmatpush1.msra.mxu0 %v3511
      %v3513 = vand.u32 %v2101, 4294901760
      %3514 = vmatprep.subr.mxu0 %v3513
      %v3515 = vand.u32 %v2100, 4294901760
      %3516 = vmatpush1.msra.mxu0 %v3515
      %v3517 = vand.u32 %v2099, 4294901760
      %3518 = vmatprep.subr.mxu0 %v3517
      %v3519 = vand.u32 %v2098, 4294901760
      %3520 = vmatpush1.msra.mxu0 %v3519
      %v3521 = vand.u32 %v2097, 4294901760
      %3522 = vmatprep.subr.mxu0 %v3521
      %v3523 = vand.u32 %v2096, 4294901760
      %3524 = vmatpush1.msra.mxu0 %v3523
      %v3525 = vand.u32 %v2095, 4294901760
      %3526 = vmatprep.subr.mxu0 %v3525
      %v3527 = vand.u32 %v2094, 4294901760
      %3528 = vmatpush1.msra.mxu0 %v3527
      %v3529 = vand.u32 %v2093, 4294901760
      %3530 = vmatprep.subr.mxu0 %v3529
      %v3531 = vand.u32 %v2092, 4294901760
      %3532 = vmatpush1.msra.mxu0 %v3531
      %v3533 = vand.u32 %v2091, 4294901760
      %3534 = vmatprep.subr.mxu0 %v3533
      %v3535 = vand.u32 %v2090, 4294901760
      %3536 = vmatpush1.msra.mxu0 %v3535
      %v3537 = vand.u32 %v2089, 4294901760
      %3538 = vmatprep.subr.mxu0 %v3537
      %v3539 = vand.u32 %v2088, 4294901760
      %3540 = vmatpush1.msra.mxu0 %v3539
      %v3541 = vand.u32 %v2087, 4294901760
      %3542 = vmatprep.subr.mxu0 %v3541
      %v3543 = vand.u32 %v2086, 4294901760
      %3544 = vmatpush1.msra.mxu0 %v3543
      %v3545 = vand.u32 %v2085, 4294901760
      %3546 = vmatprep.subr.mxu0 %v3545
      %v3547 = vand.u32 %v2084, 4294901760
      %3548 = vmatpush1.msra.mxu0 %v3547
      %v3549 = vand.u32 %v2083, 4294901760
      %3550 = vmatprep.subr.mxu0 %v3549
      %v3551 = vand.u32 %v2082, 4294901760
      %3552 = vmatpush1.msra.mxu0 %v3551
      %v3553 = vand.u32 %v2081, 4294901760
      %3554 = vmatprep.subr.mxu0 %v3553
      %v3555 = vand.u32 %v2080, 4294901760
      %3556 = vmatpush1.msra.mxu0 %v3555
      %v3557 = vand.u32 %v2079, 4294901760
      %3558 = vmatprep.subr.mxu0 %v3557
      %v3559 = vand.u32 %v2078, 4294901760
      %3560 = vmatpush1.msra.mxu0 %v3559
      %v3561 = vand.u32 %v2077, 4294901760
      %3562 = vmatprep.subr.mxu0 %v3561
      %v3563 = vand.u32 %v2076, 4294901760
      %3564 = vmatpush1.msra.mxu0 %v3563
      %3565 = vmatprep.subr.mxu0 0.0
      %3566 = vmatpush2.msra.mxu0 0.0
      %3567 = vmatprep.subr.mxu0 0.0
      %3568 = vmatpush2.msra.mxu0 0.0
      %3569 = vmatprep.subr.mxu0 0.0
      %3570 = vmatpush2.msra.mxu0 0.0
      %3571 = vmatprep.subr.mxu0 0.0
      %3572 = vmatpush2.msra.mxu0 0.0
      %3573 = vmatprep.subr.mxu0 0.0
      %3574 = vmatpush2.msra.mxu0 0.0
      %3575 = vmatprep.subr.mxu0 0.0
      %3576 = vmatpush2.msra.mxu0 0.0
      %3577 = vmatprep.subr.mxu0 0.0
      %3578 = vmatpush2.msra.mxu0 0.0
      %3579 = vmatprep.subr.mxu0 0.0
      %3580 = vmatpush2.msra.mxu0 0.0
      %3581 = vmatprep.subr.mxu0 0.0
      %3582 = vmatpush2.msra.mxu0 0.0
      %3583 = vmatprep.subr.mxu0 0.0
      %3584 = vmatpush2.msra.mxu0 0.0
      %3585 = vmatprep.subr.mxu0 0.0
      %3586 = vmatpush2.msra.mxu0 0.0
      %3587 = vmatprep.subr.mxu0 0.0
      %3588 = vmatpush2.msra.mxu0 0.0
      %3589 = vmatprep.subr.mxu0 0.0
      %3590 = vmatpush2.msra.mxu0 0.0
      %3591 = vmatprep.subr.mxu0 0.0
      %3592 = vmatpush2.msra.mxu0 0.0
      %3593 = vmatprep.subr.mxu0 0.0
      %3594 = vmatpush2.msra.mxu0 0.0
      %3595 = vmatprep.subr.mxu0 0.0
      %3596 = vmatpush2.msra.mxu0 0.0
      %3597 = vmatprep.mubr.f32.mxu0 0.0
      %v3598 = vand.u32 %v2012, 4294901760
      %3599 = vmatmul.mubr.f32.gmra.mxu0 %v3598
      %v3600 = vpop.f32.mrf.mxu0
      %v3601 = vadd.f32 %v3392, %v3600
      %v3602 = vpop.f32.mrf.mxu0
      %v3603 = vadd.f32 %v3394, %v3602
      %3604 = vmatprep.mubr.f32.mxu0 0.0
      %v3605 = vand.u32 %v2013, 4294901760
      %3606 = vmatmul.mubr.f32.gmra.mxu0 %v3605
      %v3607 = vpop.f32.mrf.mxu0
      %v3608 = vadd.f32 %v3399, %v3607
      %v3609 = vpop.f32.mrf.mxu0
      %v3610 = vadd.f32 %v3401, %v3609
      %3611 = vmatprep.mubr.f32.mxu0 0.0
      %v3612 = vand.u32 %v2014, 4294901760
      %3613 = vmatmul.mubr.f32.gmra.mxu0 %v3612
      %v3614 = vpop.f32.mrf.mxu0
      %v3615 = vadd.f32 %v3406, %v3614
      %v3616 = vpop.f32.mrf.mxu0
      %v3617 = vadd.f32 %v3408, %v3616
      %3618 = vmatprep.mubr.f32.mxu0 0.0
      %v3619 = vand.u32 %v2015, 4294901760
      %3620 = vmatmul.mubr.f32.gmra.mxu0 %v3619
      %v3621 = vpop.f32.mrf.mxu0
      %v3622 = vadd.f32 %v3413, %v3621
      %v3623 = vpop.f32.mrf.mxu0
      %v3624 = vadd.f32 %v3415, %v3623
      %3625 = vmatprep.mubr.f32.mxu0 0.0
      %v3626 = vand.u32 %v2016, 4294901760
      %3627 = vmatmul.mubr.f32.gmra.mxu0 %v3626
      %v3628 = vpop.f32.mrf.mxu0
      %v3629 = vadd.f32 %v3420, %v3628
      %v3630 = vpop.f32.mrf.mxu0
      %v3631 = vadd.f32 %v3422, %v3630
      %3632 = vmatprep.mubr.f32.mxu0 0.0
      %v3633 = vand.u32 %v2017, 4294901760
      %3634 = vmatmul.mubr.f32.gmra.mxu0 %v3633
      %v3635 = vpop.f32.mrf.mxu0
      %v3636 = vadd.f32 %v3427, %v3635
      %v3637 = vpop.f32.mrf.mxu0
      %v3638 = vadd.f32 %v3429, %v3637
      %3639 = vmatprep.mubr.f32.mxu0 0.0
      %v3640 = vand.u32 %v2018, 4294901760
      %3641 = vmatmul.mubr.f32.gmra.mxu0 %v3640
      %v3642 = vpop.f32.mrf.mxu0
      %v3643 = vadd.f32 %v3434, %v3642
      %v3644 = vpop.f32.mrf.mxu0
      %v3645 = vadd.f32 %v3436, %v3644
      %3646 = vmatprep.mubr.f32.mxu0 0.0
      %v3647 = vand.u32 %v2019, 4294901760
      %3648 = vmatmul.mubr.f32.gmra.mxu0 %v3647
      %v3649 = vpop.f32.mrf.mxu0
      %v3650 = vadd.f32 %v3441, %v3649
      %v3651 = vpop.f32.mrf.mxu0
      %v3652 = vadd.f32 %v3443, %v3651
      %3653 = vmatprep.mubr.f32.mxu0 0.0
      %v3654 = vand.u32 %v2020, 4294901760
      %3655 = vmatmul.mubr.f32.gmra.mxu0 %v3654
      %v3656 = vpop.f32.mrf.mxu0
      %v3657 = vadd.f32 %v3448, %v3656
      %v3658 = vpop.f32.mrf.mxu0
      %v3659 = vadd.f32 %v3450, %v3658
      %3660 = vmatprep.mubr.f32.mxu0 0.0
      %v3661 = vand.u32 %v2021, 4294901760
      %3662 = vmatmul.mubr.f32.gmra.mxu0 %v3661
      %v3663 = vpop.f32.mrf.mxu0
      %v3664 = vadd.f32 %v3455, %v3663
      %v3665 = vpop.f32.mrf.mxu0
      %v3666 = vadd.f32 %v3457, %v3665
      %3667 = vmatprep.mubr.f32.mxu0 0.0
      %v3668 = vand.u32 %v2022, 4294901760
      %3669 = vmatmul.mubr.f32.gmra.mxu0 %v3668
      %v3670 = vpop.f32.mrf.mxu0
      %v3671 = vadd.f32 %v3462, %v3670
      %v3672 = vpop.f32.mrf.mxu0
      %v3673 = vadd.f32 %v3464, %v3672
      %3674 = vmatprep.mubr.f32.mxu0 0.0
      %v3675 = vand.u32 %v2023, 4294901760
      %3676 = vmatmul.mubr.f32.gmra.mxu0 %v3675
      %v3677 = vpop.f32.mrf.mxu0
      %v3678 = vadd.f32 %v3469, %v3677
      %v3679 = vpop.f32.mrf.mxu0
      %v3680 = vadd.f32 %v3471, %v3679
      %3681 = vmatprep.mubr.f32.mxu0 0.0
      %v3682 = vand.u32 %v2024, 4294901760
      %3683 = vmatmul.mubr.f32.gmra.mxu0 %v3682
      %v3684 = vpop.f32.mrf.mxu0
      %v3685 = vadd.f32 %v3476, %v3684
      %v3686 = vpop.f32.mrf.mxu0
      %v3687 = vadd.f32 %v3478, %v3686
      %3688 = vmatprep.mubr.f32.mxu0 0.0
      %v3689 = vand.u32 %v2025, 4294901760
      %3690 = vmatmul.mubr.f32.gmra.mxu0 %v3689
      %v3691 = vpop.f32.mrf.mxu0
      %v3692 = vadd.f32 %v3483, %v3691
      %v3693 = vpop.f32.mrf.mxu0
      %v3694 = vadd.f32 %v3485, %v3693
      %3695 = vmatprep.mubr.f32.mxu0 0.0
      %v3696 = vand.u32 %v2026, 4294901760
      %3697 = vmatmul.mubr.f32.gmra.mxu0 %v3696
      %v3698 = vpop.f32.mrf.mxu0
      %v3699 = vadd.f32 %v3490, %v3698
      %v3700 = vpop.f32.mrf.mxu0
      %v3701 = vadd.f32 %v3492, %v3700
      %3702 = vmatprep.mubr.f32.mxu0 0.0
      %v3703 = vand.u32 %v2027, 4294901760
      %3704 = vmatmul.mubr.f32.gmra.mxu0 %v3703
      %v3705 = vpop.f32.mrf.mxu0
      %v3706 = vadd.f32 %v3497, %v3705
      %v3707 = vpop.f32.mrf.mxu0
      %v3708 = vadd.f32 %v3499, %v3707
      %3709 = vdwg.mxu0
      %v3710 = vmax.f32 %v3601, 0.0
      %v3711 = vmax.f32 %v3608, 0.0
      %v3712 = vmax.f32 %v3615, 0.0
      %v3713 = vmax.f32 %v3622, 0.0
      %v3714 = vmax.f32 %v3629, 0.0
      %v3715 = vmax.f32 %v3636, 0.0
      %v3716 = vmax.f32 %v3643, 0.0
      %v3717 = vmax.f32 %v3650, 0.0
      %v3718 = vmax.f32 %v3657, 0.0
      %v3719 = vmax.f32 %v3664, 0.0
      %v3720 = vmax.f32 %v3671, 0.0
      %v3721 = vmax.f32 %v3678, 0.0
      %v3722 = vmax.f32 %v3685, 0.0
      %v3723 = vmax.f32 %v3692, 0.0
      %v3724 = vmax.f32 %v3699, 0.0
      %v3725 = vmax.f32 %v3706, 0.0
      %v3726 = vmin.f32 %v3710, 5.0
      %v3727 = vmin.f32 %v3711, 5.0
      %v3728 = vmin.f32 %v3712, 5.0
      %v3729 = vmin.f32 %v3713, 5.0
      %v3730 = vmin.f32 %v3714, 5.0
      %v3731 = vmin.f32 %v3715, 5.0
      %v3732 = vmin.f32 %v3716, 5.0
      %v3733 = vmin.f32 %v3717, 5.0
      %v3734 = vmin.f32 %v3718, 5.0
      %v3735 = vmin.f32 %v3719, 5.0
      %v3736 = vmin.f32 %v3720, 5.0
      %v3737 = vmin.f32 %v3721, 5.0
      %v3738 = vmin.f32 %v3722, 5.0
      %v3739 = vmin.f32 %v3723, 5.0
      %v3740 = vmin.f32 %v3724, 5.0
      %v3741 = vmin.f32 %v3725, 5.0
      %v3742 = vmax.f32 %v3603, 0.0
      %v3743 = vmax.f32 %v3610, 0.0
      %v3744 = vmax.f32 %v3617, 0.0
      %v3745 = vmax.f32 %v3624, 0.0
      %v3746 = vmax.f32 %v3631, 0.0
      %v3747 = vmax.f32 %v3638, 0.0
      %v3748 = vmax.f32 %v3645, 0.0
      %v3749 = vmax.f32 %v3652, 0.0
      %v3750 = vmax.f32 %v3659, 0.0
      %v3751 = vmax.f32 %v3666, 0.0
      %v3752 = vmax.f32 %v3673, 0.0
      %v3753 = vmax.f32 %v3680, 0.0
      %v3754 = vmax.f32 %v3687, 0.0
      %v3755 = vmax.f32 %v3694, 0.0
      %v3756 = vmax.f32 %v3701, 0.0
      %v3757 = vmax.f32 %v3708, 0.0
      %v3758 = vmin.f32 %v3742, 5.0
      %v3759 = vmin.f32 %v3743, 5.0
      %v3760 = vmin.f32 %v3744, 5.0
      %v3761 = vmin.f32 %v3745, 5.0
      %v3762 = vmin.f32 %v3746, 5.0
      %v3763 = vmin.f32 %v3747, 5.0
      %v3764 = vmin.f32 %v3748, 5.0
      %v3765 = vmin.f32 %v3749, 5.0
      %v3766 = vmin.f32 %v3750, 5.0
      %v3767 = vmin.f32 %v3751, 5.0
      %v3768 = vmin.f32 %v3752, 5.0
      %v3769 = vmin.f32 %v3753, 5.0
      %v3770 = vmin.f32 %v3754, 5.0
      %v3771 = vmin.f32 %v3755, 5.0
      %v3772 = vmin.f32 %v3756, 5.0
      %v3773 = vmin.f32 %v3757, 5.0
      %v3774 = vld [vmem:[%s7] sm:$0x1]
      %v3776 = vlaneseq
      %v3777 = vshrl.u32 %v3776, 7
      %v3778 = vsub.s32 0, %v3777
      %v3779 = vrot.slane %v3774, %v3778
      %v3781 = vmul.f32 %v2028, %v3779
      %v3782 = vmul.f32 %v2029, %v3779
      %v3783 = vmul.f32 %v2030, %v3779
      %v3784 = vmul.f32 %v2031, %v3779
      %v3785 = vmul.f32 %v2032, %v3779
      %v3786 = vmul.f32 %v2033, %v3779
      %v3787 = vmul.f32 %v2034, %v3779
      %v3788 = vmul.f32 %v2035, %v3779
      %v3789 = vmul.f32 %v2036, %v3779
      %v3790 = vmul.f32 %v2037, %v3779
      %v3791 = vmul.f32 %v2038, %v3779
      %v3792 = vmul.f32 %v2039, %v3779
      %v3793 = vmul.f32 %v2040, %v3779
      %v3794 = vmul.f32 %v2041, %v3779
      %v3795 = vmul.f32 %v2042, %v3779
      %v3796 = vmul.f32 %v2043, %v3779
      %vm3797 = vcmask 261120
      %v3798 = vsel %vm3797, %v3781, 0.0
      %3799 = vadd.xlane.f32.xlu0 %v3798
      %v3800 = vpop.xlane.xlu0 %3799
      %v3801 = vsel %vm3797, %v3782, 0.0
      %3802 = vadd.xlane.f32.xlu0 %v3801
      %v3803 = vpop.xlane.xlu0 %3802
      %v3804 = vsel %vm3797, %v3783, 0.0
      %3805 = vadd.xlane.f32.xlu0 %v3804
      %v3806 = vpop.xlane.xlu0 %3805
      %v3807 = vsel %vm3797, %v3784, 0.0
      %3808 = vadd.xlane.f32.xlu0 %v3807
      %v3809 = vpop.xlane.xlu0 %3808
      %v3810 = vsel %vm3797, %v3785, 0.0
      %3811 = vadd.xlane.f32.xlu0 %v3810
      %v3812 = vpop.xlane.xlu0 %3811
      %v3813 = vsel %vm3797, %v3786, 0.0
      %3814 = vadd.xlane.f32.xlu0 %v3813
      %v3815 = vpop.xlane.xlu0 %3814
      %v3816 = vsel %vm3797, %v3787, 0.0
      %3817 = vadd.xlane.f32.xlu0 %v3816
      %v3818 = vpop.xlane.xlu0 %3817
      %v3819 = vsel %vm3797, %v3788, 0.0
      %3820 = vadd.xlane.f32.xlu0 %v3819
      %v3821 = vpop.xlane.xlu0 %3820
      %v3822 = vsel %vm3797, %v3789, 0.0
      %3823 = vadd.xlane.f32.xlu0 %v3822
      %v3824 = vpop.xlane.xlu0 %3823
      %v3825 = vsel %vm3797, %v3790, 0.0
      %3826 = vadd.xlane.f32.xlu0 %v3825
      %v3827 = vpop.xlane.xlu0 %3826
      %v3828 = vsel %vm3797, %v3791, 0.0
      %3829 = vadd.xlane.f32.xlu0 %v3828
      %v3830 = vpop.xlane.xlu0 %3829
      %v3831 = vsel %vm3797, %v3792, 0.0
      %3832 = vadd.xlane.f32.xlu0 %v3831
      %v3833 = vpop.xlane.xlu0 %3832
      %v3834 = vsel %vm3797, %v3793, 0.0
      %3835 = vadd.xlane.f32.xlu0 %v3834
      %v3836 = vpop.xlane.xlu0 %3835
      %v3837 = vsel %vm3797, %v3794, 0.0
      %3838 = vadd.xlane.f32.xlu0 %v3837
      %v3839 = vpop.xlane.xlu0 %3838
      %v3840 = vsel %vm3797, %v3795, 0.0
      %3841 = vadd.xlane.f32.xlu0 %v3840
      %v3842 = vpop.xlane.xlu0 %3841
      %v3843 = vsel %vm3797, %v3796, 0.0
      %3844 = vadd.xlane.f32.xlu0 %v3843
      %v3845 = vpop.xlane.xlu0 %3844
      %v3846 = vld [vmem:[#allocation2] sm:$0x1]
      %v3848 = vlaneseq
      %v3849 = vshrl.u32 %v3848, 7
      %v3850 = vsub.s32 0, %v3849
      %v3851 = vrot.slane %v3846, %v3850
      %v3853 = vadd.f32 %v3800, %v3851
      %v3854 = vadd.f32 %v3803, %v3851
      %v3855 = vadd.f32 %v3806, %v3851
      %v3856 = vadd.f32 %v3809, %v3851
      %v3857 = vadd.f32 %v3812, %v3851
      %v3858 = vadd.f32 %v3815, %v3851
      %v3859 = vadd.f32 %v3818, %v3851
      %v3860 = vadd.f32 %v3821, %v3851
      %v3861 = vadd.f32 %v3824, %v3851
      %v3862 = vadd.f32 %v3827, %v3851
      %v3863 = vadd.f32 %v3830, %v3851
      %v3864 = vadd.f32 %v3833, %v3851
      %v3865 = vadd.f32 %v3836, %v3851
      %v3866 = vadd.f32 %v3839, %v3851
      %v3867 = vadd.f32 %v3842, %v3851
      %v3868 = vadd.f32 %v3845, %v3851
      %v3869 = vmax.f32 %v3853, -5.0
      %v3870 = vmax.f32 %v3854, -5.0
      %v3871 = vmax.f32 %v3855, -5.0
      %v3872 = vmax.f32 %v3856, -5.0
      %v3873 = vmax.f32 %v3857, -5.0
      %v3874 = vmax.f32 %v3858, -5.0
      %v3875 = vmax.f32 %v3859, -5.0
      %v3876 = vmax.f32 %v3860, -5.0
      %v3877 = vmax.f32 %v3861, -5.0
      %v3878 = vmax.f32 %v3862, -5.0
      %v3879 = vmax.f32 %v3863, -5.0
      %v3880 = vmax.f32 %v3864, -5.0
      %v3881 = vmax.f32 %v3865, -5.0
      %v3882 = vmax.f32 %v3866, -5.0
      %v3883 = vmax.f32 %v3867, -5.0
      %v3884 = vmax.f32 %v3868, -5.0
      %v3885 = vmin.f32 %v3869, 5.0
      %v3886 = vmin.f32 %v3870, 5.0
      %v3887 = vmin.f32 %v3871, 5.0
      %v3888 = vmin.f32 %v3872, 5.0
      %v3889 = vmin.f32 %v3873, 5.0
      %v3890 = vmin.f32 %v3874, 5.0
      %v3891 = vmin.f32 %v3875, 5.0
      %v3892 = vmin.f32 %v3876, 5.0
      %v3893 = vmin.f32 %v3877, 5.0
      %v3894 = vmin.f32 %v3878, 5.0
      %v3895 = vmin.f32 %v3879, 5.0
      %v3896 = vmin.f32 %v3880, 5.0
      %v3897 = vmin.f32 %v3881, 5.0
      %v3898 = vmin.f32 %v3882, 5.0
      %v3899 = vmin.f32 %v3883, 5.0
      %v3900 = vmin.f32 %v3884, 5.0
      %3902 = vset.pattern.permute.xlu0 48
      %3903 = vperm.xlu0 %3902, %v338
      %v3904 = vpop.permute.xlu0 %3903
      %3907 = vset.pattern.permute.xlu0 48
      %3908 = vperm.xlu0 %3907, %v339
      %v3909 = vpop.permute.xlu0 %3908
      %3912 = vset.pattern.permute.xlu0 48
      %3913 = vperm.xlu0 %3912, %v340
      %v3914 = vpop.permute.xlu0 %3913
      %3917 = vset.pattern.permute.xlu0 48
      %3918 = vperm.xlu0 %3917, %v341
      %v3919 = vpop.permute.xlu0 %3918
      %3922 = vset.pattern.permute.xlu0 48
      %3923 = vperm.xlu0 %3922, %v342
      %v3924 = vpop.permute.xlu0 %3923
      %3927 = vset.pattern.permute.xlu0 48
      %3928 = vperm.xlu0 %3927, %v343
      %v3929 = vpop.permute.xlu0 %3928
      %3932 = vset.pattern.permute.xlu0 48
      %3933 = vperm.xlu0 %3932, %v344
      %v3934 = vpop.permute.xlu0 %3933
      %3937 = vset.pattern.permute.xlu0 48
      %3938 = vperm.xlu0 %3937, %v345
      %v3939 = vpop.permute.xlu0 %3938
      %3942 = vset.pattern.permute.xlu0 48
      %3943 = vperm.xlu0 %3942, %v346
      %v3944 = vpop.permute.xlu0 %3943
      %3947 = vset.pattern.permute.xlu0 48
      %3948 = vperm.xlu0 %3947, %v347
      %v3949 = vpop.permute.xlu0 %3948
      %3952 = vset.pattern.permute.xlu0 48
      %3953 = vperm.xlu0 %3952, %v348
      %v3954 = vpop.permute.xlu0 %3953
      %3957 = vset.pattern.permute.xlu0 48
      %3958 = vperm.xlu0 %3957, %v349
      %v3959 = vpop.permute.xlu0 %3958
      %3962 = vset.pattern.permute.xlu0 48
      %3963 = vperm.xlu0 %3962, %v350
      %v3964 = vpop.permute.xlu0 %3963
      %3967 = vset.pattern.permute.xlu0 48
      %3968 = vperm.xlu0 %3967, %v351
      %v3969 = vpop.permute.xlu0 %3968
      %3972 = vset.pattern.permute.xlu0 48
      %3973 = vperm.xlu0 %3972, %v352
      %v3974 = vpop.permute.xlu0 %3973
      %3977 = vset.pattern.permute.xlu0 48
      %3978 = vperm.xlu0 %3977, %v353
      %v3979 = vpop.permute.xlu0 %3978
      %v3981 = vmul.f32 %v3904, %v3726
      %v3982 = vmul.f32 %v3909, %v3727
      %v3983 = vmul.f32 %v3914, %v3728
      %v3984 = vmul.f32 %v3919, %v3729
      %v3985 = vmul.f32 %v3924, %v3730
      %v3986 = vmul.f32 %v3929, %v3731
      %v3987 = vmul.f32 %v3934, %v3732
      %v3988 = vmul.f32 %v3939, %v3733
      %v3989 = vmul.f32 %v3944, %v3734
      %v3990 = vmul.f32 %v3949, %v3735
      %v3991 = vmul.f32 %v3954, %v3736
      %v3992 = vmul.f32 %v3959, %v3737
      %v3993 = vmul.f32 %v3964, %v3738
      %v3994 = vmul.f32 %v3969, %v3739
      %v3995 = vmul.f32 %v3974, %v3740
      %v3996 = vmul.f32 %v3979, %v3741
      %4013 = vrot.lane.b32.xlu0 %v3981, 32
      %v4014 = vpop.permute.xlu0 %4013
      %4015 = vrot.lane.b32.xlu0 %v3982, 32
      %v4016 = vpop.permute.xlu0 %4015
      %4017 = vrot.lane.b32.xlu0 %v3983, 32
      %v4018 = vpop.permute.xlu0 %4017
      %4019 = vrot.lane.b32.xlu0 %v3984, 32
      %v4020 = vpop.permute.xlu0 %4019
      %4021 = vrot.lane.b32.xlu0 %v3985, 32
      %v4022 = vpop.permute.xlu0 %4021
      %4023 = vrot.lane.b32.xlu0 %v3986, 32
      %v4024 = vpop.permute.xlu0 %4023
      %4025 = vrot.lane.b32.xlu0 %v3987, 32
      %v4026 = vpop.permute.xlu0 %4025
      %4027 = vrot.lane.b32.xlu0 %v3988, 32
      %v4028 = vpop.permute.xlu0 %4027
      %4029 = vrot.lane.b32.xlu0 %v3989, 32
      %v4030 = vpop.permute.xlu0 %4029
      %4031 = vrot.lane.b32.xlu0 %v3990, 32
      %v4032 = vpop.permute.xlu0 %4031
      %4033 = vrot.lane.b32.xlu0 %v3991, 32
      %v4034 = vpop.permute.xlu0 %4033
      %4035 = vrot.lane.b32.xlu0 %v3992, 32
      %v4036 = vpop.permute.xlu0 %4035
      %4037 = vrot.lane.b32.xlu0 %v3993, 32
      %v4038 = vpop.permute.xlu0 %4037
      %4039 = vrot.lane.b32.xlu0 %v3994, 32
      %v4040 = vpop.permute.xlu0 %4039
      %4041 = vrot.lane.b32.xlu0 %v3995, 32
      %v4042 = vpop.permute.xlu0 %4041
      %4043 = vrot.lane.b32.xlu0 %v3996, 32
      %v4044 = vpop.permute.xlu0 %4043
      %v4061 = vadd.f32 %v2060, %v4014
      %v4062 = vadd.f32 %v2061, %v4016
      %v4063 = vadd.f32 %v2062, %v4018
      %v4064 = vadd.f32 %v2063, %v4020
      %v4065 = vadd.f32 %v2064, %v4022
      %v4066 = vadd.f32 %v2065, %v4024
      %v4067 = vadd.f32 %v2066, %v4026
      %v4068 = vadd.f32 %v2067, %v4028
      %v4069 = vadd.f32 %v2068, %v4030
      %v4070 = vadd.f32 %v2069, %v4032
      %v4071 = vadd.f32 %v2070, %v4034
      %v4072 = vadd.f32 %v2071, %v4036
      %v4073 = vadd.f32 %v2072, %v4038
      %v4074 = vadd.f32 %v2073, %v4040
      %v4075 = vadd.f32 %v2074, %v4042
      %v4076 = vadd.f32 %v2075, %v4044
      %4077 = vset.pattern.permute.xlu0 49
      %4078 = vperm.xlu0 %4077, %v338
      %v4079 = vpop.permute.xlu0 %4078
      %4081 = vset.pattern.permute.xlu0 49
      %4082 = vperm.xlu0 %4081, %v339
      %v4083 = vpop.permute.xlu0 %4082
      %4085 = vset.pattern.permute.xlu0 49
      %4086 = vperm.xlu0 %4085, %v340
      %v4087 = vpop.permute.xlu0 %4086
      %4089 = vset.pattern.permute.xlu0 49
      %4090 = vperm.xlu0 %4089, %v341
      %v4091 = vpop.permute.xlu0 %4090
      %4093 = vset.pattern.permute.xlu0 49
      %4094 = vperm.xlu0 %4093, %v342
      %v4095 = vpop.permute.xlu0 %4094
      %4097 = vset.pattern.permute.xlu0 49
      %4098 = vperm.xlu0 %4097, %v343
      %v4099 = vpop.permute.xlu0 %4098
      %4101 = vset.pattern.permute.xlu0 49
      %4102 = vperm.xlu0 %4101, %v344
      %v4103 = vpop.permute.xlu0 %4102
      %4105 = vset.pattern.permute.xlu0 49
      %4106 = vperm.xlu0 %4105, %v345
      %v4107 = vpop.permute.xlu0 %4106
      %4109 = vset.pattern.permute.xlu0 49
      %4110 = vperm.xlu0 %4109, %v346
      %v4111 = vpop.permute.xlu0 %4110
      %4113 = vset.pattern.permute.xlu0 49
      %4114 = vperm.xlu0 %4113, %v347
      %v4115 = vpop.permute.xlu0 %4114
      %4117 = vset.pattern.permute.xlu0 49
      %4118 = vperm.xlu0 %4117, %v348
      %v4119 = vpop.permute.xlu0 %4118
      %4121 = vset.pattern.permute.xlu0 49
      %4122 = vperm.xlu0 %4121, %v349
      %v4123 = vpop.permute.xlu0 %4122
      %4125 = vset.pattern.permute.xlu0 49
      %4126 = vperm.xlu0 %4125, %v350
      %v4127 = vpop.permute.xlu0 %4126
      %4129 = vset.pattern.permute.xlu0 49
      %4130 = vperm.xlu0 %4129, %v351
      %v4131 = vpop.permute.xlu0 %4130
      %4133 = vset.pattern.permute.xlu0 49
      %4134 = vperm.xlu0 %4133, %v352
      %v4135 = vpop.permute.xlu0 %4134
      %4137 = vset.pattern.permute.xlu0 49
      %4138 = vperm.xlu0 %4137, %v353
      %v4139 = vpop.permute.xlu0 %4138
      %v4141 = vmul.f32 %v4079, %v3726
      %v4142 = vmul.f32 %v4083, %v3727
      %v4143 = vmul.f32 %v4087, %v3728
      %v4144 = vmul.f32 %v4091, %v3729
      %v4145 = vmul.f32 %v4095, %v3730
      %v4146 = vmul.f32 %v4099, %v3731
      %v4147 = vmul.f32 %v4103, %v3732
      %v4148 = vmul.f32 %v4107, %v3733
      %v4149 = vmul.f32 %v4111, %v3734
      %v4150 = vmul.f32 %v4115, %v3735
      %v4151 = vmul.f32 %v4119, %v3736
      %v4152 = vmul.f32 %v4123, %v3737
      %v4153 = vmul.f32 %v4127, %v3738
      %v4154 = vmul.f32 %v4131, %v3739
      %v4155 = vmul.f32 %v4135, %v3740
      %v4156 = vmul.f32 %v4139, %v3741
      %v4157 = vadd.f32 %v4061, %v4141
      %v4158 = vadd.f32 %v4062, %v4142
      %v4159 = vadd.f32 %v4063, %v4143
      %v4160 = vadd.f32 %v4064, %v4144
      %v4161 = vadd.f32 %v4065, %v4145
      %v4162 = vadd.f32 %v4066, %v4146
      %v4163 = vadd.f32 %v4067, %v4147
      %v4164 = vadd.f32 %v4068, %v4148
      %v4165 = vadd.f32 %v4069, %v4149
      %v4166 = vadd.f32 %v4070, %v4150
      %v4167 = vadd.f32 %v4071, %v4151
      %v4168 = vadd.f32 %v4072, %v4152
      %v4169 = vadd.f32 %v4073, %v4153
      %v4170 = vadd.f32 %v4074, %v4154
      %v4171 = vadd.f32 %v4075, %v4155
      %v4172 = vadd.f32 %v4076, %v4156
      %4173 = vset.pattern.permute.xlu0 50
      %4174 = vperm.xlu0 %4173, %v338
      %v4175 = vpop.permute.xlu0 %4174
      %4177 = vset.pattern.permute.xlu0 50
      %4178 = vperm.xlu0 %4177, %v339
      %v4179 = vpop.permute.xlu0 %4178
      %4181 = vset.pattern.permute.xlu0 50
      %4182 = vperm.xlu0 %4181, %v340
      %v4183 = vpop.permute.xlu0 %4182
      %4185 = vset.pattern.permute.xlu0 50
      %4186 = vperm.xlu0 %4185, %v341
      %v4187 = vpop.permute.xlu0 %4186
      %4189 = vset.pattern.permute.xlu0 50
      %4190 = vperm.xlu0 %4189, %v342
      %v4191 = vpop.permute.xlu0 %4190
      %4193 = vset.pattern.permute.xlu0 50
      %4194 = vperm.xlu0 %4193, %v343
      %v4195 = vpop.permute.xlu0 %4194
      %4197 = vset.pattern.permute.xlu0 50
      %4198 = vperm.xlu0 %4197, %v344
      %v4199 = vpop.permute.xlu0 %4198
      %4201 = vset.pattern.permute.xlu0 50
      %4202 = vperm.xlu0 %4201, %v345
      %v4203 = vpop.permute.xlu0 %4202
      %4205 = vset.pattern.permute.xlu0 50
      %4206 = vperm.xlu0 %4205, %v346
      %v4207 = vpop.permute.xlu0 %4206
      %4209 = vset.pattern.permute.xlu0 50
      %4210 = vperm.xlu0 %4209, %v347
      %v4211 = vpop.permute.xlu0 %4210
      %4213 = vset.pattern.permute.xlu0 50
      %4214 = vperm.xlu0 %4213, %v348
      %v4215 = vpop.permute.xlu0 %4214
      %4217 = vset.pattern.permute.xlu0 50
      %4218 = vperm.xlu0 %4217, %v349
      %v4219 = vpop.permute.xlu0 %4218
      %4221 = vset.pattern.permute.xlu0 50
      %4222 = vperm.xlu0 %4221, %v350
      %v4223 = vpop.permute.xlu0 %4222
      %4225 = vset.pattern.permute.xlu0 50
      %4226 = vperm.xlu0 %4225, %v351
      %v4227 = vpop.permute.xlu0 %4226
      %4229 = vset.pattern.permute.xlu0 50
      %4230 = vperm.xlu0 %4229, %v352
      %v4231 = vpop.permute.xlu0 %4230
      %4233 = vset.pattern.permute.xlu0 50
      %4234 = vperm.xlu0 %4233, %v353
      %v4235 = vpop.permute.xlu0 %4234
      %v4237 = vmul.f32 %v4175, %v3726
      %v4238 = vmul.f32 %v4179, %v3727
      %v4239 = vmul.f32 %v4183, %v3728
      %v4240 = vmul.f32 %v4187, %v3729
      %v4241 = vmul.f32 %v4191, %v3730
      %v4242 = vmul.f32 %v4195, %v3731
      %v4243 = vmul.f32 %v4199, %v3732
      %v4244 = vmul.f32 %v4203, %v3733
      %v4245 = vmul.f32 %v4207, %v3734
      %v4246 = vmul.f32 %v4211, %v3735
      %v4247 = vmul.f32 %v4215, %v3736
      %v4248 = vmul.f32 %v4219, %v3737
      %v4249 = vmul.f32 %v4223, %v3738
      %v4250 = vmul.f32 %v4227, %v3739
      %v4251 = vmul.f32 %v4231, %v3740
      %v4252 = vmul.f32 %v4235, %v3741
      %4269 = vrot.lane.b32.xlu0 %v4237, 96
      %v4270 = vpop.permute.xlu0 %4269
      %4271 = vrot.lane.b32.xlu0 %v4238, 96
      %v4272 = vpop.permute.xlu0 %4271
      %4273 = vrot.lane.b32.xlu0 %v4239, 96
      %v4274 = vpop.permute.xlu0 %4273
      %4275 = vrot.lane.b32.xlu0 %v4240, 96
      %v4276 = vpop.permute.xlu0 %4275
      %4277 = vrot.lane.b32.xlu0 %v4241, 96
      %v4278 = vpop.permute.xlu0 %4277
      %4279 = vrot.lane.b32.xlu0 %v4242, 96
      %v4280 = vpop.permute.xlu0 %4279
      %4281 = vrot.lane.b32.xlu0 %v4243, 96
      %v4282 = vpop.permute.xlu0 %4281
      %4283 = vrot.lane.b32.xlu0 %v4244, 96
      %v4284 = vpop.permute.xlu0 %4283
      %4285 = vrot.lane.b32.xlu0 %v4245, 96
      %v4286 = vpop.permute.xlu0 %4285
      %4287 = vrot.lane.b32.xlu0 %v4246, 96
      %v4288 = vpop.permute.xlu0 %4287
      %4289 = vrot.lane.b32.xlu0 %v4247, 96
      %v4290 = vpop.permute.xlu0 %4289
      %4291 = vrot.lane.b32.xlu0 %v4248, 96
      %v4292 = vpop.permute.xlu0 %4291
      %4293 = vrot.lane.b32.xlu0 %v4249, 96
      %v4294 = vpop.permute.xlu0 %4293
      %4295 = vrot.lane.b32.xlu0 %v4250, 96
      %v4296 = vpop.permute.xlu0 %4295
      %4297 = vrot.lane.b32.xlu0 %v4251, 96
      %v4298 = vpop.permute.xlu0 %4297
      %4299 = vrot.lane.b32.xlu0 %v4252, 96
      %v4300 = vpop.permute.xlu0 %4299
      %v4317 = vadd.f32 %v4157, %v4270
      %v4318 = vadd.f32 %v4158, %v4272
      %v4319 = vadd.f32 %v4159, %v4274
      %v4320 = vadd.f32 %v4160, %v4276
      %v4321 = vadd.f32 %v4161, %v4278
      %v4322 = vadd.f32 %v4162, %v4280
      %v4323 = vadd.f32 %v4163, %v4282
      %v4324 = vadd.f32 %v4164, %v4284
      %v4325 = vadd.f32 %v4165, %v4286
      %v4326 = vadd.f32 %v4166, %v4288
      %v4327 = vadd.f32 %v4167, %v4290
      %v4328 = vadd.f32 %v4168, %v4292
      %v4329 = vadd.f32 %v4169, %v4294
      %v4330 = vadd.f32 %v4170, %v4296
      %v4331 = vadd.f32 %v4171, %v4298
      %v4332 = vadd.f32 %v4172, %v4300
      %4333 = vset.pattern.permute.xlu0 51
      %4334 = vperm.xlu0 %4333, %v338
      %v4335 = vpop.permute.xlu0 %4334
      %4337 = vset.pattern.permute.xlu0 51
      %4338 = vperm.xlu0 %4337, %v339
      %v4339 = vpop.permute.xlu0 %4338
      %4341 = vset.pattern.permute.xlu0 51
      %4342 = vperm.xlu0 %4341, %v340
      %v4343 = vpop.permute.xlu0 %4342
      %4345 = vset.pattern.permute.xlu0 51
      %4346 = vperm.xlu0 %4345, %v341
      %v4347 = vpop.permute.xlu0 %4346
      %4349 = vset.pattern.permute.xlu0 51
      %4350 = vperm.xlu0 %4349, %v342
      %v4351 = vpop.permute.xlu0 %4350
      %4353 = vset.pattern.permute.xlu0 51
      %4354 = vperm.xlu0 %4353, %v343
      %v4355 = vpop.permute.xlu0 %4354
      %4357 = vset.pattern.permute.xlu0 51
      %4358 = vperm.xlu0 %4357, %v344
      %v4359 = vpop.permute.xlu0 %4358
      %4361 = vset.pattern.permute.xlu0 51
      %4362 = vperm.xlu0 %4361, %v345
      %v4363 = vpop.permute.xlu0 %4362
      %4365 = vset.pattern.permute.xlu0 51
      %4366 = vperm.xlu0 %4365, %v346
      %v4367 = vpop.permute.xlu0 %4366
      %4369 = vset.pattern.permute.xlu0 51
      %4370 = vperm.xlu0 %4369, %v347
      %v4371 = vpop.permute.xlu0 %4370
      %4373 = vset.pattern.permute.xlu0 51
      %4374 = vperm.xlu0 %4373, %v348
      %v4375 = vpop.permute.xlu0 %4374
      %4377 = vset.pattern.permute.xlu0 51
      %4378 = vperm.xlu0 %4377, %v349
      %v4379 = vpop.permute.xlu0 %4378
      %4381 = vset.pattern.permute.xlu0 51
      %4382 = vperm.xlu0 %4381, %v350
      %v4383 = vpop.permute.xlu0 %4382
      %4385 = vset.pattern.permute.xlu0 51
      %4386 = vperm.xlu0 %4385, %v351
      %v4387 = vpop.permute.xlu0 %4386
      %4389 = vset.pattern.permute.xlu0 51
      %4390 = vperm.xlu0 %4389, %v352
      %v4391 = vpop.permute.xlu0 %4390
      %4393 = vset.pattern.permute.xlu0 51
      %4394 = vperm.xlu0 %4393, %v353
      %v4395 = vpop.permute.xlu0 %4394
      %v4397 = vmul.f32 %v4335, %v3726
      %v4398 = vmul.f32 %v4339, %v3727
      %v4399 = vmul.f32 %v4343, %v3728
      %v4400 = vmul.f32 %v4347, %v3729
      %v4401 = vmul.f32 %v4351, %v3730
      %v4402 = vmul.f32 %v4355, %v3731
      %v4403 = vmul.f32 %v4359, %v3732
      %v4404 = vmul.f32 %v4363, %v3733
      %v4405 = vmul.f32 %v4367, %v3734
      %v4406 = vmul.f32 %v4371, %v3735
      %v4407 = vmul.f32 %v4375, %v3736
      %v4408 = vmul.f32 %v4379, %v3737
      %v4409 = vmul.f32 %v4383, %v3738
      %v4410 = vmul.f32 %v4387, %v3739
      %v4411 = vmul.f32 %v4391, %v3740
      %v4412 = vmul.f32 %v4395, %v3741
      %4429 = vrot.lane.b32.xlu0 %v4397, 64
      %v4430 = vpop.permute.xlu0 %4429
      %4431 = vrot.lane.b32.xlu0 %v4398, 64
      %v4432 = vpop.permute.xlu0 %4431
      %4433 = vrot.lane.b32.xlu0 %v4399, 64
      %v4434 = vpop.permute.xlu0 %4433
      %4435 = vrot.lane.b32.xlu0 %v4400, 64
      %v4436 = vpop.permute.xlu0 %4435
      %4437 = vrot.lane.b32.xlu0 %v4401, 64
      %v4438 = vpop.permute.xlu0 %4437
      %4439 = vrot.lane.b32.xlu0 %v4402, 64
      %v4440 = vpop.permute.xlu0 %4439
      %4441 = vrot.lane.b32.xlu0 %v4403, 64
      %v4442 = vpop.permute.xlu0 %4441
      %4443 = vrot.lane.b32.xlu0 %v4404, 64
      %v4444 = vpop.permute.xlu0 %4443
      %4445 = vrot.lane.b32.xlu0 %v4405, 64
      %v4446 = vpop.permute.xlu0 %4445
      %4447 = vrot.lane.b32.xlu0 %v4406, 64
      %v4448 = vpop.permute.xlu0 %4447
      %4449 = vrot.lane.b32.xlu0 %v4407, 64
      %v4450 = vpop.permute.xlu0 %4449
      %4451 = vrot.lane.b32.xlu0 %v4408, 64
      %v4452 = vpop.permute.xlu0 %4451
      %4453 = vrot.lane.b32.xlu0 %v4409, 64
      %v4454 = vpop.permute.xlu0 %4453
      %4455 = vrot.lane.b32.xlu0 %v4410, 64
      %v4456 = vpop.permute.xlu0 %4455
      %4457 = vrot.lane.b32.xlu0 %v4411, 64
      %v4458 = vpop.permute.xlu0 %4457
      %4459 = vrot.lane.b32.xlu0 %v4412, 64
      %v4460 = vpop.permute.xlu0 %4459
      %v4477 = vadd.f32 %v4317, %v4430
      %v4478 = vadd.f32 %v4318, %v4432
      %v4479 = vadd.f32 %v4319, %v4434
      %v4480 = vadd.f32 %v4320, %v4436
      %v4481 = vadd.f32 %v4321, %v4438
      %v4482 = vadd.f32 %v4322, %v4440
      %v4483 = vadd.f32 %v4323, %v4442
      %v4484 = vadd.f32 %v4324, %v4444
      %v4485 = vadd.f32 %v4325, %v4446
      %v4486 = vadd.f32 %v4326, %v4448
      %v4487 = vadd.f32 %v4327, %v4450
      %v4488 = vadd.f32 %v4328, %v4452
      %v4489 = vadd.f32 %v4329, %v4454
      %v4490 = vadd.f32 %v4330, %v4456
      %v4491 = vadd.f32 %v4331, %v4458
      %v4492 = vadd.f32 %v4332, %v4460
      %vm4493 = vcmp.gt.f32.partialorder %v4477, 0.0
      %vm4494 = vcmp.gt.f32.partialorder %v4478, 0.0
      %vm4495 = vcmp.gt.f32.partialorder %v4479, 0.0
      %vm4496 = vcmp.gt.f32.partialorder %v4480, 0.0
      %vm4497 = vcmp.gt.f32.partialorder %v4481, 0.0
      %vm4498 = vcmp.gt.f32.partialorder %v4482, 0.0
      %vm4499 = vcmp.gt.f32.partialorder %v4483, 0.0
      %vm4500 = vcmp.gt.f32.partialorder %v4484, 0.0
      %vm4501 = vcmp.gt.f32.partialorder %v4485, 0.0
      %vm4502 = vcmp.gt.f32.partialorder %v4486, 0.0
      %vm4503 = vcmp.gt.f32.partialorder %v4487, 0.0
      %vm4504 = vcmp.gt.f32.partialorder %v4488, 0.0
      %vm4505 = vcmp.gt.f32.partialorder %v4489, 0.0
      %vm4506 = vcmp.gt.f32.partialorder %v4490, 0.0
      %vm4507 = vcmp.gt.f32.partialorder %v4491, 0.0
      %vm4508 = vcmp.gt.f32.partialorder %v4492, 0.0
      %v4509 = vmin.f32 %v4477, 0.0
      %v4510 = vmin.f32 %v4478, 0.0
      %v4511 = vmin.f32 %v4479, 0.0
      %v4512 = vmin.f32 %v4480, 0.0
      %v4513 = vmin.f32 %v4481, 0.0
      %v4514 = vmin.f32 %v4482, 0.0
      %v4515 = vmin.f32 %v4483, 0.0
      %v4516 = vmin.f32 %v4484, 0.0
      %v4517 = vmin.f32 %v4485, 0.0
      %v4518 = vmin.f32 %v4486, 0.0
      %v4519 = vmin.f32 %v4487, 0.0
      %v4520 = vmin.f32 %v4488, 0.0
      %v4521 = vmin.f32 %v4489, 0.0
      %v4522 = vmin.f32 %v4490, 0.0
      %v4523 = vmin.f32 %v4491, 0.0
      %v4524 = vmin.f32 %v4492, 0.0
      %v4525 = vmul.f32 %v4509, 1.442695
      %v4526 = vpow.pop %v4525
      %v4527 = vmul.f32 %v4510, 1.442695
      %v4528 = vpow.pop %v4527
      %v4529 = vmul.f32 %v4511, 1.442695
      %v4530 = vpow.pop %v4529
      %v4531 = vmul.f32 %v4512, 1.442695
      %v4532 = vpow.pop %v4531
      %v4533 = vmul.f32 %v4513, 1.442695
      %v4534 = vpow.pop %v4533
      %v4535 = vmul.f32 %v4514, 1.442695
      %v4536 = vpow.pop %v4535
      %v4537 = vmul.f32 %v4515, 1.442695
      %v4538 = vpow.pop %v4537
      %v4539 = vmul.f32 %v4516, 1.442695
      %v4540 = vpow.pop %v4539
      %v4541 = vmul.f32 %v4517, 1.442695
      %v4542 = vpow.pop %v4541
      %v4543 = vmul.f32 %v4518, 1.442695
      %v4544 = vpow.pop %v4543
      %v4545 = vmul.f32 %v4519, 1.442695
      %v4546 = vpow.pop %v4545
      %v4547 = vmul.f32 %v4520, 1.442695
      %v4548 = vpow.pop %v4547
      %v4549 = vmul.f32 %v4521, 1.442695
      %v4550 = vpow.pop %v4549
      %v4551 = vmul.f32 %v4522, 1.442695
      %v4552 = vpow.pop %v4551
      %v4553 = vmul.f32 %v4523, 1.442695
      %v4554 = vpow.pop %v4553
      %v4555 = vmul.f32 %v4524, 1.442695
      %v4556 = vpow.pop %v4555
      %v4557 = vsub.f32 %v4526, 1.0
      %v4558 = vsub.f32 %v4528, 1.0
      %v4559 = vsub.f32 %v4530, 1.0
      %v4560 = vsub.f32 %v4532, 1.0
      %v4561 = vsub.f32 %v4534, 1.0
      %v4562 = vsub.f32 %v4536, 1.0
      %v4563 = vsub.f32 %v4538, 1.0
      %v4564 = vsub.f32 %v4540, 1.0
      %v4565 = vsub.f32 %v4542, 1.0
      %v4566 = vsub.f32 %v4544, 1.0
      %v4567 = vsub.f32 %v4546, 1.0
      %v4568 = vsub.f32 %v4548, 1.0
      %v4569 = vsub.f32 %v4550, 1.0
      %v4570 = vsub.f32 %v4552, 1.0
      %v4571 = vsub.f32 %v4554, 1.0
      %v4572 = vsub.f32 %v4556, 1.0
      %v4573 = vsel %vm4493, %v4477, %v4557
      %v4574 = vsel %vm4494, %v4478, %v4558
      %v4575 = vsel %vm4495, %v4479, %v4559
      %v4576 = vsel %vm4496, %v4480, %v4560
      %v4577 = vsel %vm4497, %v4481, %v4561
      %v4578 = vsel %vm4498, %v4482, %v4562
      %v4579 = vsel %vm4499, %v4483, %v4563
      %v4580 = vsel %vm4500, %v4484, %v4564
      %v4581 = vsel %vm4501, %v4485, %v4565
      %v4582 = vsel %vm4502, %v4486, %v4566
      %v4583 = vsel %vm4503, %v4487, %v4567
      %v4584 = vsel %vm4504, %v4488, %v4568
      %v4585 = vsel %vm4505, %v4489, %v4569
      %v4586 = vsel %vm4506, %v4490, %v4570
      %v4587 = vsel %vm4507, %v4491, %v4571
      %v4588 = vsel %vm4508, %v4492, %v4572
      %4605 = vrot.lane.b32.xlu0 %v3758, 32
      %v4606 = vpop.permute.xlu0 %4605
      %4607 = vrot.lane.b32.xlu0 %v3759, 32
      %v4608 = vpop.permute.xlu0 %4607
      %4609 = vrot.lane.b32.xlu0 %v3760, 32
      %v4610 = vpop.permute.xlu0 %4609
      %4611 = vrot.lane.b32.xlu0 %v3761, 32
      %v4612 = vpop.permute.xlu0 %4611
      %4613 = vrot.lane.b32.xlu0 %v3762, 32
      %v4614 = vpop.permute.xlu0 %4613
      %4615 = vrot.lane.b32.xlu0 %v3763, 32
      %v4616 = vpop.permute.xlu0 %4615
      %4617 = vrot.lane.b32.xlu0 %v3764, 32
      %v4618 = vpop.permute.xlu0 %4617
      %4619 = vrot.lane.b32.xlu0 %v3765, 32
      %v4620 = vpop.permute.xlu0 %4619
      %4621 = vrot.lane.b32.xlu0 %v3766, 32
      %v4622 = vpop.permute.xlu0 %4621
      %4623 = vrot.lane.b32.xlu0 %v3767, 32
      %v4624 = vpop.permute.xlu0 %4623
      %4625 = vrot.lane.b32.xlu0 %v3768, 32
      %v4626 = vpop.permute.xlu0 %4625
      %4627 = vrot.lane.b32.xlu0 %v3769, 32
      %v4628 = vpop.permute.xlu0 %4627
      %4629 = vrot.lane.b32.xlu0 %v3770, 32
      %v4630 = vpop.permute.xlu0 %4629
      %4631 = vrot.lane.b32.xlu0 %v3771, 32
      %v4632 = vpop.permute.xlu0 %4631
      %4633 = vrot.lane.b32.xlu0 %v3772, 32
      %v4634 = vpop.permute.xlu0 %4633
      %4635 = vrot.lane.b32.xlu0 %v3773, 32
      %v4636 = vpop.permute.xlu0 %4635
      %v4653 = vmul.f32 %v4573, %v4606
      %v4654 = vmul.f32 %v4574, %v4608
      %v4655 = vmul.f32 %v4575, %v4610
      %v4656 = vmul.f32 %v4576, %v4612
      %v4657 = vmul.f32 %v4577, %v4614
      %v4658 = vmul.f32 %v4578, %v4616
      %v4659 = vmul.f32 %v4579, %v4618
      %v4660 = vmul.f32 %v4580, %v4620
      %v4661 = vmul.f32 %v4581, %v4622
      %v4662 = vmul.f32 %v4582, %v4624
      %v4663 = vmul.f32 %v4583, %v4626
      %v4664 = vmul.f32 %v4584, %v4628
      %v4665 = vmul.f32 %v4585, %v4630
      %v4666 = vmul.f32 %v4586, %v4632
      %v4667 = vmul.f32 %v4587, %v4634
      %v4668 = vmul.f32 %v4588, %v4636
      %4685 = vrot.lane.b32.xlu0 %v4653, 96
      %v4686 = vpop.permute.xlu0 %4685
      %4687 = vrot.lane.b32.xlu0 %v4654, 96
      %v4688 = vpop.permute.xlu0 %4687
      %4689 = vrot.lane.b32.xlu0 %v4655, 96
      %v4690 = vpop.permute.xlu0 %4689
      %4691 = vrot.lane.b32.xlu0 %v4656, 96
      %v4692 = vpop.permute.xlu0 %4691
      %4693 = vrot.lane.b32.xlu0 %v4657, 96
      %v4694 = vpop.permute.xlu0 %4693
      %4695 = vrot.lane.b32.xlu0 %v4658, 96
      %v4696 = vpop.permute.xlu0 %4695
      %4697 = vrot.lane.b32.xlu0 %v4659, 96
      %v4698 = vpop.permute.xlu0 %4697
      %4699 = vrot.lane.b32.xlu0 %v4660, 96
      %v4700 = vpop.permute.xlu0 %4699
      %4701 = vrot.lane.b32.xlu0 %v4661, 96
      %v4702 = vpop.permute.xlu0 %4701
      %4703 = vrot.lane.b32.xlu0 %v4662, 96
      %v4704 = vpop.permute.xlu0 %4703
      %4705 = vrot.lane.b32.xlu0 %v4663, 96
      %v4706 = vpop.permute.xlu0 %4705
      %4707 = vrot.lane.b32.xlu0 %v4664, 96
      %v4708 = vpop.permute.xlu0 %4707
      %4709 = vrot.lane.b32.xlu0 %v4665, 96
      %v4710 = vpop.permute.xlu0 %4709
      %4711 = vrot.lane.b32.xlu0 %v4666, 96
      %v4712 = vpop.permute.xlu0 %4711
      %4713 = vrot.lane.b32.xlu0 %v4667, 96
      %v4714 = vpop.permute.xlu0 %4713
      %4715 = vrot.lane.b32.xlu0 %v4668, 96
      %v4716 = vpop.permute.xlu0 %4715
      %v4733 = vsel %vm3797, %v4686, 0.0
      %4734 = vadd.xlane.f32.xlu0 %v4733
      %v4735 = vpop.xlane.xlu0 %4734
      %v4736 = vsel %vm3797, %v4688, 0.0
      %4737 = vadd.xlane.f32.xlu0 %v4736
      %v4738 = vpop.xlane.xlu0 %4737
      %v4739 = vsel %vm3797, %v4690, 0.0
      %4740 = vadd.xlane.f32.xlu0 %v4739
      %v4741 = vpop.xlane.xlu0 %4740
      %v4742 = vsel %vm3797, %v4692, 0.0
      %4743 = vadd.xlane.f32.xlu0 %v4742
      %v4744 = vpop.xlane.xlu0 %4743
      %v4745 = vsel %vm3797, %v4694, 0.0
      %4746 = vadd.xlane.f32.xlu0 %v4745
      %v4747 = vpop.xlane.xlu0 %4746
      %v4748 = vsel %vm3797, %v4696, 0.0
      %4749 = vadd.xlane.f32.xlu0 %v4748
      %v4750 = vpop.xlane.xlu0 %4749
      %v4751 = vsel %vm3797, %v4698, 0.0
      %4752 = vadd.xlane.f32.xlu0 %v4751
      %v4753 = vpop.xlane.xlu0 %4752
      %v4754 = vsel %vm3797, %v4700, 0.0
      %4755 = vadd.xlane.f32.xlu0 %v4754
      %v4756 = vpop.xlane.xlu0 %4755
      %v4757 = vsel %vm3797, %v4702, 0.0
      %4758 = vadd.xlane.f32.xlu0 %v4757
      %v4759 = vpop.xlane.xlu0 %4758
      %v4760 = vsel %vm3797, %v4704, 0.0
      %4761 = vadd.xlane.f32.xlu0 %v4760
      %v4762 = vpop.xlane.xlu0 %4761
      %v4763 = vsel %vm3797, %v4706, 0.0
      %4764 = vadd.xlane.f32.xlu0 %v4763
      %v4765 = vpop.xlane.xlu0 %4764
      %v4766 = vsel %vm3797, %v4708, 0.0
      %4767 = vadd.xlane.f32.xlu0 %v4766
      %v4768 = vpop.xlane.xlu0 %4767
      %v4769 = vsel %vm3797, %v4710, 0.0
      %4770 = vadd.xlane.f32.xlu0 %v4769
      %v4771 = vpop.xlane.xlu0 %4770
      %v4772 = vsel %vm3797, %v4712, 0.0
      %4773 = vadd.xlane.f32.xlu0 %v4772
      %v4774 = vpop.xlane.xlu0 %4773
      %v4775 = vsel %vm3797, %v4714, 0.0
      %4776 = vadd.xlane.f32.xlu0 %v4775
      %v4777 = vpop.xlane.xlu0 %4776
      %v4778 = vsel %vm3797, %v4716, 0.0
      %4779 = vadd.xlane.f32.xlu0 %v4778
      %v4780 = vpop.xlane.xlu0 %4779
      %v4781 = vadd.f32 %v4735, %v3885
      %v4782 = vadd.f32 %v4738, %v3886
      %v4783 = vadd.f32 %v4741, %v3887
      %v4784 = vadd.f32 %v4744, %v3888
      %v4785 = vadd.f32 %v4747, %v3889
      %v4786 = vadd.f32 %v4750, %v3890
      %v4787 = vadd.f32 %v4753, %v3891
      %v4788 = vadd.f32 %v4756, %v3892
      %v4789 = vadd.f32 %v4759, %v3893
      %v4790 = vadd.f32 %v4762, %v3894
      %v4791 = vadd.f32 %v4765, %v3895
      %v4792 = vadd.f32 %v4768, %v3896
      %v4793 = vadd.f32 %v4771, %v3897
      %v4794 = vadd.f32 %v4774, %v3898
      %v4795 = vadd.f32 %v4777, %v3899
      %v4796 = vadd.f32 %v4780, %v3900
      %vm4797 = vcmask 7168
      %4798 = vst.msk [vmem:[%s336] sm:$0xff] %vm4797, %v4781
      %4799 = vst.msk [vmem:[%s336 + $0x8] sm:$0xff] %vm4797, %v4782
      %4800 = vst.msk [vmem:[%s336 + $0x10] sm:$0xff] %vm4797, %v4783
      %4801 = vst.msk [vmem:[%s336 + $0x18] sm:$0xff] %vm4797, %v4784
      %4802 = vst.msk [vmem:[%s336 + $0x20] sm:$0xff] %vm4797, %v4785
      %4803 = vst.msk [vmem:[%s336 + $0x28] sm:$0xff] %vm4797, %v4786
      %4804 = vst.msk [vmem:[%s336 + $0x30] sm:$0xff] %vm4797, %v4787
      %4805 = vst.msk [vmem:[%s336 + $0x38] sm:$0xff] %vm4797, %v4788
      %4806 = vst.msk [vmem:[%s336 + $0x40] sm:$0xff] %vm4797, %v4789
      %4807 = vst.msk [vmem:[%s336 + $0x48] sm:$0xff] %vm4797, %v4790
      %4808 = vst.msk [vmem:[%s336 + $0x50] sm:$0xff] %vm4797, %v4791
      %4809 = vst.msk [vmem:[%s336 + $0x58] sm:$0xff] %vm4797, %v4792
      %4810 = vst.msk [vmem:[%s336 + $0x60] sm:$0xff] %vm4797, %v4793
      %4811 = vst.msk [vmem:[%s336 + $0x68] sm:$0xff] %vm4797, %v4794
      %4812 = vst.msk [vmem:[%s336 + $0x70] sm:$0xff] %vm4797, %v4795
      %4813 = vst.msk [vmem:[%s336 + $0x78] sm:$0xff] %vm4797, %v4796
      %s4814 = smul.u32 16, %s22
      %p4815 = scmp.lt.s32.totalorder %s4814, 31
      %s4816 = scalar_select %p4815, %s4814, 31
      %s4817 = smul.addr %s4816, 8
      %s4818 = scalar_lea.vmem %s9, %s4817
      // Predicated region
      $region57: #{tpu_custom_call.1} parent=55 // pred_check
        %p4819 = pneg %p234
      $region58: #{tpu_custom_call.1} parent=55 // pred_check_branch
        %4821 = sbr.rel (%p4819) target = $region60
      $region59: #{tpu_custom_call.1} parent=55 // pred_region
        %s4822 = smul.u32 16, %s22
      $region60: #{tpu_custom_call.1} parent=55 // pred_fallthru
        _
    $region56: #{tpu_custom_call.1} parent=5 // pred_fallthru
      _
    %p4823 = scmp.le.s32.totalorder 2, %s17
    // Predicated region
    $region61: #{tpu_custom_call.1} parent=5 // pred_check
      %p4824 = pneg %p4823
    $region62: #{tpu_custom_call.1} parent=5 // pred_check_branch
      %4826 = sbr.rel (%p4824) target = $region64
    $region63: #{tpu_custom_call.1} parent=5 // pred_region
      %s4827 = ssub.s32 %s17, 2
      // Predicated region
      $region65: #{tpu_custom_call.1} parent=63 // pred_check
        %p4828 = pneg %p240
      $region66: #{tpu_custom_call.1} parent=63 // pred_check_branch
        %4830 = sbr.rel (%p4828) target = $region68
      $region67: #{tpu_custom_call.1} parent=63 // pred_region
        %s4831 = smul.u32 16, %s23
        %p4832 = scmp.lt.s32.totalorder %s4831, 31
        %s4833 = scalar_select %p4832, %s4831, 31
        %s4834 = smul.addr %s4833, 8
        %s4835 = scalar_lea.vmem %s9, %s4834
      $region68: #{tpu_custom_call.1} parent=63 // pred_fallthru
        _
    $region64: #{tpu_custom_call.1} parent=5 // pred_fallthru
      _
  $region6: #{tpu_custom_call.1} parent=0 // loop_footer
    %s21 = sadd.s32 1, %s17
  $region7: #{tpu_custom_call.1} parent=0 // loop_footer_branch
    %16 = sbr.rel target = $region3
  $region8: #{tpu_custom_call.1} parent=0 // loop_exit
    _

</llo_original>
